<compile_context>
chip_gen: v7x
topology: tpu7x:2x2x1
jax: 0.10.0
libtpu: 0.0.40
codegen_flags: <defaults>
</compile_context>

<pallas_src>
import functools
import math

import jax
import jax.numpy as jnp
from jax import lax
from jax.experimental import pallas as pl
from jax.experimental.pallas import tpu as pltpu

NEG_INF = -1e9


# ----------------------------------------------------------------------------
# Pallas kernel: one tile of Bt batch elements per grid step.
# ----------------------------------------------------------------------------
def _decoder_step_kernel(enc_ref, k_ref, v_ref, keypad_ref, idx_ref, load_ref,
                         mask_attn_ref, mask_score_ref,
                         wq_ref, wql_ref, wc_ref, probs_ref,
                         *, head_num, qkv_dim, sqrt_embedding_dim, logit_clipping):
    enc = enc_ref[...]                                   # (Bt, N_total, E)
    bt, n_total, e_dim = enc.shape
    pomo = idx_ref.shape[1]
    g = head_num * bt                                    # fused (head, batch) leading dim

    # ---- _get_encoding: gather enc rows at current_node via one-hot matmul (MXU).
    idx = idx_ref[...]                                   # (Bt, pomo, 1) int32
    iota_n = lax.broadcasted_iota(jnp.int32, (bt, pomo, n_total), 2)
    onehot = (iota_n == idx).astype(jnp.float32)         # (Bt, pomo, N)
    last = jnp.einsum('bpn,bne->bpe', onehot, enc,
                      preferred_element_type=jnp.float32)        # (Bt, pomo, E)

    # ---- q = Wq_last(cat(last, load)) in head-major form (no concat, no lane slicing).
    wq = wq_ref[...]                                     # (H, E, D)
    wql = wql_ref[...]                                   # (H, 1, D)
    load = load_ref[...]                                 # (Bt, pomo, 1)
    last_g = jnp.broadcast_to(last[None], (head_num, bt, pomo, e_dim)
                              ).reshape(g, pomo, e_dim)
    wq_g = jnp.broadcast_to(wq[:, None], (head_num, bt, e_dim, qkv_dim)
                            ).reshape(g, e_dim, qkv_dim)
    wql_g = jnp.broadcast_to(wql[:, None], (head_num, bt, 1, qkv_dim)
                             ).reshape(g, 1, qkv_dim)
    load_g = jnp.broadcast_to(load[None], (head_num, bt, pomo, 1)
                              ).reshape(g, pomo, 1)
    q_g = jnp.einsum('gpe,ged->gpd', last_g, wq_g,
                     preferred_element_type=jnp.float32) + load_g * wql_g    # (g, pomo, D)

    # ---- multi-head attention over all tokens with rank-3 ninf mask (K/V precomputed).
    k_g = k_ref[...].reshape(g, n_total, qkv_dim)        # (H, Bt, N, D) -> (g, N, D)
    v_g = v_ref[...].reshape(g, n_total, qkv_dim)
    mask_g = jnp.broadcast_to(mask_attn_ref[...][None],
                              (head_num, bt, pomo, n_total)).reshape(g, pomo, n_total)
    s = jnp.einsum('gpd,gnd->gpn', q_g, k_g,
                   preferred_element_type=jnp.float32) * (1.0 / math.sqrt(float(qkv_dim)))
    s = s + mask_g
    m = jnp.max(s, axis=-1, keepdims=True)
    e = jnp.exp(s - m)
    w = e / jnp.sum(e, axis=-1, keepdims=True)
    o_g = jnp.einsum('gpn,gnd->gpd', w, v_g,
                     preferred_element_type=jnp.float32)          # (g, pomo, D)

    # ---- multi_head_combine: per-head (D, E) matmul, reduced over the leading head axis.
    wc_g = jnp.broadcast_to(wc_ref[...][:, None], (head_num, bt, qkv_dim, e_dim)
                            ).reshape(g, qkv_dim, e_dim)
    mh_g = jnp.einsum('gpd,gde->gpe', o_g, wc_g,
                      preferred_element_type=jnp.float32)         # (g, pomo, E)
    mh = jnp.sum(mh_g.reshape(head_num, bt, pomo, e_dim), axis=0)  # (Bt, pomo, E)

    # ---- single-head score vs. lane-padded key, clip, mask, softmax (lane-dense store).
    score = jnp.einsum('bpe,bne->bpn', mh, keypad_ref[...],
                       preferred_element_type=jnp.float32)        # (Bt, pomo, node_pad)
    score = logit_clipping * jnp.tanh(score * (1.0 / sqrt_embedding_dim))
    score = score + mask_score_ref[...]
    m2 = jnp.max(score, axis=-1, keepdims=True)
    e2 = jnp.exp(score - m2)
    probs_ref[...] = e2 / jnp.sum(e2, axis=-1, keepdims=True)


# ----------------------------------------------------------------------------
# One-time precompute per problem instance (mirrors CVRP_Decoder.set_kv, which
# runs in pre_forward, outside the per-step forward(state) hot loop).
# ----------------------------------------------------------------------------
def prepare_decoder(enc_nodes, params, *, head_num, qkv_dim, patches2):
    B, n_total, e_dim = enc_nodes.shape
    node_size = n_total - patches2
    node_pad = max(128, ((node_size + 127) // 128) * 128)

    # K / V projections are decode-step invariant: compute them once here.
    k = jnp.einsum('bne,eh->bnh', enc_nodes, params['Wk'])
    v = jnp.einsum('bne,eh->bnh', enc_nodes, params['Wv'])
    k_heads = k.reshape(B, n_total, head_num, qkv_dim).transpose(2, 0, 1, 3)  # (H,B,N,D)
    v_heads = v.reshape(B, n_total, head_num, qkv_dim).transpose(2, 0, 1, 3)

    # single_head_key = enc[:, :node_size], zero-padded to a lane-dense width.
    key_pad = jnp.zeros((B, node_pad, e_dim), jnp.float32)
    key_pad = key_pad.at[:, :node_size].set(enc_nodes[:, :node_size].astype(jnp.float32))

    # Head-major weight views so the kernel never lane-slices heads.
    wq = params['Wq_last']                                              # (E+1, H*D)
    wq_heads = wq[:e_dim].reshape(e_dim, head_num, qkv_dim).transpose(1, 0, 2)   # (H,E,D)
    wq_load_heads = wq[e_dim].reshape(head_num, 1, qkv_dim)                      # (H,1,D)
    wc_heads = params['Wcomb'].reshape(head_num, qkv_dim, e_dim)                 # (H,D,E)

    return dict(k_heads=k_heads, v_heads=v_heads, key_pad=key_pad,
                wq_heads=wq_heads, wq_load_heads=wq_load_heads, wc_heads=wc_heads,
                node_size=node_size, node_pad=node_pad)


def _choose_batch_tile(batch_size, per_batch_bytes, vmem_budget_bytes=8 * 1024 * 1024):
    """Largest divisor of batch_size whose per-step block footprint fits the budget.

    Budget is conservative (pipelining double-buffers it), so the tile also fits v7x's
    64 MiB VMEM / 32 MiB default scoped limit without raising vmem_limit_bytes.
    """
    bt = int(max(1, min(batch_size, vmem_budget_bytes // max(per_batch_bytes, 1))))
    while batch_size % bt:
        bt -= 1
    return bt


# ----------------------------------------------------------------------------
# Per-decoding-step wrapper (CVRP_Decoder.forward on the hot path).
# ----------------------------------------------------------------------------
def decoder_step(enc_nodes, pre, current_node, load, ninf_mask, *,
                 head_num, qkv_dim, sqrt_embedding_dim, logit_clipping, batch_tile=None):
    B, n_total, e_dim = enc_nodes.shape
    pomo = current_node.shape[1]
    node_size = pre['node_size']
    node_pad = pre['node_pad']
    patches2 = n_total - node_size

    idx3 = current_node.astype(jnp.int32)[:, :, None]                   # (B, pomo, 1)
    load3 = load.astype(jnp.float32)[:, :, None]                        # (B, pomo, 1)
    # rank-3 mask: zero-extended over patch tokens (attention) ...
    mask_attn = jnp.concatenate(
        [ninf_mask.astype(jnp.float32),
         jnp.zeros((B, pomo, patches2), jnp.float32)], axis=-1)          # (B, pomo, N_total)
    # ... and -inf-extended over the lane-padding columns (final score / probs).
    mask_score = jnp.concatenate(
        [ninf_mask.astype(jnp.float32),
         jnp.full((B, pomo, node_pad - node_size), NEG_INF, jnp.float32)], axis=-1)

    per_batch_bytes = 4 * (
        n_total * e_dim                      # enc tile
        + 2 * head_num * n_total * qkv_dim   # K, V tiles
        + node_pad * e_dim                   # padded single-head key
        + pomo * (2 + n_total + node_pad)    # idx, load, masks
        + pomo * node_pad)                   # probs output tile
    bt = batch_tile if batch_tile is not None else _choose_batch_tile(B, per_batch_bytes)
    assert B % bt == 0

    kernel = functools.partial(
        _decoder_step_kernel,
        head_num=head_num, qkv_dim=qkv_dim,
        sqrt_embedding_dim=float(sqrt_embedding_dim),
        logit_clipping=float(logit_clipping))

    probs_pad = pl.pallas_call(
        kernel,
        out_shape=jax.ShapeDtypeStruct((B, pomo, node_pad), jnp.float32),
        grid_spec=pltpu.PrefetchScalarGridSpec(
            num_scalar_prefetch=0,
            grid=(B // bt,),
            in_specs=[
                pl.BlockSpec((bt, n_total, e_dim), lambda b: (b, 0, 0)),          # enc
                pl.BlockSpec((head_num, bt, n_total, qkv_dim),
                             lambda b: (0, b, 0, 0)),                              # K (head-major)
                pl.BlockSpec((head_num, bt, n_total, qkv_dim),
                             lambda b: (0, b, 0, 0)),                              # V (head-major)
                pl.BlockSpec((bt, node_pad, e_dim), lambda b: (b, 0, 0)),          # padded key
                pl.BlockSpec((bt, pomo, 1), lambda b: (b, 0, 0)),                  # current_node
                pl.BlockSpec((bt, pomo, 1), lambda b: (b, 0, 0)),                  # load
                pl.BlockSpec((bt, pomo, n_total), lambda b: (b, 0, 0)),            # attn mask
                pl.BlockSpec((bt, pomo, node_pad), lambda b: (b, 0, 0)),           # score mask
                pl.BlockSpec((head_num, e_dim, qkv_dim), lambda b: (0, 0, 0)),     # Wq heads
                pl.BlockSpec((head_num, 1, qkv_dim), lambda b: (0, 0, 0)),         # Wq load row
                pl.BlockSpec((head_num, qkv_dim, e_dim), lambda b: (0, 0, 0)),     # Wcomb heads
            ],
            out_specs=pl.BlockSpec((bt, pomo, node_pad), lambda b: (b, 0, 0)),
        ),
        compiler_params=pltpu.CompilerParams(dimension_semantics=("parallel",)),
    )(enc_nodes.astype(jnp.float32), pre['k_heads'], pre['v_heads'], pre['key_pad'],
      idx3, load3, mask_attn, mask_score,
      pre['wq_heads'], pre['wq_load_heads'], pre['wc_heads'])

    return probs_pad[:, :, :node_size]


# ----------------------------------------------------------------------------
# CVRPModel.forward(state) wrapper.
# ----------------------------------------------------------------------------
def cvrp_model_forward(selected_count, state, enc_nodes, params, model_params, pre=None):
    """Mirrors CVRPModel.forward(state); `selected_count` is a static Python int."""
    B, pomo = state["BATCH_IDX"].shape
    if selected_count == 0:
        return (jnp.zeros((B, pomo), jnp.int32),
                jnp.ones((B, pomo), jnp.float32), None)
    if selected_count == 1:
        selected = jnp.broadcast_to(
            jnp.arange(1, pomo + 1, dtype=jnp.int32)[None, :], (B, pomo))
        return selected, jnp.ones((B, pomo), jnp.float32), None

    if pre is None:
        pre = prepare_decoder(enc_nodes, params,
                              head_num=model_params["head_num"],
                              qkv_dim=model_params["qkv_dim"],
                              patches2=model_params["patches"] ** 2)
    probs = decoder_step(
        enc_nodes, pre, state["current_node"], state["load"], state["ninf_mask"],
        head_num=model_params["head_num"], qkv_dim=model_params["qkv_dim"],
        sqrt_embedding_dim=float(model_params["sqrt_embedding_dim"]),
        logit_clipping=float(model_params["logit_clipping"]))
    # eval_type == 'argmax' path (prob is None); jnp.argmax = first occurrence, like torch.
    selected = jnp.argmax(probs, axis=2).astype(jnp.int32)
    # TODO(synk): training / eval_type=='softmax' uses multinomial rejection-sampling
    # (data-dependent while-loop with RNG); not implemented in the kernel.
    return selected, None, probs


# ----------------------------------------------------------------------------
# Pure-JAX reference of the decoder forward (for correctness checking only).
# ----------------------------------------------------------------------------
def _reference_probs(enc, current_node, load, ninf_mask, params, *,
                     head_num, qkv_dim, patches2, sqrt_embedding_dim, logit_clipping):
    B, N, E = enc.shape
    node_size = N - patches2
    pomo = current_node.shape[1]
    hd = head_num * qkv_dim
    gather_idx = jnp.broadcast_to(current_node[:, :, None].astype(jnp.int32), (B, pomo, E))
    last = jnp.take_along_axis(enc, gather_idx, axis=1)
    q = jnp.concatenate([last, load[:, :, None]], axis=2) @ params['Wq_last']
    k = enc @ params['Wk']
    v = enc @ params['Wv']

    def heads(x):
        return x.reshape(B, -1, head_num, qkv_dim).transpose(0, 2, 1, 3)

    qh, kh, vh = heads(q), heads(k), heads(v)
    s = jnp.einsum('bhpd,bhnd->bhpn', qh, kh) / math.sqrt(float(qkv_dim))
    mask3 = jnp.concatenate([ninf_mask, jnp.zeros((B, pomo, patches2), jnp.float32)], axis=-1)
    s = s + mask3[:, None, :, :]
    w = jax.nn.softmax(s, axis=-1)
    o = jnp.einsum('bhpn,bhnd->bhpd', w, vh).transpose(0, 2, 1, 3).reshape(B, pomo, hd)
    mh = o @ params['Wcomb']
    score = jnp.einsum('bpe,bne->bpn', mh, enc[:, :node_size])
    score = logit_clipping * jnp.tanh(score / sqrt_embedding_dim) + ninf_mask
    return jax.nn.softmax(score, axis=-1)


# ----------------------------------------------------------------------------
# Main
# ----------------------------------------------------------------------------
if __name__ == "__main__":
    model_params = dict(
        embedding_dim=32, head_num=4, qkv_dim=8,
        sqrt_embedding_dim=math.sqrt(32.0), logit_clipping=10.0,
        patches=4, eval_type="argmax",
    )
    B, pomo = 2, 8
    problem_size = 20
    node_size = problem_size + 1                      # depot + customer nodes
    patches2 = model_params["patches"] ** 2           # image patch tokens
    n_total = node_size + patches2
    E = model_params["embedding_dim"]
    HD = model_params["head_num"] * model_params["qkv_dim"]

    key = jax.random.PRNGKey(0)
    keys = jax.random.split(key, 10)

    # Deterministic synthetic decoder parameters, (in, out) layout, bias-free (as in the module).
    params = {
        "Wq_last": 0.1 * jax.random.normal(keys[0], (E + 1, HD), jnp.float32),
        "Wk":      0.1 * jax.random.normal(keys[1], (E, HD), jnp.float32),
        "Wv":      0.1 * jax.random.normal(keys[2], (E, HD), jnp.float32),
        "Wcomb":   0.1 * jax.random.normal(keys[3], (HD, E), jnp.float32),
    }

    # TODO(synk): the CVRP_Encoder / pre_forward pipeline (patch embedding, fusion layers,
    # positional hyper-net) runs once outside CVRPModel.forward(state); encoded nodes are
    # initialized synthetically here in place of that offline pre_forward.
    enc_nodes = jax.random.normal(keys[4], (B, n_total, E), jnp.float32)

    current_node = jax.random.randint(keys[5], (B, pomo), 0, node_size, dtype=jnp.int32)
    load = jax.random.uniform(keys[6], (B, pomo), jnp.float32)
    mask_bits = jax.random.uniform(keys[7], (B, pomo, node_size)) < 0.3
    ninf_mask = jnp.where(mask_bits, NEG_INF, 0.0).astype(jnp.float32)
    ninf_mask = ninf_mask.at[:, :, 0].set(0.0)        # depot always feasible

    state = {
        "BATCH_IDX": jnp.broadcast_to(jnp.arange(B)[:, None], (B, pomo)),
        "POMO_IDX": jnp.broadcast_to(jnp.arange(pomo)[None, :], (B, pomo)),
        "current_node": current_node,
        "load": load,
        "ninf_mask": ninf_mask,
    }

    # One-time precompute (mirrors pre_forward / set_kv).
    pre = prepare_decoder(enc_nodes, params,
                          head_num=model_params["head_num"],
                          qkv_dim=model_params["qkv_dim"],
                          patches2=patches2)

    selected, prob, probs = cvrp_model_forward(2, state, enc_nodes, params, model_params, pre=pre)
    selected = jax.block_until_ready(selected)
    probs = jax.block_until_ready(probs)

    assert selected.shape == (B, pomo)
    assert probs.shape == (B, pomo, node_size)
    assert bool(jnp.all(jnp.isfinite(probs)))
    # probabilities sum to 1 along the node axis
    assert bool(jnp.all(jnp.abs(jnp.sum(probs, axis=-1) - 1.0) < 1e-4))
    # selected nodes are never masked-out nodes
    sel_mask_vals = jnp.take_along_axis(ninf_mask, selected[:, :, None], axis=2)
    assert bool(jnp.all(sel_mask_vals > -1.0))
    # kernel matches the pure-JAX reference of the module forward
    ref_probs = _reference_probs(
        enc_nodes, current_node, load, ninf_mask, params,
        head_num=model_params["head_num"], qkv_dim=model_params["qkv_dim"],
        patches2=patches2, sqrt_embedding_dim=model_params["sqrt_embedding_dim"],
        logit_clipping=model_params["logit_clipping"])
    assert bool(jnp.max(jnp.abs(probs - ref_probs)) < 2e-4)

    print("KERNEL_OK")
</pallas_src>

<mosaic_0001>
module attributes {stable_mosaic.version = 11 : i64} {
  func.func @_decoder_step_kernel(%arg0: i32, %arg1: memref<2x37x32xf32, #tpu.memory_space<vmem>>, %arg2: memref<4x2x37x8xf32, #tpu.memory_space<vmem>>, %arg3: memref<4x2x37x8xf32, #tpu.memory_space<vmem>>, %arg4: memref<2x128x32xf32, #tpu.memory_space<vmem>>, %arg5: memref<2x8x1xi32, #tpu.memory_space<vmem>>, %arg6: memref<2x8x1xf32, #tpu.memory_space<vmem>>, %arg7: memref<2x8x37xf32, #tpu.memory_space<vmem>>, %arg8: memref<2x8x128xf32, #tpu.memory_space<vmem>>, %arg9: memref<4x32x8xf32, #tpu.memory_space<vmem>>, %arg10: memref<4x1x8xf32, #tpu.memory_space<vmem>>, %arg11: memref<4x8x32xf32, #tpu.memory_space<vmem>>, %arg12: memref<2x8x128xf32, #tpu.memory_space<vmem>>) attributes {dimension_semantics = [#tpu.dimension_semantics<parallel>], iteration_bounds = array<i64: 1>, scalar_prefetch = 0 : i64, scratch_operands = 0 : i64, tpu.core_type = #tpu.core_type<tc>, window_params = [{transform_indices = @transform_0, window_bounds = array<i64: 2, 37, 32>}, {transform_indices = @transform_1, window_bounds = array<i64: 4, 2, 37, 8>}, {transform_indices = @transform_2, window_bounds = array<i64: 4, 2, 37, 8>}, {transform_indices = @transform_3, window_bounds = array<i64: 2, 128, 32>}, {transform_indices = @transform_4, window_bounds = array<i64: 2, 8, 1>}, {transform_indices = @transform_5, window_bounds = array<i64: 2, 8, 1>}, {transform_indices = @transform_6, window_bounds = array<i64: 2, 8, 37>}, {transform_indices = @transform_7, window_bounds = array<i64: 2, 8, 128>}, {pipeline_mode = #tpu.pipeline_mode<synchronous>, transform_indices = @transform_8, window_bounds = array<i64: 4, 32, 8>}, {pipeline_mode = #tpu.pipeline_mode<synchronous>, transform_indices = @transform_9, window_bounds = array<i64: 4, 1, 8>}, {pipeline_mode = #tpu.pipeline_mode<synchronous>, transform_indices = @transform_10, window_bounds = array<i64: 4, 8, 32>}, {transform_indices = @transform_11, window_bounds = array<i64: 2, 8, 128>}]} {
    %c0 = arith.constant 0 : index
    %c0_0 = arith.constant 0 : index
    %c0_1 = arith.constant 0 : index
    %0 = vector.load %arg1[%c0, %c0_0, %c0_1] : memref<2x37x32xf32, #tpu.memory_space<vmem>>, vector<2x37x32xf32>
    %c0_2 = arith.constant 0 : index
    %c0_3 = arith.constant 0 : index
    %c0_4 = arith.constant 0 : index
    %1 = vector.load %arg5[%c0_2, %c0_3, %c0_4] : memref<2x8x1xi32, #tpu.memory_space<vmem>>, vector<2x8x1xi32>
    %2 = tpu.iota {dimensions = array<i32: 2>} : vector<2x8x37xi32>
    %3 = vector.broadcast %1 : vector<2x8x1xi32> to vector<2x8x37xi32>
    %4 = arith.cmpi eq, %2, %3 : vector<2x8x37xi32>
    %5 = arith.extui %4 : vector<2x8x37xi1> to vector<2x8x37xi32>
    %6 = arith.sitofp %5 : vector<2x8x37xi32> to vector<2x8x37xf32>
    "tpu.trace_start"() <{level = 10 : i32, message = "bpn,bne->bpe"}> : () -> ()
    %cst = arith.constant dense<0.000000e+00> : vector<2x8x32xf32>
    %7 = tpu.matmul %6, %0, %cst {dimension_numbers = #tpu.dot_dimension_numbers<[2], [1], [1], [2], [0, 0, 0, 1, 1, 2], [0], [0]>} : vector<2x8x37xf32>, vector<2x37x32xf32>, vector<2x8x32xf32> -> vector<2x8x32xf32>
    "tpu.trace_stop"() : () -> ()
    %c0_5 = arith.constant 0 : index
    %c0_6 = arith.constant 0 : index
    %c0_7 = arith.constant 0 : index
    %8 = vector.load %arg9[%c0_5, %c0_6, %c0_7] : memref<4x32x8xf32, #tpu.memory_space<vmem>>, vector<4x32x8xf32>
    %c0_8 = arith.constant 0 : index
    %c0_9 = arith.constant 0 : index
    %c0_10 = arith.constant 0 : index
    %9 = vector.load %arg10[%c0_8, %c0_9, %c0_10] : memref<4x1x8xf32, #tpu.memory_space<vmem>>, vector<4x1x8xf32>
    %c0_11 = arith.constant 0 : index
    %c0_12 = arith.constant 0 : index
    %c0_13 = arith.constant 0 : index
    %10 = vector.load %arg6[%c0_11, %c0_12, %c0_13] : memref<2x8x1xf32, #tpu.memory_space<vmem>>, vector<2x8x1xf32>
    %11 = vector.shape_cast %7 : vector<2x8x32xf32> to vector<1x2x8x32xf32>
    %12 = vector.shape_cast %11 : vector<1x2x8x32xf32> to vector<1x2x8x32xf32>
    %13 = vector.broadcast %12 : vector<1x2x8x32xf32> to vector<4x2x8x32xf32>
    %14 = vector.shape_cast %13 : vector<4x2x8x32xf32> to vector<8x8x32xf32>
    %15 = vector.shape_cast %8 : vector<4x32x8xf32> to vector<4x1x32x8xf32>
    %16 = vector.shape_cast %15 : vector<4x1x32x8xf32> to vector<4x1x32x8xf32>
    %17 = vector.broadcast %16 : vector<4x1x32x8xf32> to vector<4x2x32x8xf32>
    %18 = vector.shape_cast %17 : vector<4x2x32x8xf32> to vector<8x32x8xf32>
    %19 = vector.shape_cast %9 : vector<4x1x8xf32> to vector<4x1x1x8xf32>
    %20 = vector.shape_cast %19 : vector<4x1x1x8xf32> to vector<4x1x1x8xf32>
    %21 = vector.broadcast %20 : vector<4x1x1x8xf32> to vector<4x2x1x8xf32>
    %22 = vector.shape_cast %21 : vector<4x2x1x8xf32> to vector<8x1x8xf32>
    %23 = vector.shape_cast %10 : vector<2x8x1xf32> to vector<1x2x8x1xf32>
    %24 = vector.shape_cast %23 : vector<1x2x8x1xf32> to vector<1x2x8x1xf32>
    %25 = vector.broadcast %24 : vector<1x2x8x1xf32> to vector<4x2x8x1xf32>
    %26 = vector.shape_cast %25 : vector<4x2x8x1xf32> to vector<8x8x1xf32>
    "tpu.trace_start"() <{level = 10 : i32, message = "gpe,ged->gpd"}> : () -> ()
    %cst_14 = arith.constant dense<0.000000e+00> : vector<8x8x8xf32>
    %27 = tpu.matmul %14, %18, %cst_14 {dimension_numbers = #tpu.dot_dimension_numbers<[2], [1], [1], [2], [0, 0, 0, 1, 1, 2], [0], [0]>} : vector<8x8x32xf32>, vector<8x32x8xf32>, vector<8x8x8xf32> -> vector<8x8x8xf32>
    "tpu.trace_stop"() : () -> ()
    %28 = vector.broadcast %26 : vector<8x8x1xf32> to vector<8x8x8xf32>
    %29 = vector.broadcast %22 : vector<8x1x8xf32> to vector<8x8x8xf32>
    %30 = arith.mulf %28, %29 : vector<8x8x8xf32>
    %31 = arith.addf %27, %30 : vector<8x8x8xf32>
    %c0_15 = arith.constant 0 : index
    %c0_16 = arith.constant 0 : index
    %c0_17 = arith.constant 0 : index
    %c0_18 = arith.constant 0 : index
    %32 = vector.load %arg2[%c0_15, %c0_16, %c0_17, %c0_18] : memref<4x2x37x8xf32, #tpu.memory_space<vmem>>, vector<4x2x37x8xf32>
    %33 = vector.shape_cast %32 : vector<4x2x37x8xf32> to vector<8x37x8xf32>
    %c0_19 = arith.constant 0 : index
    %c0_20 = arith.constant 0 : index
    %c0_21 = arith.constant 0 : index
    %c0_22 = arith.constant 0 : index
    %34 = vector.load %arg3[%c0_19, %c0_20, %c0_21, %c0_22] : memref<4x2x37x8xf32, #tpu.memory_space<vmem>>, vector<4x2x37x8xf32>
    %35 = vector.shape_cast %34 : vector<4x2x37x8xf32> to vector<8x37x8xf32>
    %c0_23 = arith.constant 0 : index
    %c0_24 = arith.constant 0 : index
    %c0_25 = arith.constant 0 : index
    %36 = vector.load %arg7[%c0_23, %c0_24, %c0_25] : memref<2x8x37xf32, #tpu.memory_space<vmem>>, vector<2x8x37xf32>
    %37 = vector.shape_cast %36 : vector<2x8x37xf32> to vector<1x2x8x37xf32>
    %38 = vector.shape_cast %37 : vector<1x2x8x37xf32> to vector<1x2x8x37xf32>
    %39 = vector.broadcast %38 : vector<1x2x8x37xf32> to vector<4x2x8x37xf32>
    %40 = vector.shape_cast %39 : vector<4x2x8x37xf32> to vector<8x8x37xf32>
    "tpu.trace_start"() <{level = 10 : i32, message = "gpd,gnd->gpn"}> : () -> ()
    %cst_26 = arith.constant dense<0.000000e+00> : vector<8x8x37xf32>
    %41 = tpu.matmul %31, %33, %cst_26 {dimension_numbers = #tpu.dot_dimension_numbers<[2], [2], [1], [1], [0, 0, 0, 1, 1, 1], [0], [0]>} : vector<8x8x8xf32>, vector<8x37x8xf32>, vector<8x8x37xf32> -> vector<8x8x37xf32>
    "tpu.trace_stop"() : () -> ()
    %cst_27 = arith.constant 0.353553385 : f32
    %42 = vector.broadcast %cst_27 : f32 to vector<8x8x37xf32>
    %43 = arith.mulf %41, %42 : vector<8x8x37xf32>
    %44 = arith.addf %43, %40 : vector<8x8x37xf32>
    %cst_28 = arith.constant dense<0xFF800000> : vector<8x8xf32>
    %45 = vector.multi_reduction <maximumf>, %44, %cst_28 [2] : vector<8x8x37xf32> to vector<8x8xf32>
    %46 = vector.shape_cast %45 : vector<8x8xf32> to vector<8x8x1xf32>
    %47 = vector.broadcast %46 : vector<8x8x1xf32> to vector<8x8x37xf32>
    %48 = arith.subf %44, %47 : vector<8x8x37xf32>
    %49 = math.exp %48 : vector<8x8x37xf32>
    %cst_29 = arith.constant dense<0.000000e+00> : vector<8x8xf32>
    %50 = vector.multi_reduction <add>, %49, %cst_29 [2] : vector<8x8x37xf32> to vector<8x8xf32>
    %51 = vector.shape_cast %50 : vector<8x8xf32> to vector<8x8x1xf32>
    %52 = vector.broadcast %51 : vector<8x8x1xf32> to vector<8x8x37xf32>
    %53 = arith.divf %49, %52 : vector<8x8x37xf32>
    "tpu.trace_start"() <{level = 10 : i32, message = "gpn,gnd->gpd"}> : () -> ()
    %cst_30 = arith.constant dense<0.000000e+00> : vector<8x8x8xf32>
    %54 = tpu.matmul %53, %35, %cst_30 {dimension_numbers = #tpu.dot_dimension_numbers<[2], [1], [1], [2], [0, 0, 0, 1, 1, 2], [0], [0]>} : vector<8x8x37xf32>, vector<8x37x8xf32>, vector<8x8x8xf32> -> vector<8x8x8xf32>
    "tpu.trace_stop"() : () -> ()
    %c0_31 = arith.constant 0 : index
    %c0_32 = arith.constant 0 : index
    %c0_33 = arith.constant 0 : index
    %55 = vector.load %arg11[%c0_31, %c0_32, %c0_33] : memref<4x8x32xf32, #tpu.memory_space<vmem>>, vector<4x8x32xf32>
    %56 = vector.shape_cast %55 : vector<4x8x32xf32> to vector<4x1x8x32xf32>
    %57 = vector.shape_cast %56 : vector<4x1x8x32xf32> to vector<4x1x8x32xf32>
    %58 = vector.broadcast %57 : vector<4x1x8x32xf32> to vector<4x2x8x32xf32>
    %59 = vector.shape_cast %58 : vector<4x2x8x32xf32> to vector<8x8x32xf32>
    "tpu.trace_start"() <{level = 10 : i32, message = "gpd,gde->gpe"}> : () -> ()
    %cst_34 = arith.constant dense<0.000000e+00> : vector<8x8x32xf32>
    %60 = tpu.matmul %54, %59, %cst_34 {dimension_numbers = #tpu.dot_dimension_numbers<[2], [1], [1], [2], [0, 0, 0, 1, 1, 2], [0], [0]>} : vector<8x8x8xf32>, vector<8x8x32xf32>, vector<8x8x32xf32> -> vector<8x8x32xf32>
    "tpu.trace_stop"() : () -> ()
    %61 = vector.shape_cast %60 : vector<8x8x32xf32> to vector<4x2x8x32xf32>
    %cst_35 = arith.constant dense<0.000000e+00> : vector<2x8x32xf32>
    %62 = vector.multi_reduction <add>, %61, %cst_35 [0] : vector<4x2x8x32xf32> to vector<2x8x32xf32>
    %c0_36 = arith.constant 0 : index
    %c0_37 = arith.constant 0 : index
    %c0_38 = arith.constant 0 : index
    %63 = vector.load %arg4[%c0_36, %c0_37, %c0_38] : memref<2x128x32xf32, #tpu.memory_space<vmem>>, vector<2x128x32xf32>
    "tpu.trace_start"() <{level = 10 : i32, message = "bpe,bne->bpn"}> : () -> ()
    %cst_39 = arith.constant dense<0.000000e+00> : vector<2x8x128xf32>
    %64 = tpu.matmul %62, %63, %cst_39 {dimension_numbers = #tpu.dot_dimension_numbers<[2], [2], [1], [1], [0, 0, 0, 1, 1, 1], [0], [0]>} : vector<2x8x32xf32>, vector<2x128x32xf32>, vector<2x8x128xf32> -> vector<2x8x128xf32>
    "tpu.trace_stop"() : () -> ()
    %cst_40 = arith.constant 0.176776692 : f32
    %65 = vector.broadcast %cst_40 : f32 to vector<2x8x128xf32>
    %66 = arith.mulf %64, %65 : vector<2x8x128xf32>
    %67 = math.tanh %66 : vector<2x8x128xf32>
    %cst_41 = arith.constant 1.000000e+01 : f32
    %68 = vector.broadcast %cst_41 : f32 to vector<2x8x128xf32>
    %69 = arith.mulf %68, %67 : vector<2x8x128xf32>
    %c0_42 = arith.constant 0 : index
    %c0_43 = arith.constant 0 : index
    %c0_44 = arith.constant 0 : index
    %70 = vector.load %arg8[%c0_42, %c0_43, %c0_44] : memref<2x8x128xf32, #tpu.memory_space<vmem>>, vector<2x8x128xf32>
    %71 = arith.addf %69, %70 : vector<2x8x128xf32>
    %cst_45 = arith.constant dense<0xFF800000> : vector<2x8xf32>
    %72 = vector.multi_reduction <maximumf>, %71, %cst_45 [2] : vector<2x8x128xf32> to vector<2x8xf32>
    %73 = vector.shape_cast %72 : vector<2x8xf32> to vector<2x8x1xf32>
    %74 = vector.broadcast %73 : vector<2x8x1xf32> to vector<2x8x128xf32>
    %75 = arith.subf %71, %74 : vector<2x8x128xf32>
    %76 = math.exp %75 : vector<2x8x128xf32>
    %cst_46 = arith.constant dense<0.000000e+00> : vector<2x8xf32>
    %77 = vector.multi_reduction <add>, %76, %cst_46 [2] : vector<2x8x128xf32> to vector<2x8xf32>
    %78 = vector.shape_cast %77 : vector<2x8xf32> to vector<2x8x1xf32>
    %79 = vector.broadcast %78 : vector<2x8x1xf32> to vector<2x8x128xf32>
    %80 = arith.divf %76, %79 : vector<2x8x128xf32>
    %c0_47 = arith.constant 0 : index
    %c0_48 = arith.constant 0 : index
    %c0_49 = arith.constant 0 : index
    %81 = vector.load %arg12[%c0_47, %c0_48, %c0_49] : memref<2x8x128xf32, #tpu.memory_space<vmem>>, vector<2x8x128xf32>
    tpu.vector_store %arg12[%c0_47, %c0_48, %c0_49], %80 {strides = array<i32>} : memref<2x8x128xf32, #tpu.memory_space<vmem>>, vector<2x8x128xf32>,
    return
  }
  func.func @transform_0(%arg0: i32) -> (i32, i32, i32) {
    %c0_i32 = arith.constant 0 : i32
    %c0_i32_0 = arith.constant 0 : i32
    %c0_i32_1 = arith.constant 0 : i32
    return %arg0, %c0_i32, %c0_i32_0 : i32, i32, i32
  }
  func.func @transform_1(%arg0: i32) -> (i32, i32, i32, i32) {
    %c0_i32 = arith.constant 0 : i32
    %c0_i32_0 = arith.constant 0 : i32
    %c0_i32_1 = arith.constant 0 : i32
    %c0_i32_2 = arith.constant 0 : i32
    return %c0_i32, %arg0, %c0_i32_0, %c0_i32_1 : i32, i32, i32, i32
  }
  func.func @transform_2(%arg0: i32) -> (i32, i32, i32, i32) {
    %c0_i32 = arith.constant 0 : i32
    %c0_i32_0 = arith.constant 0 : i32
    %c0_i32_1 = arith.constant 0 : i32
    %c0_i32_2 = arith.constant 0 : i32
    return %c0_i32, %arg0, %c0_i32_0, %c0_i32_1 : i32, i32, i32, i32
  }
  func.func @transform_3(%arg0: i32) -> (i32, i32, i32) {
    %c0_i32 = arith.constant 0 : i32
    %c0_i32_0 = arith.constant 0 : i32
    %c0_i32_1 = arith.constant 0 : i32
    return %arg0, %c0_i32, %c0_i32_0 : i32, i32, i32
  }
  func.func @transform_4(%arg0: i32) -> (i32, i32, i32) {
    %c0_i32 = arith.constant 0 : i32
    %c0_i32_0 = arith.constant 0 : i32
    %c0_i32_1 = arith.constant 0 : i32
    return %arg0, %c0_i32, %c0_i32_0 : i32, i32, i32
  }
  func.func @transform_5(%arg0: i32) -> (i32, i32, i32) {
    %c0_i32 = arith.constant 0 : i32
    %c0_i32_0 = arith.constant 0 : i32
    %c0_i32_1 = arith.constant 0 : i32
    return %arg0, %c0_i32, %c0_i32_0 : i32, i32, i32
  }
  func.func @transform_6(%arg0: i32) -> (i32, i32, i32) {
    %c0_i32 = arith.constant 0 : i32
    %c0_i32_0 = arith.constant 0 : i32
    %c0_i32_1 = arith.constant 0 : i32
    return %arg0, %c0_i32, %c0_i32_0 : i32, i32, i32
  }
  func.func @transform_7(%arg0: i32) -> (i32, i32, i32) {
    %c0_i32 = arith.constant 0 : i32
    %c0_i32_0 = arith.constant 0 : i32
    %c0_i32_1 = arith.constant 0 : i32
    return %arg0, %c0_i32, %c0_i32_0 : i32, i32, i32
  }
  func.func @transform_8(%arg0: i32) -> (i32, i32, i32) {
    %c0_i32 = arith.constant 0 : i32
    %c0_i32_0 = arith.constant 0 : i32
    %c0_i32_1 = arith.constant 0 : i32
    %c0_i32_2 = arith.constant 0 : i32
    return %c0_i32, %c0_i32_0, %c0_i32_1 : i32, i32, i32
  }
  func.func @transform_9(%arg0: i32) -> (i32, i32, i32) {
    %c0_i32 = arith.constant 0 : i32
    %c0_i32_0 = arith.constant 0 : i32
    %c0_i32_1 = arith.constant 0 : i32
    %c0_i32_2 = arith.constant 0 : i32
    return %c0_i32, %c0_i32_0, %c0_i32_1 : i32, i32, i32
  }
  func.func @transform_10(%arg0: i32) -> (i32, i32, i32) {
    %c0_i32 = arith.constant 0 : i32
    %c0_i32_0 = arith.constant 0 : i32
    %c0_i32_1 = arith.constant 0 : i32
    %c0_i32_2 = arith.constant 0 : i32
    return %c0_i32, %c0_i32_0, %c0_i32_1 : i32, i32, i32
  }
  func.func @transform_11(%arg0: i32) -> (i32, i32, i32) {
    %c0_i32 = arith.constant 0 : i32
    %c0_i32_0 = arith.constant 0 : i32
    %c0_i32_1 = arith.constant 0 : i32
    return %arg0, %c0_i32, %c0_i32_0 : i32, i32, i32
  }
}

</mosaic_0001>

<llo_original>
// kernel: tpu_custom_call.1
$region0: #{tpu_custom_call.1}
  #allocation0 [shape = 'u32[]', space=smem, size = 0x4, offset = 0x4, fixed_abs, tag = 'smem constant byte address 0x4 - core index']
  #allocation1 [shape = 'u32[144,128]{1,0:T(1,128)}', space=vmem, size = 0x12000, scoped, tag = 'internal scratch']
  %s0 = inlined_call_operand.vmem [shape: f32[2,37,32], index: 0, kind: input, shape index: {}]
  %s1 = inlined_call_operand.vmem [shape: f32[4,2,37,8], index: 1, kind: input, shape index: {}]
  %s2 = inlined_call_operand.vmem [shape: f32[4,2,37,8], index: 2, kind: input, shape index: {}]
  %s3 = inlined_call_operand.vmem [shape: f32[2,128,32], index: 3, kind: input, shape index: {}]
  %s4 = inlined_call_operand.vmem [shape: s32[2,8,1], index: 4, kind: input, shape index: {}]
  %s5 = inlined_call_operand.vmem [shape: f32[2,8,1], index: 5, kind: input, shape index: {}]
  %s6 = inlined_call_operand.vmem [shape: f32[2,8,37], index: 6, kind: input, shape index: {}]
  %s7 = inlined_call_operand.vmem [shape: f32[2,8,128], index: 7, kind: input, shape index: {}]
  %s8 = inlined_call_operand.vmem [shape: f32[4,32,8], index: 8, kind: input, shape index: {}]
  %s9 = inlined_call_operand.vmem [shape: f32[4,1,8], index: 9, kind: input, shape index: {}]
  %s10 = inlined_call_operand.vmem [shape: f32[4,8,32], index: 10, kind: input, shape index: {}]
  %s11 = inlined_call_operand.hbm [shape: f32[2,8,128], index: 11, kind: output, shape index: {}]
  %s12 = sld [smem:[#allocation0]]
  $region54: #{tpu_custom_call.1} parent=0
    _
  %s14 = ssub.s32 1, %s12
  %s15 = scalar_select 0, %s14, %s12
  $region1: #{tpu_custom_call.1} parent=0
    #allocation2 [shape = 'u8[8192]{0}', space=vmem, size = 0x2000, scoped, tag = 'output window, operand 0, single buffered']
    #allocation3 [shape = 's32[1]{0}', space=sflag, size = 0x4, scoped, tag = 'scoped memory for tpu_custom_call.1']
    %16 = vsyncpa [#allocation3], 0
    // Predicated region
    $region2: #{tpu_custom_call.1} parent=1 // pred_check
      _
    $region3: #{tpu_custom_call.1} parent=1 // pred_check_branch
      %18 = sbr.rel (0) target = $region5
    $region4: #{tpu_custom_call.1} parent=1 // pred_region
      _
    $region5: #{tpu_custom_call.1} parent=1 // pred_fallthru
      _
    // Predicated region
    $region6: #{tpu_custom_call.1} parent=1 // pred_check
      _
    $region7: #{tpu_custom_call.1} parent=1 // pred_check_branch
      %20 = sbr.rel (0) target = $region9
    $region8: #{tpu_custom_call.1} parent=1 // pred_region
      _
    $region9: #{tpu_custom_call.1} parent=1 // pred_fallthru
      _
    // Predicated region
    $region10: #{tpu_custom_call.1} parent=1 // pred_check
      _
    $region11: #{tpu_custom_call.1} parent=1 // pred_check_branch
      %22 = sbr.rel (0) target = $region13
    $region12: #{tpu_custom_call.1} parent=1 // pred_region
      _
    $region13: #{tpu_custom_call.1} parent=1 // pred_fallthru
      _
    // Predicated region
    $region14: #{tpu_custom_call.1} parent=1 // pred_check
      _
    $region15: #{tpu_custom_call.1} parent=1 // pred_check_branch
      %24 = sbr.rel (0) target = $region17
    $region16: #{tpu_custom_call.1} parent=1 // pred_region
      _
    $region17: #{tpu_custom_call.1} parent=1 // pred_fallthru
      _
    // Predicated region
    $region18: #{tpu_custom_call.1} parent=1 // pred_check
      _
    $region19: #{tpu_custom_call.1} parent=1 // pred_check_branch
      %26 = sbr.rel (0) target = $region21
    $region20: #{tpu_custom_call.1} parent=1 // pred_region
      _
    $region21: #{tpu_custom_call.1} parent=1 // pred_fallthru
      _
    // Predicated region
    $region22: #{tpu_custom_call.1} parent=1 // pred_check
      _
    $region23: #{tpu_custom_call.1} parent=1 // pred_check_branch
      %28 = sbr.rel (0) target = $region25
    $region24: #{tpu_custom_call.1} parent=1 // pred_region
      _
    $region25: #{tpu_custom_call.1} parent=1 // pred_fallthru
      _
    // Predicated region
    $region26: #{tpu_custom_call.1} parent=1 // pred_check
      _
    $region27: #{tpu_custom_call.1} parent=1 // pred_check_branch
      %30 = sbr.rel (0) target = $region29
    $region28: #{tpu_custom_call.1} parent=1 // pred_region
      _
    $region29: #{tpu_custom_call.1} parent=1 // pred_fallthru
      _
    // Predicated region
    $region30: #{tpu_custom_call.1} parent=1 // pred_check
      _
    $region31: #{tpu_custom_call.1} parent=1 // pred_check_branch
      %32 = sbr.rel (0) target = $region33
    $region32: #{tpu_custom_call.1} parent=1 // pred_region
      _
    $region33: #{tpu_custom_call.1} parent=1 // pred_fallthru
      _
    // Predicated region
    $region34: #{tpu_custom_call.1} parent=1 // pred_check
      _
    $region35: #{tpu_custom_call.1} parent=1 // pred_check_branch
      %34 = sbr.rel (0) target = $region37
    $region36: #{tpu_custom_call.1} parent=1 // pred_region
      _
    $region37: #{tpu_custom_call.1} parent=1 // pred_fallthru
      _
    // Predicated region
    $region38: #{tpu_custom_call.1} parent=1 // pred_check
      _
    $region39: #{tpu_custom_call.1} parent=1 // pred_check_branch
      %36 = sbr.rel (0) target = $region41
    $region40: #{tpu_custom_call.1} parent=1 // pred_region
      _
    $region41: #{tpu_custom_call.1} parent=1 // pred_fallthru
      _
    // Predicated region
    $region42: #{tpu_custom_call.1} parent=1 // pred_check
      _
    $region43: #{tpu_custom_call.1} parent=1 // pred_check_branch
      %38 = sbr.rel (0) target = $region45
    $region44: #{tpu_custom_call.1} parent=1 // pred_region
      _
    $region45: #{tpu_custom_call.1} parent=1 // pred_fallthru
      _
    %v39 = vld [vmem:[%s0] sm:$0xff]
    %v40 = vld [vmem:[%s0 + $0x8] sm:$0xff]
    %v41 = vld [vmem:[%s0 + $0x10] sm:$0xff]
    %v42 = vld [vmem:[%s0 + $0x18] sm:$0xff]
    %v43 = vld [vmem:[%s0 + $0x20] sm:$0x1f]
    %v44 = vld [vmem:[%s0 + $0x28] sm:$0xff]
    %v45 = vld [vmem:[%s0 + $0x30] sm:$0xff]
    %v46 = vld [vmem:[%s0 + $0x38] sm:$0xff]
    %v47 = vld [vmem:[%s0 + $0x40] sm:$0xff]
    %v48 = vld [vmem:[%s0 + $0x48] sm:$0x1f]
    %v49 = vld [vmem:[%s4] sm:$0xff]
    %v50 = vld [vmem:[%s4 + $0x8] sm:$0xff]
    %v51 = vlaneseq
    %v52 = vand.u32 %v51, 127
    %53 = vset.pattern.permute.xlu0 0
    %54 = vperm.xlu0 %53, %v49
    %v55 = vpop.permute.xlu0 %54
    %56 = vset.pattern.permute.xlu0 0
    %57 = vperm.xlu0 %56, %v50
    %v58 = vpop.permute.xlu0 %57
    %vm59 = vcmp.eq.s32.totalorder %v52, %v55
    %vm60 = vcmp.eq.s32.totalorder %v52, %v58
    %v61 = vsel %vm59, 1, 0
    %v62 = vsel %vm60, 1, 0
    %v63 = vcvt.s32.f32 %v61
    %v64 = vcvt.s32.f32 %v62
    %vm65 = vcmask 302080
    %v67 = vsel %vm65, %v63, 0
    %vm69 = vcmask 1044480
    %v71 = vsel %vm69, %v43, 0
    %73 = vmatprep.subr.mxu0 0.0
    %74 = vmatpush1.msra.mxu0 %v39
    %75 = vmatprep.subr.mxu0 0.0
    %76 = vmatpush1.msra.mxu0 %v40
    %77 = vmatprep.subr.mxu0 0.0
    %78 = vmatpush1.msra.mxu0 %v41
    %79 = vmatprep.subr.mxu0 0.0
    %80 = vmatpush1.msra.mxu0 %v42
    %81 = vmatprep.subr.mxu0 0.0
    %82 = vmatpush1.msra.mxu0 %v71
    %83 = vmatprep.subr.mxu0 0.0
    %84 = vmatpush1.msra.mxu0 0.0
    %85 = vmatprep.subr.mxu0 0.0
    %86 = vmatpush1.msra.mxu0 0.0
    %87 = vmatprep.subr.mxu0 0.0
    %88 = vmatpush1.msra.mxu0 0.0
    %89 = vmatprep.subr.mxu0 0.0
    %90 = vmatpush1.msra.mxu0 0.0
    %91 = vmatprep.subr.mxu0 0.0
    %92 = vmatpush1.msra.mxu0 0.0
    %93 = vmatprep.subr.mxu0 0.0
    %94 = vmatpush1.msra.mxu0 0.0
    %95 = vmatprep.subr.mxu0 0.0
    %96 = vmatpush1.msra.mxu0 0.0
    %97 = vmatprep.subr.mxu0 0.0
    %98 = vmatpush1.msra.mxu0 0.0
    %99 = vmatprep.subr.mxu0 0.0
    %100 = vmatpush1.msra.mxu0 0.0
    %101 = vmatprep.subr.mxu0 0.0
    %102 = vmatpush1.msra.mxu0 0.0
    %103 = vmatprep.subr.mxu0 0.0
    %104 = vmatpush1.msra.mxu0 0.0
    %105 = vmatprep.subr.mxu0 0.0
    %106 = vmatpush1.msra.mxu0 0.0
    %107 = vmatprep.subr.mxu0 0.0
    %108 = vmatpush1.msra.mxu0 0.0
    %109 = vmatprep.subr.mxu0 0.0
    %110 = vmatpush1.msra.mxu0 0.0
    %111 = vmatprep.subr.mxu0 0.0
    %112 = vmatpush1.msra.mxu0 0.0
    %113 = vmatprep.subr.mxu0 0.0
    %114 = vmatpush1.msra.mxu0 0.0
    %115 = vmatprep.subr.mxu0 0.0
    %116 = vmatpush1.msra.mxu0 0.0
    %117 = vmatprep.subr.mxu0 0.0
    %118 = vmatpush1.msra.mxu0 0.0
    %119 = vmatprep.subr.mxu0 0.0
    %120 = vmatpush1.msra.mxu0 0.0
    %121 = vmatprep.subr.mxu0 0.0
    %122 = vmatpush1.msra.mxu0 0.0
    %123 = vmatprep.subr.mxu0 0.0
    %124 = vmatpush1.msra.mxu0 0.0
    %125 = vmatprep.subr.mxu0 0.0
    %126 = vmatpush1.msra.mxu0 0.0
    %127 = vmatprep.subr.mxu0 0.0
    %128 = vmatpush1.msra.mxu0 0.0
    %129 = vmatprep.subr.mxu0 0.0
    %130 = vmatpush1.msra.mxu0 0.0
    %131 = vmatprep.subr.mxu0 0.0
    %132 = vmatpush1.msra.mxu0 0.0
    %133 = vmatprep.subr.mxu0 0.0
    %134 = vmatpush1.msra.mxu0 0.0
    %135 = vmatprep.subr.mxu0 0.0
    %136 = vmatpush1.msra.mxu0 0.0
    %137 = vmatprep.mubr.f32.mxu0 0.0
    %138 = vmatmul.mubr.f32.gmra.mrb[0].mxu0 %v67
    %v139 = vpop.f32.mrb[0].mxu0
    %v140 = vadd.f32 0.0, %v139
    %v141 = vpop.f32.mrb[0].mxu0
    %142 = vdwg.mxu0
    %v144 = vsel %vm65, %v64, 0
    %v147 = vsel %vm69, %v48, 0
    %149 = vmatprep.subr.mxu0 0.0
    %150 = vmatpush1.msra.mxu0 %v44
    %151 = vmatprep.subr.mxu0 0.0
    %152 = vmatpush1.msra.mxu0 %v45
    %153 = vmatprep.subr.mxu0 0.0
    %154 = vmatpush1.msra.mxu0 %v46
    %155 = vmatprep.subr.mxu0 0.0
    %156 = vmatpush1.msra.mxu0 %v47
    %157 = vmatprep.subr.mxu0 0.0
    %158 = vmatpush1.msra.mxu0 %v147
    %159 = vmatprep.subr.mxu0 0.0
    %160 = vmatpush1.msra.mxu0 0.0
    %161 = vmatprep.subr.mxu0 0.0
    %162 = vmatpush1.msra.mxu0 0.0
    %163 = vmatprep.subr.mxu0 0.0
    %164 = vmatpush1.msra.mxu0 0.0
    %165 = vmatprep.subr.mxu0 0.0
    %166 = vmatpush1.msra.mxu0 0.0
    %167 = vmatprep.subr.mxu0 0.0
    %168 = vmatpush1.msra.mxu0 0.0
    %169 = vmatprep.subr.mxu0 0.0
    %170 = vmatpush1.msra.mxu0 0.0
    %171 = vmatprep.subr.mxu0 0.0
    %172 = vmatpush1.msra.mxu0 0.0
    %173 = vmatprep.subr.mxu0 0.0
    %174 = vmatpush1.msra.mxu0 0.0
    %175 = vmatprep.subr.mxu0 0.0
    %176 = vmatpush1.msra.mxu0 0.0
    %177 = vmatprep.subr.mxu0 0.0
    %178 = vmatpush1.msra.mxu0 0.0
    %179 = vmatprep.subr.mxu0 0.0
    %180 = vmatpush1.msra.mxu0 0.0
    %181 = vmatprep.subr.mxu0 0.0
    %182 = vmatpush1.msra.mxu0 0.0
    %183 = vmatprep.subr.mxu0 0.0
    %184 = vmatpush1.msra.mxu0 0.0
    %185 = vmatprep.subr.mxu0 0.0
    %186 = vmatpush1.msra.mxu0 0.0
    %187 = vmatprep.subr.mxu0 0.0
    %188 = vmatpush1.msra.mxu0 0.0
    %189 = vmatprep.subr.mxu0 0.0
    %190 = vmatpush1.msra.mxu0 0.0
    %191 = vmatprep.subr.mxu0 0.0
    %192 = vmatpush1.msra.mxu0 0.0
    %193 = vmatprep.subr.mxu0 0.0
    %194 = vmatpush1.msra.mxu0 0.0
    %195 = vmatprep.subr.mxu0 0.0
    %196 = vmatpush1.msra.mxu0 0.0
    %197 = vmatprep.subr.mxu0 0.0
    %198 = vmatpush1.msra.mxu0 0.0
    %199 = vmatprep.subr.mxu0 0.0
    %200 = vmatpush1.msra.mxu0 0.0
    %201 = vmatprep.subr.mxu0 0.0
    %202 = vmatpush1.msra.mxu0 0.0
    %203 = vmatprep.subr.mxu0 0.0
    %204 = vmatpush1.msra.mxu0 0.0
    %205 = vmatprep.subr.mxu0 0.0
    %206 = vmatpush1.msra.mxu0 0.0
    %207 = vmatprep.subr.mxu0 0.0
    %208 = vmatpush1.msra.mxu0 0.0
    %209 = vmatprep.subr.mxu0 0.0
    %210 = vmatpush1.msra.mxu0 0.0
    %211 = vmatprep.subr.mxu0 0.0
    %212 = vmatpush1.msra.mxu0 0.0
    %213 = vmatprep.mubr.f32.mxu0 0.0
    %214 = vmatmul.mubr.f32.gmra.mrb[0].mxu0 %v144
    %v215 = vpop.f32.mrb[0].mxu0
    %v216 = vadd.f32 0.0, %v215
    %v217 = vpop.f32.mrb[0].mxu0
    %218 = vdwg.mxu0
    %v219 = vld [vmem:[%s8] sm:$0xff]
    %v220 = vld [vmem:[%s8 + $0x8] sm:$0xff]
    %v221 = vld [vmem:[%s8 + $0x10] sm:$0xff]
    %v222 = vld [vmem:[%s8 + $0x18] sm:$0xff]
    %v223 = vld [vmem:[%s8 + $0x20] sm:$0xff]
    %v224 = vld [vmem:[%s8 + $0x28] sm:$0xff]
    %v225 = vld [vmem:[%s8 + $0x30] sm:$0xff]
    %v226 = vld [vmem:[%s8 + $0x38] sm:$0xff]
    %v227 = vld [vmem:[%s8 + $0x40] sm:$0xff]
    %v228 = vld [vmem:[%s8 + $0x48] sm:$0xff]
    %v229 = vld [vmem:[%s8 + $0x50] sm:$0xff]
    %v230 = vld [vmem:[%s8 + $0x58] sm:$0xff]
    %v231 = vld [vmem:[%s8 + $0x60] sm:$0xff]
    %v232 = vld [vmem:[%s8 + $0x68] sm:$0xff]
    %v233 = vld [vmem:[%s8 + $0x70] sm:$0xff]
    %v234 = vld [vmem:[%s8 + $0x78] sm:$0xff]
    %v235 = vld [vmem:[%s9] sm:$0x1]
    %v236 = vld [vmem:[%s9 + $0x1] sm:$0x1]
    %v237 = vld [vmem:[%s9 + $0x2] sm:$0x1]
    %v238 = vld [vmem:[%s9 + $0x3] sm:$0x1]
    %v239 = vld [vmem:[%s5] sm:$0xff]
    %v240 = vld [vmem:[%s5 + $0x8] sm:$0xff]
    %242 = vset.pattern.permute.xlu0 0
    %243 = vperm.xlu0 %242, %v239
    %v244 = vpop.permute.xlu0 %243
    %247 = vset.pattern.permute.xlu0 0
    %248 = vperm.xlu0 %247, %v240
    %v249 = vpop.permute.xlu0 %248
    %v255 = vlaneseq
    %v256 = vshrl.u32 %v255, 7
    %v257 = vsub.s32 0, %v256
    %v258 = vrot.slane %v235, %v257
    %v259 = vlaneseq
    %v260 = vshrl.u32 %v259, 7
    %v261 = vsub.s32 0, %v260
    %v262 = vrot.slane %v236, %v261
    %v263 = vlaneseq
    %v264 = vshrl.u32 %v263, 7
    %v265 = vsub.s32 0, %v264
    %v266 = vrot.slane %v237, %v265
    %v267 = vlaneseq
    %v268 = vshrl.u32 %v267, 7
    %v269 = vsub.s32 0, %v268
    %v270 = vrot.slane %v238, %v269
    %v275 = vmul.f32 %v244, %v258
    %v276 = vmul.f32 %v249, %v258
    %v277 = vmul.f32 %v244, %v262
    %v278 = vmul.f32 %v249, %v262
    %v279 = vmul.f32 %v244, %v266
    %v280 = vmul.f32 %v249, %v266
    %v281 = vmul.f32 %v244, %v270
    %v282 = vmul.f32 %v249, %v270
    %vm283 = vcmask 261120
    %v285 = vsel %vm283, %v140, 0
    %287 = vmatprep.subr.mxu0 0.0
    %288 = vmatpush1.msra.mxu0 %v219
    %289 = vmatprep.subr.mxu0 0.0
    %290 = vmatpush1.msra.mxu0 %v220
    %291 = vmatprep.subr.mxu0 0.0
    %292 = vmatpush1.msra.mxu0 %v221
    %293 = vmatprep.subr.mxu0 0.0
    %294 = vmatpush1.msra.mxu0 %v222
    %295 = vmatprep.subr.mxu0 0.0
    %296 = vmatpush1.msra.mxu0 0.0
    %297 = vmatprep.subr.mxu0 0.0
    %298 = vmatpush1.msra.mxu0 0.0
    %299 = vmatprep.subr.mxu0 0.0
    %300 = vmatpush1.msra.mxu0 0.0
    %301 = vmatprep.subr.mxu0 0.0
    %302 = vmatpush1.msra.mxu0 0.0
    %303 = vmatprep.subr.mxu0 0.0
    %304 = vmatpush1.msra.mxu0 0.0
    %305 = vmatprep.subr.mxu0 0.0
    %306 = vmatpush1.msra.mxu0 0.0
    %307 = vmatprep.subr.mxu0 0.0
    %308 = vmatpush1.msra.mxu0 0.0
    %309 = vmatprep.subr.mxu0 0.0
    %310 = vmatpush1.msra.mxu0 0.0
    %311 = vmatprep.subr.mxu0 0.0
    %312 = vmatpush1.msra.mxu0 0.0
    %313 = vmatprep.subr.mxu0 0.0
    %314 = vmatpush1.msra.mxu0 0.0
    %315 = vmatprep.subr.mxu0 0.0
    %316 = vmatpush1.msra.mxu0 0.0
    %317 = vmatprep.subr.mxu0 0.0
    %318 = vmatpush1.msra.mxu0 0.0
    %319 = vmatprep.subr.mxu0 0.0
    %320 = vmatpush1.msra.mxu0 0.0
    %321 = vmatprep.subr.mxu0 0.0
    %322 = vmatpush1.msra.mxu0 0.0
    %323 = vmatprep.subr.mxu0 0.0
    %324 = vmatpush1.msra.mxu0 0.0
    %325 = vmatprep.subr.mxu0 0.0
    %326 = vmatpush1.msra.mxu0 0.0
    %327 = vmatprep.subr.mxu0 0.0
    %328 = vmatpush1.msra.mxu0 0.0
    %329 = vmatprep.subr.mxu0 0.0
    %330 = vmatpush1.msra.mxu0 0.0
    %331 = vmatprep.subr.mxu0 0.0
    %332 = vmatpush1.msra.mxu0 0.0
    %333 = vmatprep.subr.mxu0 0.0
    %334 = vmatpush1.msra.mxu0 0.0
    %335 = vmatprep.subr.mxu0 0.0
    %336 = vmatpush1.msra.mxu0 0.0
    %337 = vmatprep.subr.mxu0 0.0
    %338 = vmatpush1.msra.mxu0 0.0
    %339 = vmatprep.subr.mxu0 0.0
    %340 = vmatpush1.msra.mxu0 0.0
    %341 = vmatprep.subr.mxu0 0.0
    %342 = vmatpush1.msra.mxu0 0.0
    %343 = vmatprep.subr.mxu0 0.0
    %344 = vmatpush1.msra.mxu0 0.0
    %345 = vmatprep.subr.mxu0 0.0
    %346 = vmatpush1.msra.mxu0 0.0
    %347 = vmatprep.subr.mxu0 0.0
    %348 = vmatpush1.msra.mxu0 0.0
    %349 = vmatprep.subr.mxu0 0.0
    %350 = vmatpush1.msra.mxu0 0.0
    %351 = vmatprep.mubr.f32.mxu0 0.0
    %352 = vmatmul.mubr.f32.gmra.mrb[0].mxu0 %v285
    %v353 = vpop.f32.mrb[0].mxu0
    %v354 = vadd.f32 %v275, %v353
    %v355 = vpop.f32.mrb[0].mxu0
    %356 = vdwg.mxu0
    %v358 = vsel %vm283, %v216, 0
    %360 = vmatprep.subr.mxu0 0.0
    %361 = vmatpush1.msra.mxu0 %v219
    %362 = vmatprep.subr.mxu0 0.0
    %363 = vmatpush1.msra.mxu0 %v220
    %364 = vmatprep.subr.mxu0 0.0
    %365 = vmatpush1.msra.mxu0 %v221
    %366 = vmatprep.subr.mxu0 0.0
    %367 = vmatpush1.msra.mxu0 %v222
    %368 = vmatprep.subr.mxu0 0.0
    %369 = vmatpush1.msra.mxu0 0.0
    %370 = vmatprep.subr.mxu0 0.0
    %371 = vmatpush1.msra.mxu0 0.0
    %372 = vmatprep.subr.mxu0 0.0
    %373 = vmatpush1.msra.mxu0 0.0
    %374 = vmatprep.subr.mxu0 0.0
    %375 = vmatpush1.msra.mxu0 0.0
    %376 = vmatprep.subr.mxu0 0.0
    %377 = vmatpush1.msra.mxu0 0.0
    %378 = vmatprep.subr.mxu0 0.0
    %379 = vmatpush1.msra.mxu0 0.0
    %380 = vmatprep.subr.mxu0 0.0
    %381 = vmatpush1.msra.mxu0 0.0
    %382 = vmatprep.subr.mxu0 0.0
    %383 = vmatpush1.msra.mxu0 0.0
    %384 = vmatprep.subr.mxu0 0.0
    %385 = vmatpush1.msra.mxu0 0.0
    %386 = vmatprep.subr.mxu0 0.0
    %387 = vmatpush1.msra.mxu0 0.0
    %388 = vmatprep.subr.mxu0 0.0
    %389 = vmatpush1.msra.mxu0 0.0
    %390 = vmatprep.subr.mxu0 0.0
    %391 = vmatpush1.msra.mxu0 0.0
    %392 = vmatprep.subr.mxu0 0.0
    %393 = vmatpush1.msra.mxu0 0.0
    %394 = vmatprep.subr.mxu0 0.0
    %395 = vmatpush1.msra.mxu0 0.0
    %396 = vmatprep.subr.mxu0 0.0
    %397 = vmatpush1.msra.mxu0 0.0
    %398 = vmatprep.subr.mxu0 0.0
    %399 = vmatpush1.msra.mxu0 0.0
    %400 = vmatprep.subr.mxu0 0.0
    %401 = vmatpush1.msra.mxu0 0.0
    %402 = vmatprep.subr.mxu0 0.0
    %403 = vmatpush1.msra.mxu0 0.0
    %404 = vmatprep.subr.mxu0 0.0
    %405 = vmatpush1.msra.mxu0 0.0
    %406 = vmatprep.subr.mxu0 0.0
    %407 = vmatpush1.msra.mxu0 0.0
    %408 = vmatprep.subr.mxu0 0.0
    %409 = vmatpush1.msra.mxu0 0.0
    %410 = vmatprep.subr.mxu0 0.0
    %411 = vmatpush1.msra.mxu0 0.0
    %412 = vmatprep.subr.mxu0 0.0
    %413 = vmatpush1.msra.mxu0 0.0
    %414 = vmatprep.subr.mxu0 0.0
    %415 = vmatpush1.msra.mxu0 0.0
    %416 = vmatprep.subr.mxu0 0.0
    %417 = vmatpush1.msra.mxu0 0.0
    %418 = vmatprep.subr.mxu0 0.0
    %419 = vmatpush1.msra.mxu0 0.0
    %420 = vmatprep.subr.mxu0 0.0
    %421 = vmatpush1.msra.mxu0 0.0
    %422 = vmatprep.subr.mxu0 0.0
    %423 = vmatpush1.msra.mxu0 0.0
    %424 = vmatprep.mubr.f32.mxu0 0.0
    %425 = vmatmul.mubr.f32.gmra.mrb[0].mxu0 %v358
    %v426 = vpop.f32.mrb[0].mxu0
    %v427 = vadd.f32 %v276, %v426
    %v428 = vpop.f32.mrb[0].mxu0
    %429 = vdwg.mxu0
    %430 = vmatprep.subr.mxu0 0.0
    %431 = vmatpush1.msra.mxu0 %v223
    %432 = vmatprep.subr.mxu0 0.0
    %433 = vmatpush1.msra.mxu0 %v224
    %434 = vmatprep.subr.mxu0 0.0
    %435 = vmatpush1.msra.mxu0 %v225
    %436 = vmatprep.subr.mxu0 0.0
    %437 = vmatpush1.msra.mxu0 %v226
    %438 = vmatprep.subr.mxu0 0.0
    %439 = vmatpush1.msra.mxu0 0.0
    %440 = vmatprep.subr.mxu0 0.0
    %441 = vmatpush1.msra.mxu0 0.0
    %442 = vmatprep.subr.mxu0 0.0
    %443 = vmatpush1.msra.mxu0 0.0
    %444 = vmatprep.subr.mxu0 0.0
    %445 = vmatpush1.msra.mxu0 0.0
    %446 = vmatprep.subr.mxu0 0.0
    %447 = vmatpush1.msra.mxu0 0.0
    %448 = vmatprep.subr.mxu0 0.0
    %449 = vmatpush1.msra.mxu0 0.0
    %450 = vmatprep.subr.mxu0 0.0
    %451 = vmatpush1.msra.mxu0 0.0
    %452 = vmatprep.subr.mxu0 0.0
    %453 = vmatpush1.msra.mxu0 0.0
    %454 = vmatprep.subr.mxu0 0.0
    %455 = vmatpush1.msra.mxu0 0.0
    %456 = vmatprep.subr.mxu0 0.0
    %457 = vmatpush1.msra.mxu0 0.0
    %458 = vmatprep.subr.mxu0 0.0
    %459 = vmatpush1.msra.mxu0 0.0
    %460 = vmatprep.subr.mxu0 0.0
    %461 = vmatpush1.msra.mxu0 0.0
    %462 = vmatprep.subr.mxu0 0.0
    %463 = vmatpush1.msra.mxu0 0.0
    %464 = vmatprep.subr.mxu0 0.0
    %465 = vmatpush1.msra.mxu0 0.0
    %466 = vmatprep.subr.mxu0 0.0
    %467 = vmatpush1.msra.mxu0 0.0
    %468 = vmatprep.subr.mxu0 0.0
    %469 = vmatpush1.msra.mxu0 0.0
    %470 = vmatprep.subr.mxu0 0.0
    %471 = vmatpush1.msra.mxu0 0.0
    %472 = vmatprep.subr.mxu0 0.0
    %473 = vmatpush1.msra.mxu0 0.0
    %474 = vmatprep.subr.mxu0 0.0
    %475 = vmatpush1.msra.mxu0 0.0
    %476 = vmatprep.subr.mxu0 0.0
    %477 = vmatpush1.msra.mxu0 0.0
    %478 = vmatprep.subr.mxu0 0.0
    %479 = vmatpush1.msra.mxu0 0.0
    %480 = vmatprep.subr.mxu0 0.0
    %481 = vmatpush1.msra.mxu0 0.0
    %482 = vmatprep.subr.mxu0 0.0
    %483 = vmatpush1.msra.mxu0 0.0
    %484 = vmatprep.subr.mxu0 0.0
    %485 = vmatpush1.msra.mxu0 0.0
    %486 = vmatprep.subr.mxu0 0.0
    %487 = vmatpush1.msra.mxu0 0.0
    %488 = vmatprep.subr.mxu0 0.0
    %489 = vmatpush1.msra.mxu0 0.0
    %490 = vmatprep.subr.mxu0 0.0
    %491 = vmatpush1.msra.mxu0 0.0
    %492 = vmatprep.subr.mxu0 0.0
    %493 = vmatpush1.msra.mxu0 0.0
    %494 = vmatprep.mubr.f32.mxu0 0.0
    %495 = vmatmul.mubr.f32.gmra.mrb[0].mxu0 %v285
    %v496 = vpop.f32.mrb[0].mxu0
    %v497 = vadd.f32 %v277, %v496
    %v498 = vpop.f32.mrb[0].mxu0
    %499 = vdwg.mxu0
    %500 = vmatprep.subr.mxu0 0.0
    %501 = vmatpush1.msra.mxu0 %v223
    %502 = vmatprep.subr.mxu0 0.0
    %503 = vmatpush1.msra.mxu0 %v224
    %504 = vmatprep.subr.mxu0 0.0
    %505 = vmatpush1.msra.mxu0 %v225
    %506 = vmatprep.subr.mxu0 0.0
    %507 = vmatpush1.msra.mxu0 %v226
    %508 = vmatprep.subr.mxu0 0.0
    %509 = vmatpush1.msra.mxu0 0.0
    %510 = vmatprep.subr.mxu0 0.0
    %511 = vmatpush1.msra.mxu0 0.0
    %512 = vmatprep.subr.mxu0 0.0
    %513 = vmatpush1.msra.mxu0 0.0
    %514 = vmatprep.subr.mxu0 0.0
    %515 = vmatpush1.msra.mxu0 0.0
    %516 = vmatprep.subr.mxu0 0.0
    %517 = vmatpush1.msra.mxu0 0.0
    %518 = vmatprep.subr.mxu0 0.0
    %519 = vmatpush1.msra.mxu0 0.0
    %520 = vmatprep.subr.mxu0 0.0
    %521 = vmatpush1.msra.mxu0 0.0
    %522 = vmatprep.subr.mxu0 0.0
    %523 = vmatpush1.msra.mxu0 0.0
    %524 = vmatprep.subr.mxu0 0.0
    %525 = vmatpush1.msra.mxu0 0.0
    %526 = vmatprep.subr.mxu0 0.0
    %527 = vmatpush1.msra.mxu0 0.0
    %528 = vmatprep.subr.mxu0 0.0
    %529 = vmatpush1.msra.mxu0 0.0
    %530 = vmatprep.subr.mxu0 0.0
    %531 = vmatpush1.msra.mxu0 0.0
    %532 = vmatprep.subr.mxu0 0.0
    %533 = vmatpush1.msra.mxu0 0.0
    %534 = vmatprep.subr.mxu0 0.0
    %535 = vmatpush1.msra.mxu0 0.0
    %536 = vmatprep.subr.mxu0 0.0
    %537 = vmatpush1.msra.mxu0 0.0
    %538 = vmatprep.subr.mxu0 0.0
    %539 = vmatpush1.msra.mxu0 0.0
    %540 = vmatprep.subr.mxu0 0.0
    %541 = vmatpush1.msra.mxu0 0.0
    %542 = vmatprep.subr.mxu0 0.0
    %543 = vmatpush1.msra.mxu0 0.0
    %544 = vmatprep.subr.mxu0 0.0
    %545 = vmatpush1.msra.mxu0 0.0
    %546 = vmatprep.subr.mxu0 0.0
    %547 = vmatpush1.msra.mxu0 0.0
    %548 = vmatprep.subr.mxu0 0.0
    %549 = vmatpush1.msra.mxu0 0.0
    %550 = vmatprep.subr.mxu0 0.0
    %551 = vmatpush1.msra.mxu0 0.0
    %552 = vmatprep.subr.mxu0 0.0
    %553 = vmatpush1.msra.mxu0 0.0
    %554 = vmatprep.subr.mxu0 0.0
    %555 = vmatpush1.msra.mxu0 0.0
    %556 = vmatprep.subr.mxu0 0.0
    %557 = vmatpush1.msra.mxu0 0.0
    %558 = vmatprep.subr.mxu0 0.0
    %559 = vmatpush1.msra.mxu0 0.0
    %560 = vmatprep.subr.mxu0 0.0
    %561 = vmatpush1.msra.mxu0 0.0
    %562 = vmatprep.subr.mxu0 0.0
    %563 = vmatpush1.msra.mxu0 0.0
    %564 = vmatprep.mubr.f32.mxu0 0.0
    %565 = vmatmul.mubr.f32.gmra.mrb[0].mxu0 %v358
    %v566 = vpop.f32.mrb[0].mxu0
    %v567 = vadd.f32 %v278, %v566
    %v568 = vpop.f32.mrb[0].mxu0
    %569 = vdwg.mxu0
    %570 = vmatprep.subr.mxu0 0.0
    %571 = vmatpush1.msra.mxu0 %v227
    %572 = vmatprep.subr.mxu0 0.0
    %573 = vmatpush1.msra.mxu0 %v228
    %574 = vmatprep.subr.mxu0 0.0
    %575 = vmatpush1.msra.mxu0 %v229
    %576 = vmatprep.subr.mxu0 0.0
    %577 = vmatpush1.msra.mxu0 %v230
    %578 = vmatprep.subr.mxu0 0.0
    %579 = vmatpush1.msra.mxu0 0.0
    %580 = vmatprep.subr.mxu0 0.0
    %581 = vmatpush1.msra.mxu0 0.0
    %582 = vmatprep.subr.mxu0 0.0
    %583 = vmatpush1.msra.mxu0 0.0
    %584 = vmatprep.subr.mxu0 0.0
    %585 = vmatpush1.msra.mxu0 0.0
    %586 = vmatprep.subr.mxu0 0.0
    %587 = vmatpush1.msra.mxu0 0.0
    %588 = vmatprep.subr.mxu0 0.0
    %589 = vmatpush1.msra.mxu0 0.0
    %590 = vmatprep.subr.mxu0 0.0
    %591 = vmatpush1.msra.mxu0 0.0
    %592 = vmatprep.subr.mxu0 0.0
    %593 = vmatpush1.msra.mxu0 0.0
    %594 = vmatprep.subr.mxu0 0.0
    %595 = vmatpush1.msra.mxu0 0.0
    %596 = vmatprep.subr.mxu0 0.0
    %597 = vmatpush1.msra.mxu0 0.0
    %598 = vmatprep.subr.mxu0 0.0
    %599 = vmatpush1.msra.mxu0 0.0
    %600 = vmatprep.subr.mxu0 0.0
    %601 = vmatpush1.msra.mxu0 0.0
    %602 = vmatprep.subr.mxu0 0.0
    %603 = vmatpush1.msra.mxu0 0.0
    %604 = vmatprep.subr.mxu0 0.0
    %605 = vmatpush1.msra.mxu0 0.0
    %606 = vmatprep.subr.mxu0 0.0
    %607 = vmatpush1.msra.mxu0 0.0
    %608 = vmatprep.subr.mxu0 0.0
    %609 = vmatpush1.msra.mxu0 0.0
    %610 = vmatprep.subr.mxu0 0.0
    %611 = vmatpush1.msra.mxu0 0.0
    %612 = vmatprep.subr.mxu0 0.0
    %613 = vmatpush1.msra.mxu0 0.0
    %614 = vmatprep.subr.mxu0 0.0
    %615 = vmatpush1.msra.mxu0 0.0
    %616 = vmatprep.subr.mxu0 0.0
    %617 = vmatpush1.msra.mxu0 0.0
    %618 = vmatprep.subr.mxu0 0.0
    %619 = vmatpush1.msra.mxu0 0.0
    %620 = vmatprep.subr.mxu0 0.0
    %621 = vmatpush1.msra.mxu0 0.0
    %622 = vmatprep.subr.mxu0 0.0
    %623 = vmatpush1.msra.mxu0 0.0
    %624 = vmatprep.subr.mxu0 0.0
    %625 = vmatpush1.msra.mxu0 0.0
    %626 = vmatprep.subr.mxu0 0.0
    %627 = vmatpush1.msra.mxu0 0.0
    %628 = vmatprep.subr.mxu0 0.0
    %629 = vmatpush1.msra.mxu0 0.0
    %630 = vmatprep.subr.mxu0 0.0
    %631 = vmatpush1.msra.mxu0 0.0
    %632 = vmatprep.subr.mxu0 0.0
    %633 = vmatpush1.msra.mxu0 0.0
    %634 = vmatprep.mubr.f32.mxu0 0.0
    %635 = vmatmul.mubr.f32.gmra.mrb[0].mxu0 %v285
    %v636 = vpop.f32.mrb[0].mxu0
    %v637 = vadd.f32 %v279, %v636
    %v638 = vpop.f32.mrb[0].mxu0
    %639 = vdwg.mxu0
    %640 = vmatprep.subr.mxu0 0.0
    %641 = vmatpush1.msra.mxu0 %v227
    %642 = vmatprep.subr.mxu0 0.0
    %643 = vmatpush1.msra.mxu0 %v228
    %644 = vmatprep.subr.mxu0 0.0
    %645 = vmatpush1.msra.mxu0 %v229
    %646 = vmatprep.subr.mxu0 0.0
    %647 = vmatpush1.msra.mxu0 %v230
    %648 = vmatprep.subr.mxu0 0.0
    %649 = vmatpush1.msra.mxu0 0.0
    %650 = vmatprep.subr.mxu0 0.0
    %651 = vmatpush1.msra.mxu0 0.0
    %652 = vmatprep.subr.mxu0 0.0
    %653 = vmatpush1.msra.mxu0 0.0
    %654 = vmatprep.subr.mxu0 0.0
    %655 = vmatpush1.msra.mxu0 0.0
    %656 = vmatprep.subr.mxu0 0.0
    %657 = vmatpush1.msra.mxu0 0.0
    %658 = vmatprep.subr.mxu0 0.0
    %659 = vmatpush1.msra.mxu0 0.0
    %660 = vmatprep.subr.mxu0 0.0
    %661 = vmatpush1.msra.mxu0 0.0
    %662 = vmatprep.subr.mxu0 0.0
    %663 = vmatpush1.msra.mxu0 0.0
    %664 = vmatprep.subr.mxu0 0.0
    %665 = vmatpush1.msra.mxu0 0.0
    %666 = vmatprep.subr.mxu0 0.0
    %667 = vmatpush1.msra.mxu0 0.0
    %668 = vmatprep.subr.mxu0 0.0
    %669 = vmatpush1.msra.mxu0 0.0
    %670 = vmatprep.subr.mxu0 0.0
    %671 = vmatpush1.msra.mxu0 0.0
    %672 = vmatprep.subr.mxu0 0.0
    %673 = vmatpush1.msra.mxu0 0.0
    %674 = vmatprep.subr.mxu0 0.0
    %675 = vmatpush1.msra.mxu0 0.0
    %676 = vmatprep.subr.mxu0 0.0
    %677 = vmatpush1.msra.mxu0 0.0
    %678 = vmatprep.subr.mxu0 0.0
    %679 = vmatpush1.msra.mxu0 0.0
    %680 = vmatprep.subr.mxu0 0.0
    %681 = vmatpush1.msra.mxu0 0.0
    %682 = vmatprep.subr.mxu0 0.0
    %683 = vmatpush1.msra.mxu0 0.0
    %684 = vmatprep.subr.mxu0 0.0
    %685 = vmatpush1.msra.mxu0 0.0
    %686 = vmatprep.subr.mxu0 0.0
    %687 = vmatpush1.msra.mxu0 0.0
    %688 = vmatprep.subr.mxu0 0.0
    %689 = vmatpush1.msra.mxu0 0.0
    %690 = vmatprep.subr.mxu0 0.0
    %691 = vmatpush1.msra.mxu0 0.0
    %692 = vmatprep.subr.mxu0 0.0
    %693 = vmatpush1.msra.mxu0 0.0
    %694 = vmatprep.subr.mxu0 0.0
    %695 = vmatpush1.msra.mxu0 0.0
    %696 = vmatprep.subr.mxu0 0.0
    %697 = vmatpush1.msra.mxu0 0.0
    %698 = vmatprep.subr.mxu0 0.0
    %699 = vmatpush1.msra.mxu0 0.0
    %700 = vmatprep.subr.mxu0 0.0
    %701 = vmatpush1.msra.mxu0 0.0
    %702 = vmatprep.subr.mxu0 0.0
    %703 = vmatpush1.msra.mxu0 0.0
    %704 = vmatprep.mubr.f32.mxu0 0.0
    %705 = vmatmul.mubr.f32.gmra.mrb[0].mxu0 %v358
    %v706 = vpop.f32.mrb[0].mxu0
    %v707 = vadd.f32 %v280, %v706
    %v708 = vpop.f32.mrb[0].mxu0
    %709 = vdwg.mxu0
    %710 = vmatprep.subr.mxu0 0.0
    %711 = vmatpush1.msra.mxu0 %v231
    %712 = vmatprep.subr.mxu0 0.0
    %713 = vmatpush1.msra.mxu0 %v232
    %714 = vmatprep.subr.mxu0 0.0
    %715 = vmatpush1.msra.mxu0 %v233
    %716 = vmatprep.subr.mxu0 0.0
    %717 = vmatpush1.msra.mxu0 %v234
    %718 = vmatprep.subr.mxu0 0.0
    %719 = vmatpush1.msra.mxu0 0.0
    %720 = vmatprep.subr.mxu0 0.0
    %721 = vmatpush1.msra.mxu0 0.0
    %722 = vmatprep.subr.mxu0 0.0
    %723 = vmatpush1.msra.mxu0 0.0
    %724 = vmatprep.subr.mxu0 0.0
    %725 = vmatpush1.msra.mxu0 0.0
    %726 = vmatprep.subr.mxu0 0.0
    %727 = vmatpush1.msra.mxu0 0.0
    %728 = vmatprep.subr.mxu0 0.0
    %729 = vmatpush1.msra.mxu0 0.0
    %730 = vmatprep.subr.mxu0 0.0
    %731 = vmatpush1.msra.mxu0 0.0
    %732 = vmatprep.subr.mxu0 0.0
    %733 = vmatpush1.msra.mxu0 0.0
    %734 = vmatprep.subr.mxu0 0.0
    %735 = vmatpush1.msra.mxu0 0.0
    %736 = vmatprep.subr.mxu0 0.0
    %737 = vmatpush1.msra.mxu0 0.0
    %738 = vmatprep.subr.mxu0 0.0
    %739 = vmatpush1.msra.mxu0 0.0
    %740 = vmatprep.subr.mxu0 0.0
    %741 = vmatpush1.msra.mxu0 0.0
    %742 = vmatprep.subr.mxu0 0.0
    %743 = vmatpush1.msra.mxu0 0.0
    %744 = vmatprep.subr.mxu0 0.0
    %745 = vmatpush1.msra.mxu0 0.0
    %746 = vmatprep.subr.mxu0 0.0
    %747 = vmatpush1.msra.mxu0 0.0
    %748 = vmatprep.subr.mxu0 0.0
    %749 = vmatpush1.msra.mxu0 0.0
    %750 = vmatprep.subr.mxu0 0.0
    %751 = vmatpush1.msra.mxu0 0.0
    %752 = vmatprep.subr.mxu0 0.0
    %753 = vmatpush1.msra.mxu0 0.0
    %754 = vmatprep.subr.mxu0 0.0
    %755 = vmatpush1.msra.mxu0 0.0
    %756 = vmatprep.subr.mxu0 0.0
    %757 = vmatpush1.msra.mxu0 0.0
    %758 = vmatprep.subr.mxu0 0.0
    %759 = vmatpush1.msra.mxu0 0.0
    %760 = vmatprep.subr.mxu0 0.0
    %761 = vmatpush1.msra.mxu0 0.0
    %762 = vmatprep.subr.mxu0 0.0
    %763 = vmatpush1.msra.mxu0 0.0
    %764 = vmatprep.subr.mxu0 0.0
    %765 = vmatpush1.msra.mxu0 0.0
    %766 = vmatprep.subr.mxu0 0.0
    %767 = vmatpush1.msra.mxu0 0.0
    %768 = vmatprep.subr.mxu0 0.0
    %769 = vmatpush1.msra.mxu0 0.0
    %770 = vmatprep.subr.mxu0 0.0
    %771 = vmatpush1.msra.mxu0 0.0
    %772 = vmatprep.subr.mxu0 0.0
    %773 = vmatpush1.msra.mxu0 0.0
    %774 = vmatprep.mubr.f32.mxu0 0.0
    %775 = vmatmul.mubr.f32.gmra.mrb[0].mxu0 %v285
    %v776 = vpop.f32.mrb[0].mxu0
    %v777 = vadd.f32 %v281, %v776
    %v778 = vpop.f32.mrb[0].mxu0
    %779 = vdwg.mxu0
    %780 = vmatprep.subr.mxu0 0.0
    %781 = vmatpush1.msra.mxu0 %v231
    %782 = vmatprep.subr.mxu0 0.0
    %783 = vmatpush1.msra.mxu0 %v232
    %784 = vmatprep.subr.mxu0 0.0
    %785 = vmatpush1.msra.mxu0 %v233
    %786 = vmatprep.subr.mxu0 0.0
    %787 = vmatpush1.msra.mxu0 %v234
    %788 = vmatprep.subr.mxu0 0.0
    %789 = vmatpush1.msra.mxu0 0.0
    %790 = vmatprep.subr.mxu0 0.0
    %791 = vmatpush1.msra.mxu0 0.0
    %792 = vmatprep.subr.mxu0 0.0
    %793 = vmatpush1.msra.mxu0 0.0
    %794 = vmatprep.subr.mxu0 0.0
    %795 = vmatpush1.msra.mxu0 0.0
    %796 = vmatprep.subr.mxu0 0.0
    %797 = vmatpush1.msra.mxu0 0.0
    %798 = vmatprep.subr.mxu0 0.0
    %799 = vmatpush1.msra.mxu0 0.0
    %800 = vmatprep.subr.mxu0 0.0
    %801 = vmatpush1.msra.mxu0 0.0
    %802 = vmatprep.subr.mxu0 0.0
    %803 = vmatpush1.msra.mxu0 0.0
    %804 = vmatprep.subr.mxu0 0.0
    %805 = vmatpush1.msra.mxu0 0.0
    %806 = vmatprep.subr.mxu0 0.0
    %807 = vmatpush1.msra.mxu0 0.0
    %808 = vmatprep.subr.mxu0 0.0
    %809 = vmatpush1.msra.mxu0 0.0
    %810 = vmatprep.subr.mxu0 0.0
    %811 = vmatpush1.msra.mxu0 0.0
    %812 = vmatprep.subr.mxu0 0.0
    %813 = vmatpush1.msra.mxu0 0.0
    %814 = vmatprep.subr.mxu0 0.0
    %815 = vmatpush1.msra.mxu0 0.0
    %816 = vmatprep.subr.mxu0 0.0
    %817 = vmatpush1.msra.mxu0 0.0
    %818 = vmatprep.subr.mxu0 0.0
    %819 = vmatpush1.msra.mxu0 0.0
    %820 = vmatprep.subr.mxu0 0.0
    %821 = vmatpush1.msra.mxu0 0.0
    %822 = vmatprep.subr.mxu0 0.0
    %823 = vmatpush1.msra.mxu0 0.0
    %824 = vmatprep.subr.mxu0 0.0
    %825 = vmatpush1.msra.mxu0 0.0
    %826 = vmatprep.subr.mxu0 0.0
    %827 = vmatpush1.msra.mxu0 0.0
    %828 = vmatprep.subr.mxu0 0.0
    %829 = vmatpush1.msra.mxu0 0.0
    %830 = vmatprep.subr.mxu0 0.0
    %831 = vmatpush1.msra.mxu0 0.0
    %832 = vmatprep.subr.mxu0 0.0
    %833 = vmatpush1.msra.mxu0 0.0
    %834 = vmatprep.subr.mxu0 0.0
    %835 = vmatpush1.msra.mxu0 0.0
    %836 = vmatprep.subr.mxu0 0.0
    %837 = vmatpush1.msra.mxu0 0.0
    %838 = vmatprep.subr.mxu0 0.0
    %839 = vmatpush1.msra.mxu0 0.0
    %840 = vmatprep.subr.mxu0 0.0
    %841 = vmatpush1.msra.mxu0 0.0
    %842 = vmatprep.subr.mxu0 0.0
    %843 = vmatpush1.msra.mxu0 0.0
    %844 = vmatprep.mubr.f32.mxu0 0.0
    %845 = vmatmul.mubr.f32.gmra.mrb[0].mxu0 %v358
    %v846 = vpop.f32.mrb[0].mxu0
    %v847 = vadd.f32 %v282, %v846
    %v848 = vpop.f32.mrb[0].mxu0
    %849 = vdwg.mxu0
    %v850 = vld [vmem:[%s1] sm:$0xff]
    %v851 = vld [vmem:[%s1 + $0x8] sm:$0xff]
    %v852 = vld [vmem:[%s1 + $0x10] sm:$0xff]
    %v853 = vld [vmem:[%s1 + $0x18] sm:$0xff]
    %v854 = vld [vmem:[%s1 + $0x20] sm:$0x1f]
    %v855 = vld [vmem:[%s1 + $0x28] sm:$0xff]
    %v856 = vld [vmem:[%s1 + $0x30] sm:$0xff]
    %v857 = vld [vmem:[%s1 + $0x38] sm:$0xff]
    %v858 = vld [vmem:[%s1 + $0x40] sm:$0xff]
    %v859 = vld [vmem:[%s1 + $0x48] sm:$0x1f]
    %v860 = vld [vmem:[%s1 + $0x50] sm:$0xff]
    %v861 = vld [vmem:[%s1 + $0x58] sm:$0xff]
    %v862 = vld [vmem:[%s1 + $0x60] sm:$0xff]
    %v863 = vld [vmem:[%s1 + $0x68] sm:$0xff]
    %v864 = vld [vmem:[%s1 + $0x70] sm:$0x1f]
    %v865 = vld [vmem:[%s1 + $0x78] sm:$0xff]
    %v866 = vld [vmem:[%s1 + $0x80] sm:$0xff]
    %v867 = vld [vmem:[%s1 + $0x88] sm:$0xff]
    %v868 = vld [vmem:[%s1 + $0x90] sm:$0xff]
    %v869 = vld [vmem:[%s1 + $0x98] sm:$0x1f]
    %v870 = vld [vmem:[%s1 + $0xa0] sm:$0xff]
    %v871 = vld [vmem:[%s1 + $0xa8] sm:$0xff]
    %v872 = vld [vmem:[%s1 + $0xb0] sm:$0xff]
    %v873 = vld [vmem:[%s1 + $0xb8] sm:$0xff]
    %v874 = vld [vmem:[%s1 + $0xc0] sm:$0x1f]
    %v875 = vld [vmem:[%s1 + $0xc8] sm:$0xff]
    %v876 = vld [vmem:[%s1 + $0xd0] sm:$0xff]
    %v877 = vld [vmem:[%s1 + $0xd8] sm:$0xff]
    %v878 = vld [vmem:[%s1 + $0xe0] sm:$0xff]
    %v879 = vld [vmem:[%s1 + $0xe8] sm:$0x1f]
    %v880 = vld [vmem:[%s1 + $0xf0] sm:$0xff]
    %v881 = vld [vmem:[%s1 + $0xf8] sm:$0xff]
    %v882 = vld [vmem:[%s1 + $0x100] sm:$0xff]
    %v883 = vld [vmem:[%s1 + $0x108] sm:$0xff]
    %v884 = vld [vmem:[%s1 + $0x110] sm:$0x1f]
    %v885 = vld [vmem:[%s1 + $0x118] sm:$0xff]
    %v886 = vld [vmem:[%s1 + $0x120] sm:$0xff]
    %v887 = vld [vmem:[%s1 + $0x128] sm:$0xff]
    %v888 = vld [vmem:[%s1 + $0x130] sm:$0xff]
    %v889 = vld [vmem:[%s1 + $0x138] sm:$0x1f]
    %v890 = vld [vmem:[%s2] sm:$0xff]
    %v891 = vld [vmem:[%s2 + $0x8] sm:$0xff]
    %v892 = vld [vmem:[%s2 + $0x10] sm:$0xff]
    %v893 = vld [vmem:[%s2 + $0x18] sm:$0xff]
    %v894 = vld [vmem:[%s2 + $0x20] sm:$0x1f]
    %v895 = vld [vmem:[%s2 + $0x28] sm:$0xff]
    %v896 = vld [vmem:[%s2 + $0x30] sm:$0xff]
    %v897 = vld [vmem:[%s2 + $0x38] sm:$0xff]
    %v898 = vld [vmem:[%s2 + $0x40] sm:$0xff]
    %v899 = vld [vmem:[%s2 + $0x48] sm:$0x1f]
    %v900 = vld [vmem:[%s2 + $0x50] sm:$0xff]
    %v901 = vld [vmem:[%s2 + $0x58] sm:$0xff]
    %v902 = vld [vmem:[%s2 + $0x60] sm:$0xff]
    %v903 = vld [vmem:[%s2 + $0x68] sm:$0xff]
    %v904 = vld [vmem:[%s2 + $0x70] sm:$0x1f]
    %v905 = vld [vmem:[%s2 + $0x78] sm:$0xff]
    %v906 = vld [vmem:[%s2 + $0x80] sm:$0xff]
    %v907 = vld [vmem:[%s2 + $0x88] sm:$0xff]
    %v908 = vld [vmem:[%s2 + $0x90] sm:$0xff]
    %v909 = vld [vmem:[%s2 + $0x98] sm:$0x1f]
    %v910 = vld [vmem:[%s2 + $0xa0] sm:$0xff]
    %v911 = vld [vmem:[%s2 + $0xa8] sm:$0xff]
    %v912 = vld [vmem:[%s2 + $0xb0] sm:$0xff]
    %v913 = vld [vmem:[%s2 + $0xb8] sm:$0xff]
    %v914 = vld [vmem:[%s2 + $0xc0] sm:$0x1f]
    %v915 = vld [vmem:[%s2 + $0xc8] sm:$0xff]
    %v916 = vld [vmem:[%s2 + $0xd0] sm:$0xff]
    %v917 = vld [vmem:[%s2 + $0xd8] sm:$0xff]
    %v918 = vld [vmem:[%s2 + $0xe0] sm:$0xff]
    %v919 = vld [vmem:[%s2 + $0xe8] sm:$0x1f]
    %v920 = vld [vmem:[%s2 + $0xf0] sm:$0xff]
    %v921 = vld [vmem:[%s2 + $0xf8] sm:$0xff]
    %v922 = vld [vmem:[%s2 + $0x100] sm:$0xff]
    %v923 = vld [vmem:[%s2 + $0x108] sm:$0xff]
    %v924 = vld [vmem:[%s2 + $0x110] sm:$0x1f]
    %v925 = vld [vmem:[%s2 + $0x118] sm:$0xff]
    %v926 = vld [vmem:[%s2 + $0x120] sm:$0xff]
    %v927 = vld [vmem:[%s2 + $0x128] sm:$0xff]
    %v928 = vld [vmem:[%s2 + $0x130] sm:$0xff]
    %v929 = vld [vmem:[%s2 + $0x138] sm:$0x1f]
    %v930 = vld [vmem:[%s6] sm:$0xff]
    %v931 = vld [vmem:[%s6 + $0x8] sm:$0xff]
    %vm932 = vcmask 64512
    %v934 = vsel %vm932, %v354, 0
    %v937 = vsel %vm932, %v850, 0
    %v940 = vsel %vm932, %v851, 0
    %v943 = vsel %vm932, %v852, 0
    %v946 = vsel %vm932, %v853, 0
    %v949 = vsel %vm932, %v854, 0
    %951 = vmatprep.subr.mxu0 0.0
    %952 = vmatpush1.xpose.msra.mxu0 %v937
    %953 = vmatprep.subr.mxu0 0.0
    %954 = vmatpush1.xpose.msra.mxu0 %v940
    %955 = vmatprep.subr.mxu0 0.0
    %956 = vmatpush1.xpose.msra.mxu0 %v943
    %957 = vmatprep.subr.mxu0 0.0
    %958 = vmatpush1.xpose.msra.mxu0 %v946
    %959 = vmatprep.subr.mxu0 0.0
    %960 = vmatpush1.xpose.msra.mxu0 %v949
    %961 = vmatprep.subr.mxu0 0.0
    %962 = vmatpush1.xpose.msra.mxu0 0.0
    %963 = vmatprep.subr.mxu0 0.0
    %964 = vmatpush1.xpose.msra.mxu0 0.0
    %965 = vmatprep.subr.mxu0 0.0
    %966 = vmatpush1.xpose.msra.mxu0 0.0
    %967 = vmatprep.subr.mxu0 0.0
    %968 = vmatpush1.xpose.msra.mxu0 0.0
    %969 = vmatprep.subr.mxu0 0.0
    %970 = vmatpush1.xpose.msra.mxu0 0.0
    %971 = vmatprep.subr.mxu0 0.0
    %972 = vmatpush1.xpose.msra.mxu0 0.0
    %973 = vmatprep.subr.mxu0 0.0
    %974 = vmatpush1.xpose.msra.mxu0 0.0
    %975 = vmatprep.subr.mxu0 0.0
    %976 = vmatpush1.xpose.msra.mxu0 0.0
    %977 = vmatprep.subr.mxu0 0.0
    %978 = vmatpush1.xpose.msra.mxu0 0.0
    %979 = vmatprep.subr.mxu0 0.0
    %980 = vmatpush1.xpose.msra.mxu0 0.0
    %981 = vmatprep.subr.mxu0 0.0
    %982 = vmatpush1.xpose.msra.mxu0 0.0
    %983 = vmatprep.subr.mxu0 0.0
    %984 = vmatpush1.xpose.msra.mxu0 0.0
    %985 = vmatprep.subr.mxu0 0.0
    %986 = vmatpush1.xpose.msra.mxu0 0.0
    %987 = vmatprep.subr.mxu0 0.0
    %988 = vmatpush1.xpose.msra.mxu0 0.0
    %989 = vmatprep.subr.mxu0 0.0
    %990 = vmatpush1.xpose.msra.mxu0 0.0
    %991 = vmatprep.subr.mxu0 0.0
    %992 = vmatpush1.xpose.msra.mxu0 0.0
    %993 = vmatprep.subr.mxu0 0.0
    %994 = vmatpush1.xpose.msra.mxu0 0.0
    %995 = vmatprep.subr.mxu0 0.0
    %996 = vmatpush1.xpose.msra.mxu0 0.0
    %997 = vmatprep.subr.mxu0 0.0
    %998 = vmatpush1.xpose.msra.mxu0 0.0
    %999 = vmatprep.subr.mxu0 0.0
    %1000 = vmatpush1.xpose.msra.mxu0 0.0
    %1001 = vmatprep.subr.mxu0 0.0
    %1002 = vmatpush1.xpose.msra.mxu0 0.0
    %1003 = vmatprep.subr.mxu0 0.0
    %1004 = vmatpush1.xpose.msra.mxu0 0.0
    %1005 = vmatprep.subr.mxu0 0.0
    %1006 = vmatpush1.xpose.msra.mxu0 0.0
    %1007 = vmatprep.subr.mxu0 0.0
    %1008 = vmatpush1.xpose.msra.mxu0 0.0
    %1009 = vmatprep.subr.mxu0 0.0
    %1010 = vmatpush1.xpose.msra.mxu0 0.0
    %1011 = vmatprep.subr.mxu0 0.0
    %1012 = vmatpush1.xpose.msra.mxu0 0.0
    %1013 = vmatprep.subr.mxu0 0.0
    %1014 = vmatpush1.xpose.msra.mxu0 0.0
    %1015 = vmatprep.mubr.f32.mxu0 0.0
    %1016 = vmatmul.mubr.f32.gmra.mrb[0].mxu0 %v934
    %v1017 = vpop.f32.mrb[0].mxu0
    %v1018 = vadd.f32 0.0, %v1017
    %v1019 = vpop.f32.mrb[0].mxu0
    %1020 = vdwg.mxu0
    %v1022 = vsel %vm932, %v427, 0
    %v1025 = vsel %vm932, %v855, 0
    %v1028 = vsel %vm932, %v856, 0
    %v1031 = vsel %vm932, %v857, 0
    %v1034 = vsel %vm932, %v858, 0
    %v1037 = vsel %vm932, %v859, 0
    %1039 = vmatprep.subr.mxu0 0.0
    %1040 = vmatpush1.xpose.msra.mxu0 %v1025
    %1041 = vmatprep.subr.mxu0 0.0
    %1042 = vmatpush1.xpose.msra.mxu0 %v1028
    %1043 = vmatprep.subr.mxu0 0.0
    %1044 = vmatpush1.xpose.msra.mxu0 %v1031
    %1045 = vmatprep.subr.mxu0 0.0
    %1046 = vmatpush1.xpose.msra.mxu0 %v1034
    %1047 = vmatprep.subr.mxu0 0.0
    %1048 = vmatpush1.xpose.msra.mxu0 %v1037
    %1049 = vmatprep.subr.mxu0 0.0
    %1050 = vmatpush1.xpose.msra.mxu0 0.0
    %1051 = vmatprep.subr.mxu0 0.0
    %1052 = vmatpush1.xpose.msra.mxu0 0.0
    %1053 = vmatprep.subr.mxu0 0.0
    %1054 = vmatpush1.xpose.msra.mxu0 0.0
    %1055 = vmatprep.subr.mxu0 0.0
    %1056 = vmatpush1.xpose.msra.mxu0 0.0
    %1057 = vmatprep.subr.mxu0 0.0
    %1058 = vmatpush1.xpose.msra.mxu0 0.0
    %1059 = vmatprep.subr.mxu0 0.0
    %1060 = vmatpush1.xpose.msra.mxu0 0.0
    %1061 = vmatprep.subr.mxu0 0.0
    %1062 = vmatpush1.xpose.msra.mxu0 0.0
    %1063 = vmatprep.subr.mxu0 0.0
    %1064 = vmatpush1.xpose.msra.mxu0 0.0
    %1065 = vmatprep.subr.mxu0 0.0
    %1066 = vmatpush1.xpose.msra.mxu0 0.0
    %1067 = vmatprep.subr.mxu0 0.0
    %1068 = vmatpush1.xpose.msra.mxu0 0.0
    %1069 = vmatprep.subr.mxu0 0.0
    %1070 = vmatpush1.xpose.msra.mxu0 0.0
    %1071 = vmatprep.subr.mxu0 0.0
    %1072 = vmatpush1.xpose.msra.mxu0 0.0
    %1073 = vmatprep.subr.mxu0 0.0
    %1074 = vmatpush1.xpose.msra.mxu0 0.0
    %1075 = vmatprep.subr.mxu0 0.0
    %1076 = vmatpush1.xpose.msra.mxu0 0.0
    %1077 = vmatprep.subr.mxu0 0.0
    %1078 = vmatpush1.xpose.msra.mxu0 0.0
    %1079 = vmatprep.subr.mxu0 0.0
    %1080 = vmatpush1.xpose.msra.mxu0 0.0
    %1081 = vmatprep.subr.mxu0 0.0
    %1082 = vmatpush1.xpose.msra.mxu0 0.0
    %1083 = vmatprep.subr.mxu0 0.0
    %1084 = vmatpush1.xpose.msra.mxu0 0.0
    %1085 = vmatprep.subr.mxu0 0.0
    %1086 = vmatpush1.xpose.msra.mxu0 0.0
    %1087 = vmatprep.subr.mxu0 0.0
    %1088 = vmatpush1.xpose.msra.mxu0 0.0
    %1089 = vmatprep.subr.mxu0 0.0
    %1090 = vmatpush1.xpose.msra.mxu0 0.0
    %1091 = vmatprep.subr.mxu0 0.0
    %1092 = vmatpush1.xpose.msra.mxu0 0.0
    %1093 = vmatprep.subr.mxu0 0.0
    %1094 = vmatpush1.xpose.msra.mxu0 0.0
    %1095 = vmatprep.subr.mxu0 0.0
    %1096 = vmatpush1.xpose.msra.mxu0 0.0
    %1097 = vmatprep.subr.mxu0 0.0
    %1098 = vmatpush1.xpose.msra.mxu0 0.0
    %1099 = vmatprep.subr.mxu0 0.0
    %1100 = vmatpush1.xpose.msra.mxu0 0.0
    %1101 = vmatprep.subr.mxu0 0.0
    %1102 = vmatpush1.xpose.msra.mxu0 0.0
    %1103 = vmatprep.mubr.f32.mxu0 0.0
    %1104 = vmatmul.mubr.f32.gmra.mrb[0].mxu0 %v1022
    %v1105 = vpop.f32.mrb[0].mxu0
    %v1106 = vadd.f32 0.0, %v1105
    %v1107 = vpop.f32.mrb[0].mxu0
    %1108 = vdwg.mxu0
    %v1110 = vsel %vm932, %v497, 0
    %v1113 = vsel %vm932, %v860, 0
    %v1116 = vsel %vm932, %v861, 0
    %v1119 = vsel %vm932, %v862, 0
    %v1122 = vsel %vm932, %v863, 0
    %v1125 = vsel %vm932, %v864, 0
    %1127 = vmatprep.subr.mxu0 0.0
    %1128 = vmatpush1.xpose.msra.mxu0 %v1113
    %1129 = vmatprep.subr.mxu0 0.0
    %1130 = vmatpush1.xpose.msra.mxu0 %v1116
    %1131 = vmatprep.subr.mxu0 0.0
    %1132 = vmatpush1.xpose.msra.mxu0 %v1119
    %1133 = vmatprep.subr.mxu0 0.0
    %1134 = vmatpush1.xpose.msra.mxu0 %v1122
    %1135 = vmatprep.subr.mxu0 0.0
    %1136 = vmatpush1.xpose.msra.mxu0 %v1125
    %1137 = vmatprep.subr.mxu0 0.0
    %1138 = vmatpush1.xpose.msra.mxu0 0.0
    %1139 = vmatprep.subr.mxu0 0.0
    %1140 = vmatpush1.xpose.msra.mxu0 0.0
    %1141 = vmatprep.subr.mxu0 0.0
    %1142 = vmatpush1.xpose.msra.mxu0 0.0
    %1143 = vmatprep.subr.mxu0 0.0
    %1144 = vmatpush1.xpose.msra.mxu0 0.0
    %1145 = vmatprep.subr.mxu0 0.0
    %1146 = vmatpush1.xpose.msra.mxu0 0.0
    %1147 = vmatprep.subr.mxu0 0.0
    %1148 = vmatpush1.xpose.msra.mxu0 0.0
    %1149 = vmatprep.subr.mxu0 0.0
    %1150 = vmatpush1.xpose.msra.mxu0 0.0
    %1151 = vmatprep.subr.mxu0 0.0
    %1152 = vmatpush1.xpose.msra.mxu0 0.0
    %1153 = vmatprep.subr.mxu0 0.0
    %1154 = vmatpush1.xpose.msra.mxu0 0.0
    %1155 = vmatprep.subr.mxu0 0.0
    %1156 = vmatpush1.xpose.msra.mxu0 0.0
    %1157 = vmatprep.subr.mxu0 0.0
    %1158 = vmatpush1.xpose.msra.mxu0 0.0
    %1159 = vmatprep.subr.mxu0 0.0
    %1160 = vmatpush1.xpose.msra.mxu0 0.0
    %1161 = vmatprep.subr.mxu0 0.0
    %1162 = vmatpush1.xpose.msra.mxu0 0.0
    %1163 = vmatprep.subr.mxu0 0.0
    %1164 = vmatpush1.xpose.msra.mxu0 0.0
    %1165 = vmatprep.subr.mxu0 0.0
    %1166 = vmatpush1.xpose.msra.mxu0 0.0
    %1167 = vmatprep.subr.mxu0 0.0
    %1168 = vmatpush1.xpose.msra.mxu0 0.0
    %1169 = vmatprep.subr.mxu0 0.0
    %1170 = vmatpush1.xpose.msra.mxu0 0.0
    %1171 = vmatprep.subr.mxu0 0.0
    %1172 = vmatpush1.xpose.msra.mxu0 0.0
    %1173 = vmatprep.subr.mxu0 0.0
    %1174 = vmatpush1.xpose.msra.mxu0 0.0
    %1175 = vmatprep.subr.mxu0 0.0
    %1176 = vmatpush1.xpose.msra.mxu0 0.0
    %1177 = vmatprep.subr.mxu0 0.0
    %1178 = vmatpush1.xpose.msra.mxu0 0.0
    %1179 = vmatprep.subr.mxu0 0.0
    %1180 = vmatpush1.xpose.msra.mxu0 0.0
    %1181 = vmatprep.subr.mxu0 0.0
    %1182 = vmatpush1.xpose.msra.mxu0 0.0
    %1183 = vmatprep.subr.mxu0 0.0
    %1184 = vmatpush1.xpose.msra.mxu0 0.0
    %1185 = vmatprep.subr.mxu0 0.0
    %1186 = vmatpush1.xpose.msra.mxu0 0.0
    %1187 = vmatprep.subr.mxu0 0.0
    %1188 = vmatpush1.xpose.msra.mxu0 0.0
    %1189 = vmatprep.subr.mxu0 0.0
    %1190 = vmatpush1.xpose.msra.mxu0 0.0
    %1191 = vmatprep.mubr.f32.mxu0 0.0
    %1192 = vmatmul.mubr.f32.gmra.mrb[0].mxu0 %v1110
    %v1193 = vpop.f32.mrb[0].mxu0
    %v1194 = vadd.f32 0.0, %v1193
    %v1195 = vpop.f32.mrb[0].mxu0
    %1196 = vdwg.mxu0
    %v1198 = vsel %vm932, %v567, 0
    %v1201 = vsel %vm932, %v865, 0
    %v1204 = vsel %vm932, %v866, 0
    %v1207 = vsel %vm932, %v867, 0
    %v1210 = vsel %vm932, %v868, 0
    %v1213 = vsel %vm932, %v869, 0
    %1215 = vmatprep.subr.mxu0 0.0
    %1216 = vmatpush1.xpose.msra.mxu0 %v1201
    %1217 = vmatprep.subr.mxu0 0.0
    %1218 = vmatpush1.xpose.msra.mxu0 %v1204
    %1219 = vmatprep.subr.mxu0 0.0
    %1220 = vmatpush1.xpose.msra.mxu0 %v1207
    %1221 = vmatprep.subr.mxu0 0.0
    %1222 = vmatpush1.xpose.msra.mxu0 %v1210
    %1223 = vmatprep.subr.mxu0 0.0
    %1224 = vmatpush1.xpose.msra.mxu0 %v1213
    %1225 = vmatprep.subr.mxu0 0.0
    %1226 = vmatpush1.xpose.msra.mxu0 0.0
    %1227 = vmatprep.subr.mxu0 0.0
    %1228 = vmatpush1.xpose.msra.mxu0 0.0
    %1229 = vmatprep.subr.mxu0 0.0
    %1230 = vmatpush1.xpose.msra.mxu0 0.0
    %1231 = vmatprep.subr.mxu0 0.0
    %1232 = vmatpush1.xpose.msra.mxu0 0.0
    %1233 = vmatprep.subr.mxu0 0.0
    %1234 = vmatpush1.xpose.msra.mxu0 0.0
    %1235 = vmatprep.subr.mxu0 0.0
    %1236 = vmatpush1.xpose.msra.mxu0 0.0
    %1237 = vmatprep.subr.mxu0 0.0
    %1238 = vmatpush1.xpose.msra.mxu0 0.0
    %1239 = vmatprep.subr.mxu0 0.0
    %1240 = vmatpush1.xpose.msra.mxu0 0.0
    %1241 = vmatprep.subr.mxu0 0.0
    %1242 = vmatpush1.xpose.msra.mxu0 0.0
    %1243 = vmatprep.subr.mxu0 0.0
    %1244 = vmatpush1.xpose.msra.mxu0 0.0
    %1245 = vmatprep.subr.mxu0 0.0
    %1246 = vmatpush1.xpose.msra.mxu0 0.0
    %1247 = vmatprep.subr.mxu0 0.0
    %1248 = vmatpush1.xpose.msra.mxu0 0.0
    %1249 = vmatprep.subr.mxu0 0.0
    %1250 = vmatpush1.xpose.msra.mxu0 0.0
    %1251 = vmatprep.subr.mxu0 0.0
    %1252 = vmatpush1.xpose.msra.mxu0 0.0
    %1253 = vmatprep.subr.mxu0 0.0
    %1254 = vmatpush1.xpose.msra.mxu0 0.0
    %1255 = vmatprep.subr.mxu0 0.0
    %1256 = vmatpush1.xpose.msra.mxu0 0.0
    %1257 = vmatprep.subr.mxu0 0.0
    %1258 = vmatpush1.xpose.msra.mxu0 0.0
    %1259 = vmatprep.subr.mxu0 0.0
    %1260 = vmatpush1.xpose.msra.mxu0 0.0
    %1261 = vmatprep.subr.mxu0 0.0
    %1262 = vmatpush1.xpose.msra.mxu0 0.0
    %1263 = vmatprep.subr.mxu0 0.0
    %1264 = vmatpush1.xpose.msra.mxu0 0.0
    %1265 = vmatprep.subr.mxu0 0.0
    %1266 = vmatpush1.xpose.msra.mxu0 0.0
    %1267 = vmatprep.subr.mxu0 0.0
    %1268 = vmatpush1.xpose.msra.mxu0 0.0
    %1269 = vmatprep.subr.mxu0 0.0
    %1270 = vmatpush1.xpose.msra.mxu0 0.0
    %1271 = vmatprep.subr.mxu0 0.0
    %1272 = vmatpush1.xpose.msra.mxu0 0.0
    %1273 = vmatprep.subr.mxu0 0.0
    %1274 = vmatpush1.xpose.msra.mxu0 0.0
    %1275 = vmatprep.subr.mxu0 0.0
    %1276 = vmatpush1.xpose.msra.mxu0 0.0
    %1277 = vmatprep.subr.mxu0 0.0
    %1278 = vmatpush1.xpose.msra.mxu0 0.0
    %1279 = vmatprep.mubr.f32.mxu0 0.0
    %1280 = vmatmul.mubr.f32.gmra.mrb[0].mxu0 %v1198
    %v1281 = vpop.f32.mrb[0].mxu0
    %v1282 = vadd.f32 0.0, %v1281
    %v1283 = vpop.f32.mrb[0].mxu0
    %1284 = vdwg.mxu0
    %v1286 = vsel %vm932, %v637, 0
    %v1289 = vsel %vm932, %v870, 0
    %v1292 = vsel %vm932, %v871, 0
    %v1295 = vsel %vm932, %v872, 0
    %v1298 = vsel %vm932, %v873, 0
    %v1301 = vsel %vm932, %v874, 0
    %1303 = vmatprep.subr.mxu0 0.0
    %1304 = vmatpush1.xpose.msra.mxu0 %v1289
    %1305 = vmatprep.subr.mxu0 0.0
    %1306 = vmatpush1.xpose.msra.mxu0 %v1292
    %1307 = vmatprep.subr.mxu0 0.0
    %1308 = vmatpush1.xpose.msra.mxu0 %v1295
    %1309 = vmatprep.subr.mxu0 0.0
    %1310 = vmatpush1.xpose.msra.mxu0 %v1298
    %1311 = vmatprep.subr.mxu0 0.0
    %1312 = vmatpush1.xpose.msra.mxu0 %v1301
    %1313 = vmatprep.subr.mxu0 0.0
    %1314 = vmatpush1.xpose.msra.mxu0 0.0
    %1315 = vmatprep.subr.mxu0 0.0
    %1316 = vmatpush1.xpose.msra.mxu0 0.0
    %1317 = vmatprep.subr.mxu0 0.0
    %1318 = vmatpush1.xpose.msra.mxu0 0.0
    %1319 = vmatprep.subr.mxu0 0.0
    %1320 = vmatpush1.xpose.msra.mxu0 0.0
    %1321 = vmatprep.subr.mxu0 0.0
    %1322 = vmatpush1.xpose.msra.mxu0 0.0
    %1323 = vmatprep.subr.mxu0 0.0
    %1324 = vmatpush1.xpose.msra.mxu0 0.0
    %1325 = vmatprep.subr.mxu0 0.0
    %1326 = vmatpush1.xpose.msra.mxu0 0.0
    %1327 = vmatprep.subr.mxu0 0.0
    %1328 = vmatpush1.xpose.msra.mxu0 0.0
    %1329 = vmatprep.subr.mxu0 0.0
    %1330 = vmatpush1.xpose.msra.mxu0 0.0
    %1331 = vmatprep.subr.mxu0 0.0
    %1332 = vmatpush1.xpose.msra.mxu0 0.0
    %1333 = vmatprep.subr.mxu0 0.0
    %1334 = vmatpush1.xpose.msra.mxu0 0.0
    %1335 = vmatprep.subr.mxu0 0.0
    %1336 = vmatpush1.xpose.msra.mxu0 0.0
    %1337 = vmatprep.subr.mxu0 0.0
    %1338 = vmatpush1.xpose.msra.mxu0 0.0
    %1339 = vmatprep.subr.mxu0 0.0
    %1340 = vmatpush1.xpose.msra.mxu0 0.0
    %1341 = vmatprep.subr.mxu0 0.0
    %1342 = vmatpush1.xpose.msra.mxu0 0.0
    %1343 = vmatprep.subr.mxu0 0.0
    %1344 = vmatpush1.xpose.msra.mxu0 0.0
    %1345 = vmatprep.subr.mxu0 0.0
    %1346 = vmatpush1.xpose.msra.mxu0 0.0
    %1347 = vmatprep.subr.mxu0 0.0
    %1348 = vmatpush1.xpose.msra.mxu0 0.0
    %1349 = vmatprep.subr.mxu0 0.0
    %1350 = vmatpush1.xpose.msra.mxu0 0.0
    %1351 = vmatprep.subr.mxu0 0.0
    %1352 = vmatpush1.xpose.msra.mxu0 0.0
    %1353 = vmatprep.subr.mxu0 0.0
    %1354 = vmatpush1.xpose.msra.mxu0 0.0
    %1355 = vmatprep.subr.mxu0 0.0
    %1356 = vmatpush1.xpose.msra.mxu0 0.0
    %1357 = vmatprep.subr.mxu0 0.0
    %1358 = vmatpush1.xpose.msra.mxu0 0.0
    %1359 = vmatprep.subr.mxu0 0.0
    %1360 = vmatpush1.xpose.msra.mxu0 0.0
    %1361 = vmatprep.subr.mxu0 0.0
    %1362 = vmatpush1.xpose.msra.mxu0 0.0
    %1363 = vmatprep.subr.mxu0 0.0
    %1364 = vmatpush1.xpose.msra.mxu0 0.0
    %1365 = vmatprep.subr.mxu0 0.0
    %1366 = vmatpush1.xpose.msra.mxu0 0.0
    %1367 = vmatprep.mubr.f32.mxu0 0.0
    %1368 = vmatmul.mubr.f32.gmra.mrb[0].mxu0 %v1286
    %v1369 = vpop.f32.mrb[0].mxu0
    %v1370 = vadd.f32 0.0, %v1369
    %v1371 = vpop.f32.mrb[0].mxu0
    %1372 = vdwg.mxu0
    %v1374 = vsel %vm932, %v707, 0
    %v1377 = vsel %vm932, %v875, 0
    %v1380 = vsel %vm932, %v876, 0
    %v1383 = vsel %vm932, %v877, 0
    %v1386 = vsel %vm932, %v878, 0
    %v1389 = vsel %vm932, %v879, 0
    %1391 = vmatprep.subr.mxu0 0.0
    %1392 = vmatpush1.xpose.msra.mxu0 %v1377
    %1393 = vmatprep.subr.mxu0 0.0
    %1394 = vmatpush1.xpose.msra.mxu0 %v1380
    %1395 = vmatprep.subr.mxu0 0.0
    %1396 = vmatpush1.xpose.msra.mxu0 %v1383
    %1397 = vmatprep.subr.mxu0 0.0
    %1398 = vmatpush1.xpose.msra.mxu0 %v1386
    %1399 = vmatprep.subr.mxu0 0.0
    %1400 = vmatpush1.xpose.msra.mxu0 %v1389
    %1401 = vmatprep.subr.mxu0 0.0
    %1402 = vmatpush1.xpose.msra.mxu0 0.0
    %1403 = vmatprep.subr.mxu0 0.0
    %1404 = vmatpush1.xpose.msra.mxu0 0.0
    %1405 = vmatprep.subr.mxu0 0.0
    %1406 = vmatpush1.xpose.msra.mxu0 0.0
    %1407 = vmatprep.subr.mxu0 0.0
    %1408 = vmatpush1.xpose.msra.mxu0 0.0
    %1409 = vmatprep.subr.mxu0 0.0
    %1410 = vmatpush1.xpose.msra.mxu0 0.0
    %1411 = vmatprep.subr.mxu0 0.0
    %1412 = vmatpush1.xpose.msra.mxu0 0.0
    %1413 = vmatprep.subr.mxu0 0.0
    %1414 = vmatpush1.xpose.msra.mxu0 0.0
    %1415 = vmatprep.subr.mxu0 0.0
    %1416 = vmatpush1.xpose.msra.mxu0 0.0
    %1417 = vmatprep.subr.mxu0 0.0
    %1418 = vmatpush1.xpose.msra.mxu0 0.0
    %1419 = vmatprep.subr.mxu0 0.0
    %1420 = vmatpush1.xpose.msra.mxu0 0.0
    %1421 = vmatprep.subr.mxu0 0.0
    %1422 = vmatpush1.xpose.msra.mxu0 0.0
    %1423 = vmatprep.subr.mxu0 0.0
    %1424 = vmatpush1.xpose.msra.mxu0 0.0
    %1425 = vmatprep.subr.mxu0 0.0
    %1426 = vmatpush1.xpose.msra.mxu0 0.0
    %1427 = vmatprep.subr.mxu0 0.0
    %1428 = vmatpush1.xpose.msra.mxu0 0.0
    %1429 = vmatprep.subr.mxu0 0.0
    %1430 = vmatpush1.xpose.msra.mxu0 0.0
    %1431 = vmatprep.subr.mxu0 0.0
    %1432 = vmatpush1.xpose.msra.mxu0 0.0
    %1433 = vmatprep.subr.mxu0 0.0
    %1434 = vmatpush1.xpose.msra.mxu0 0.0
    %1435 = vmatprep.subr.mxu0 0.0
    %1436 = vmatpush1.xpose.msra.mxu0 0.0
    %1437 = vmatprep.subr.mxu0 0.0
    %1438 = vmatpush1.xpose.msra.mxu0 0.0
    %1439 = vmatprep.subr.mxu0 0.0
    %1440 = vmatpush1.xpose.msra.mxu0 0.0
    %1441 = vmatprep.subr.mxu0 0.0
    %1442 = vmatpush1.xpose.msra.mxu0 0.0
    %1443 = vmatprep.subr.mxu0 0.0
    %1444 = vmatpush1.xpose.msra.mxu0 0.0
    %1445 = vmatprep.subr.mxu0 0.0
    %1446 = vmatpush1.xpose.msra.mxu0 0.0
    %1447 = vmatprep.subr.mxu0 0.0
    %1448 = vmatpush1.xpose.msra.mxu0 0.0
    %1449 = vmatprep.subr.mxu0 0.0
    %1450 = vmatpush1.xpose.msra.mxu0 0.0
    %1451 = vmatprep.subr.mxu0 0.0
    %1452 = vmatpush1.xpose.msra.mxu0 0.0
    %1453 = vmatprep.subr.mxu0 0.0
    %1454 = vmatpush1.xpose.msra.mxu0 0.0
    %1455 = vmatprep.mubr.f32.mxu0 0.0
    %1456 = vmatmul.mubr.f32.gmra.mrb[0].mxu0 %v1374
    %v1457 = vpop.f32.mrb[0].mxu0
    %v1458 = vadd.f32 0.0, %v1457
    %v1459 = vpop.f32.mrb[0].mxu0
    %1460 = vdwg.mxu0
    %v1462 = vsel %vm932, %v777, 0
    %v1465 = vsel %vm932, %v880, 0
    %v1468 = vsel %vm932, %v881, 0
    %v1471 = vsel %vm932, %v882, 0
    %v1474 = vsel %vm932, %v883, 0
    %v1477 = vsel %vm932, %v884, 0
    %1479 = vmatprep.subr.mxu0 0.0
    %1480 = vmatpush1.xpose.msra.mxu0 %v1465
    %1481 = vmatprep.subr.mxu0 0.0
    %1482 = vmatpush1.xpose.msra.mxu0 %v1468
    %1483 = vmatprep.subr.mxu0 0.0
    %1484 = vmatpush1.xpose.msra.mxu0 %v1471
    %1485 = vmatprep.subr.mxu0 0.0
    %1486 = vmatpush1.xpose.msra.mxu0 %v1474
    %1487 = vmatprep.subr.mxu0 0.0
    %1488 = vmatpush1.xpose.msra.mxu0 %v1477
    %1489 = vmatprep.subr.mxu0 0.0
    %1490 = vmatpush1.xpose.msra.mxu0 0.0
    %1491 = vmatprep.subr.mxu0 0.0
    %1492 = vmatpush1.xpose.msra.mxu0 0.0
    %1493 = vmatprep.subr.mxu0 0.0
    %1494 = vmatpush1.xpose.msra.mxu0 0.0
    %1495 = vmatprep.subr.mxu0 0.0
    %1496 = vmatpush1.xpose.msra.mxu0 0.0
    %1497 = vmatprep.subr.mxu0 0.0
    %1498 = vmatpush1.xpose.msra.mxu0 0.0
    %1499 = vmatprep.subr.mxu0 0.0
    %1500 = vmatpush1.xpose.msra.mxu0 0.0
    %1501 = vmatprep.subr.mxu0 0.0
    %1502 = vmatpush1.xpose.msra.mxu0 0.0
    %1503 = vmatprep.subr.mxu0 0.0
    %1504 = vmatpush1.xpose.msra.mxu0 0.0
    %1505 = vmatprep.subr.mxu0 0.0
    %1506 = vmatpush1.xpose.msra.mxu0 0.0
    %1507 = vmatprep.subr.mxu0 0.0
    %1508 = vmatpush1.xpose.msra.mxu0 0.0
    %1509 = vmatprep.subr.mxu0 0.0
    %1510 = vmatpush1.xpose.msra.mxu0 0.0
    %1511 = vmatprep.subr.mxu0 0.0
    %1512 = vmatpush1.xpose.msra.mxu0 0.0
    %1513 = vmatprep.subr.mxu0 0.0
    %1514 = vmatpush1.xpose.msra.mxu0 0.0
    %1515 = vmatprep.subr.mxu0 0.0
    %1516 = vmatpush1.xpose.msra.mxu0 0.0
    %1517 = vmatprep.subr.mxu0 0.0
    %1518 = vmatpush1.xpose.msra.mxu0 0.0
    %1519 = vmatprep.subr.mxu0 0.0
    %1520 = vmatpush1.xpose.msra.mxu0 0.0
    %1521 = vmatprep.subr.mxu0 0.0
    %1522 = vmatpush1.xpose.msra.mxu0 0.0
    %1523 = vmatprep.subr.mxu0 0.0
    %1524 = vmatpush1.xpose.msra.mxu0 0.0
    %1525 = vmatprep.subr.mxu0 0.0
    %1526 = vmatpush1.xpose.msra.mxu0 0.0
    %1527 = vmatprep.subr.mxu0 0.0
    %1528 = vmatpush1.xpose.msra.mxu0 0.0
    %1529 = vmatprep.subr.mxu0 0.0
    %1530 = vmatpush1.xpose.msra.mxu0 0.0
    %1531 = vmatprep.subr.mxu0 0.0
    %1532 = vmatpush1.xpose.msra.mxu0 0.0
    %1533 = vmatprep.subr.mxu0 0.0
    %1534 = vmatpush1.xpose.msra.mxu0 0.0
    %1535 = vmatprep.subr.mxu0 0.0
    %1536 = vmatpush1.xpose.msra.mxu0 0.0
    %1537 = vmatprep.subr.mxu0 0.0
    %1538 = vmatpush1.xpose.msra.mxu0 0.0
    %1539 = vmatprep.subr.mxu0 0.0
    %1540 = vmatpush1.xpose.msra.mxu0 0.0
    %1541 = vmatprep.subr.mxu0 0.0
    %1542 = vmatpush1.xpose.msra.mxu0 0.0
    %1543 = vmatprep.mubr.f32.mxu0 0.0
    %1544 = vmatmul.mubr.f32.gmra.mrb[0].mxu0 %v1462
    %v1545 = vpop.f32.mrb[0].mxu0
    %v1546 = vadd.f32 0.0, %v1545
    %v1547 = vpop.f32.mrb[0].mxu0
    %1548 = vdwg.mxu0
    %v1550 = vsel %vm932, %v847, 0
    %v1553 = vsel %vm932, %v885, 0
    %v1556 = vsel %vm932, %v886, 0
    %v1559 = vsel %vm932, %v887, 0
    %v1562 = vsel %vm932, %v888, 0
    %v1565 = vsel %vm932, %v889, 0
    %1567 = vmatprep.subr.mxu0 0.0
    %1568 = vmatpush1.xpose.msra.mxu0 %v1553
    %1569 = vmatprep.subr.mxu0 0.0
    %1570 = vmatpush1.xpose.msra.mxu0 %v1556
    %1571 = vmatprep.subr.mxu0 0.0
    %1572 = vmatpush1.xpose.msra.mxu0 %v1559
    %1573 = vmatprep.subr.mxu0 0.0
    %1574 = vmatpush1.xpose.msra.mxu0 %v1562
    %1575 = vmatprep.subr.mxu0 0.0
    %1576 = vmatpush1.xpose.msra.mxu0 %v1565
    %1577 = vmatprep.subr.mxu0 0.0
    %1578 = vmatpush1.xpose.msra.mxu0 0.0
    %1579 = vmatprep.subr.mxu0 0.0
    %1580 = vmatpush1.xpose.msra.mxu0 0.0
    %1581 = vmatprep.subr.mxu0 0.0
    %1582 = vmatpush1.xpose.msra.mxu0 0.0
    %1583 = vmatprep.subr.mxu0 0.0
    %1584 = vmatpush1.xpose.msra.mxu0 0.0
    %1585 = vmatprep.subr.mxu0 0.0
    %1586 = vmatpush1.xpose.msra.mxu0 0.0
    %1587 = vmatprep.subr.mxu0 0.0
    %1588 = vmatpush1.xpose.msra.mxu0 0.0
    %1589 = vmatprep.subr.mxu0 0.0
    %1590 = vmatpush1.xpose.msra.mxu0 0.0
    %1591 = vmatprep.subr.mxu0 0.0
    %1592 = vmatpush1.xpose.msra.mxu0 0.0
    %1593 = vmatprep.subr.mxu0 0.0
    %1594 = vmatpush1.xpose.msra.mxu0 0.0
    %1595 = vmatprep.subr.mxu0 0.0
    %1596 = vmatpush1.xpose.msra.mxu0 0.0
    %1597 = vmatprep.subr.mxu0 0.0
    %1598 = vmatpush1.xpose.msra.mxu0 0.0
    %1599 = vmatprep.subr.mxu0 0.0
    %1600 = vmatpush1.xpose.msra.mxu0 0.0
    %1601 = vmatprep.subr.mxu0 0.0
    %1602 = vmatpush1.xpose.msra.mxu0 0.0
    %1603 = vmatprep.subr.mxu0 0.0
    %1604 = vmatpush1.xpose.msra.mxu0 0.0
    %1605 = vmatprep.subr.mxu0 0.0
    %1606 = vmatpush1.xpose.msra.mxu0 0.0
    %1607 = vmatprep.subr.mxu0 0.0
    %1608 = vmatpush1.xpose.msra.mxu0 0.0
    %1609 = vmatprep.subr.mxu0 0.0
    %1610 = vmatpush1.xpose.msra.mxu0 0.0
    %1611 = vmatprep.subr.mxu0 0.0
    %1612 = vmatpush1.xpose.msra.mxu0 0.0
    %1613 = vmatprep.subr.mxu0 0.0
    %1614 = vmatpush1.xpose.msra.mxu0 0.0
    %1615 = vmatprep.subr.mxu0 0.0
    %1616 = vmatpush1.xpose.msra.mxu0 0.0
    %1617 = vmatprep.subr.mxu0 0.0
    %1618 = vmatpush1.xpose.msra.mxu0 0.0
    %1619 = vmatprep.subr.mxu0 0.0
    %1620 = vmatpush1.xpose.msra.mxu0 0.0
    %1621 = vmatprep.subr.mxu0 0.0
    %1622 = vmatpush1.xpose.msra.mxu0 0.0
    %1623 = vmatprep.subr.mxu0 0.0
    %1624 = vmatpush1.xpose.msra.mxu0 0.0
    %1625 = vmatprep.subr.mxu0 0.0
    %1626 = vmatpush1.xpose.msra.mxu0 0.0
    %1627 = vmatprep.subr.mxu0 0.0
    %1628 = vmatpush1.xpose.msra.mxu0 0.0
    %1629 = vmatprep.subr.mxu0 0.0
    %1630 = vmatpush1.xpose.msra.mxu0 0.0
    %1631 = vmatprep.mubr.f32.mxu0 0.0
    %1632 = vmatmul.mubr.f32.gmra.mrb[0].mxu0 %v1550
    %v1633 = vpop.f32.mrb[0].mxu0
    %v1634 = vadd.f32 0.0, %v1633
    %v1635 = vpop.f32.mrb[0].mxu0
    %1636 = vdwg.mxu0
    %v1637 = vmul.f32 %v1018, 0.35355338
    %v1638 = vmul.f32 %v1106, 0.35355338
    %v1639 = vmul.f32 %v1194, 0.35355338
    %v1640 = vmul.f32 %v1282, 0.35355338
    %v1641 = vmul.f32 %v1370, 0.35355338
    %v1642 = vmul.f32 %v1458, 0.35355338
    %v1643 = vmul.f32 %v1546, 0.35355338
    %v1644 = vmul.f32 %v1634, 0.35355338
    %v1645 = vadd.f32 %v1637, %v930
    %v1646 = vadd.f32 %v1638, %v931
    %v1647 = vadd.f32 %v1639, %v930
    %v1648 = vadd.f32 %v1640, %v931
    %v1649 = vadd.f32 %v1641, %v930
    %v1650 = vadd.f32 %v1642, %v931
    %v1651 = vadd.f32 %v1643, %v930
    %v1652 = vadd.f32 %v1644, %v931
    %v1653 = vsel %vm65, %v1645, -inf
    %1654 = vmax.xlane.f32.xlu0 %v1653
    %v1655 = vpop.xlane.xlu0 %1654
    %v1656 = vsel %vm65, %v1646, -inf
    %1657 = vmax.xlane.f32.xlu0 %v1656
    %v1658 = vpop.xlane.xlu0 %1657
    %v1659 = vsel %vm65, %v1647, -inf
    %1660 = vmax.xlane.f32.xlu0 %v1659
    %v1661 = vpop.xlane.xlu0 %1660
    %v1662 = vsel %vm65, %v1648, -inf
    %1663 = vmax.xlane.f32.xlu0 %v1662
    %v1664 = vpop.xlane.xlu0 %1663
    %v1665 = vsel %vm65, %v1649, -inf
    %1666 = vmax.xlane.f32.xlu0 %v1665
    %v1667 = vpop.xlane.xlu0 %1666
    %v1668 = vsel %vm65, %v1650, -inf
    %1669 = vmax.xlane.f32.xlu0 %v1668
    %v1670 = vpop.xlane.xlu0 %1669
    %v1671 = vsel %vm65, %v1651, -inf
    %1672 = vmax.xlane.f32.xlu0 %v1671
    %v1673 = vpop.xlane.xlu0 %1672
    %v1674 = vsel %vm65, %v1652, -inf
    %1675 = vmax.xlane.f32.xlu0 %v1674
    %v1676 = vpop.xlane.xlu0 %1675
    %v1677 = vsub.f32 %v1645, %v1655
    %v1678 = vsub.f32 %v1646, %v1658
    %v1679 = vsub.f32 %v1647, %v1661
    %v1680 = vsub.f32 %v1648, %v1664
    %v1681 = vsub.f32 %v1649, %v1667
    %v1682 = vsub.f32 %v1650, %v1670
    %v1683 = vsub.f32 %v1651, %v1673
    %v1684 = vsub.f32 %v1652, %v1676
    %v1685 = vmul.f32 %v1677, 1.442695
    %v1686 = vpow.pop %v1685
    %v1687 = vmul.f32 %v1678, 1.442695
    %v1688 = vpow.pop %v1687
    %v1689 = vmul.f32 %v1679, 1.442695
    %v1690 = vpow.pop %v1689
    %v1691 = vmul.f32 %v1680, 1.442695
    %v1692 = vpow.pop %v1691
    %v1693 = vmul.f32 %v1681, 1.442695
    %v1694 = vpow.pop %v1693
    %v1695 = vmul.f32 %v1682, 1.442695
    %v1696 = vpow.pop %v1695
    %v1697 = vmul.f32 %v1683, 1.442695
    %v1698 = vpow.pop %v1697
    %v1699 = vmul.f32 %v1684, 1.442695
    %v1700 = vpow.pop %v1699
    %v1701 = vsel %vm65, %v1686, 0.0
    %1702 = vadd.xlane.f32.xlu0 %v1701
    %v1703 = vpop.xlane.xlu0 %1702
    %v1704 = vsel %vm65, %v1688, 0.0
    %1705 = vadd.xlane.f32.xlu0 %v1704
    %v1706 = vpop.xlane.xlu0 %1705
    %v1707 = vsel %vm65, %v1690, 0.0
    %1708 = vadd.xlane.f32.xlu0 %v1707
    %v1709 = vpop.xlane.xlu0 %1708
    %v1710 = vsel %vm65, %v1692, 0.0
    %1711 = vadd.xlane.f32.xlu0 %v1710
    %v1712 = vpop.xlane.xlu0 %1711
    %v1713 = vsel %vm65, %v1694, 0.0
    %1714 = vadd.xlane.f32.xlu0 %v1713
    %v1715 = vpop.xlane.xlu0 %1714
    %v1716 = vsel %vm65, %v1696, 0.0
    %1717 = vadd.xlane.f32.xlu0 %v1716
    %v1718 = vpop.xlane.xlu0 %1717
    %v1719 = vsel %vm65, %v1698, 0.0
    %1720 = vadd.xlane.f32.xlu0 %v1719
    %v1721 = vpop.xlane.xlu0 %1720
    %v1722 = vsel %vm65, %v1700, 0.0
    %1723 = vadd.xlane.f32.xlu0 %v1722
    %v1724 = vpop.xlane.xlu0 %1723
    %v1725 = vrcp.pop %v1703
    %v1726 = vmul.f32 %v1686, %v1725
    %v1727 = vrcp.pop %v1706
    %v1728 = vmul.f32 %v1688, %v1727
    %v1729 = vrcp.pop %v1709
    %v1730 = vmul.f32 %v1690, %v1729
    %v1731 = vrcp.pop %v1712
    %v1732 = vmul.f32 %v1692, %v1731
    %v1733 = vrcp.pop %v1715
    %v1734 = vmul.f32 %v1694, %v1733
    %v1735 = vrcp.pop %v1718
    %v1736 = vmul.f32 %v1696, %v1735
    %v1737 = vrcp.pop %v1721
    %v1738 = vmul.f32 %v1698, %v1737
    %v1739 = vrcp.pop %v1724
    %v1740 = vmul.f32 %v1700, %v1739
    %v1742 = vsel %vm65, %v1726, 0
    %v1745 = vsel %vm69, %v894, 0
    %1747 = vmatprep.subr.mxu0 0.0
    %1748 = vmatpush1.msra.mxu0 %v890
    %1749 = vmatprep.subr.mxu0 0.0
    %1750 = vmatpush1.msra.mxu0 %v891
    %1751 = vmatprep.subr.mxu0 0.0
    %1752 = vmatpush1.msra.mxu0 %v892
    %1753 = vmatprep.subr.mxu0 0.0
    %1754 = vmatpush1.msra.mxu0 %v893
    %1755 = vmatprep.subr.mxu0 0.0
    %1756 = vmatpush1.msra.mxu0 %v1745
    %1757 = vmatprep.subr.mxu0 0.0
    %1758 = vmatpush1.msra.mxu0 0.0
    %1759 = vmatprep.subr.mxu0 0.0
    %1760 = vmatpush1.msra.mxu0 0.0
    %1761 = vmatprep.subr.mxu0 0.0
    %1762 = vmatpush1.msra.mxu0 0.0
    %1763 = vmatprep.subr.mxu0 0.0
    %1764 = vmatpush1.msra.mxu0 0.0
    %1765 = vmatprep.subr.mxu0 0.0
    %1766 = vmatpush1.msra.mxu0 0.0
    %1767 = vmatprep.subr.mxu0 0.0
    %1768 = vmatpush1.msra.mxu0 0.0
    %1769 = vmatprep.subr.mxu0 0.0
    %1770 = vmatpush1.msra.mxu0 0.0
    %1771 = vmatprep.subr.mxu0 0.0
    %1772 = vmatpush1.msra.mxu0 0.0
    %1773 = vmatprep.subr.mxu0 0.0
    %1774 = vmatpush1.msra.mxu0 0.0
    %1775 = vmatprep.subr.mxu0 0.0
    %1776 = vmatpush1.msra.mxu0 0.0
    %1777 = vmatprep.subr.mxu0 0.0
    %1778 = vmatpush1.msra.mxu0 0.0
    %1779 = vmatprep.subr.mxu0 0.0
    %1780 = vmatpush1.msra.mxu0 0.0
    %1781 = vmatprep.subr.mxu0 0.0
    %1782 = vmatpush1.msra.mxu0 0.0
    %1783 = vmatprep.subr.mxu0 0.0
    %1784 = vmatpush1.msra.mxu0 0.0
    %1785 = vmatprep.subr.mxu0 0.0
    %1786 = vmatpush1.msra.mxu0 0.0
    %1787 = vmatprep.subr.mxu0 0.0
    %1788 = vmatpush1.msra.mxu0 0.0
    %1789 = vmatprep.subr.mxu0 0.0
    %1790 = vmatpush1.msra.mxu0 0.0
    %1791 = vmatprep.subr.mxu0 0.0
    %1792 = vmatpush1.msra.mxu0 0.0
    %1793 = vmatprep.subr.mxu0 0.0
    %1794 = vmatpush1.msra.mxu0 0.0
    %1795 = vmatprep.subr.mxu0 0.0
    %1796 = vmatpush1.msra.mxu0 0.0
    %1797 = vmatprep.subr.mxu0 0.0
    %1798 = vmatpush1.msra.mxu0 0.0
    %1799 = vmatprep.subr.mxu0 0.0
    %1800 = vmatpush1.msra.mxu0 0.0
    %1801 = vmatprep.subr.mxu0 0.0
    %1802 = vmatpush1.msra.mxu0 0.0
    %1803 = vmatprep.subr.mxu0 0.0
    %1804 = vmatpush1.msra.mxu0 0.0
    %1805 = vmatprep.subr.mxu0 0.0
    %1806 = vmatpush1.msra.mxu0 0.0
    %1807 = vmatprep.subr.mxu0 0.0
    %1808 = vmatpush1.msra.mxu0 0.0
    %1809 = vmatprep.subr.mxu0 0.0
    %1810 = vmatpush1.msra.mxu0 0.0
    %1811 = vmatprep.mubr.f32.mxu0 0.0
    %1812 = vmatmul.mubr.f32.gmra.mrb[0].mxu0 %v1742
    %v1813 = vpop.f32.mrb[0].mxu0
    %v1814 = vadd.f32 0.0, %v1813
    %v1815 = vpop.f32.mrb[0].mxu0
    %1816 = vdwg.mxu0
    %v1818 = vsel %vm65, %v1728, 0
    %v1821 = vsel %vm69, %v899, 0
    %1823 = vmatprep.subr.mxu0 0.0
    %1824 = vmatpush1.msra.mxu0 %v895
    %1825 = vmatprep.subr.mxu0 0.0
    %1826 = vmatpush1.msra.mxu0 %v896
    %1827 = vmatprep.subr.mxu0 0.0
    %1828 = vmatpush1.msra.mxu0 %v897
    %1829 = vmatprep.subr.mxu0 0.0
    %1830 = vmatpush1.msra.mxu0 %v898
    %1831 = vmatprep.subr.mxu0 0.0
    %1832 = vmatpush1.msra.mxu0 %v1821
    %1833 = vmatprep.subr.mxu0 0.0
    %1834 = vmatpush1.msra.mxu0 0.0
    %1835 = vmatprep.subr.mxu0 0.0
    %1836 = vmatpush1.msra.mxu0 0.0
    %1837 = vmatprep.subr.mxu0 0.0
    %1838 = vmatpush1.msra.mxu0 0.0
    %1839 = vmatprep.subr.mxu0 0.0
    %1840 = vmatpush1.msra.mxu0 0.0
    %1841 = vmatprep.subr.mxu0 0.0
    %1842 = vmatpush1.msra.mxu0 0.0
    %1843 = vmatprep.subr.mxu0 0.0
    %1844 = vmatpush1.msra.mxu0 0.0
    %1845 = vmatprep.subr.mxu0 0.0
    %1846 = vmatpush1.msra.mxu0 0.0
    %1847 = vmatprep.subr.mxu0 0.0
    %1848 = vmatpush1.msra.mxu0 0.0
    %1849 = vmatprep.subr.mxu0 0.0
    %1850 = vmatpush1.msra.mxu0 0.0
    %1851 = vmatprep.subr.mxu0 0.0
    %1852 = vmatpush1.msra.mxu0 0.0
    %1853 = vmatprep.subr.mxu0 0.0
    %1854 = vmatpush1.msra.mxu0 0.0
    %1855 = vmatprep.subr.mxu0 0.0
    %1856 = vmatpush1.msra.mxu0 0.0
    %1857 = vmatprep.subr.mxu0 0.0
    %1858 = vmatpush1.msra.mxu0 0.0
    %1859 = vmatprep.subr.mxu0 0.0
    %1860 = vmatpush1.msra.mxu0 0.0
    %1861 = vmatprep.subr.mxu0 0.0
    %1862 = vmatpush1.msra.mxu0 0.0
    %1863 = vmatprep.subr.mxu0 0.0
    %1864 = vmatpush1.msra.mxu0 0.0
    %1865 = vmatprep.subr.mxu0 0.0
    %1866 = vmatpush1.msra.mxu0 0.0
    %1867 = vmatprep.subr.mxu0 0.0
    %1868 = vmatpush1.msra.mxu0 0.0
    %1869 = vmatprep.subr.mxu0 0.0
    %1870 = vmatpush1.msra.mxu0 0.0
    %1871 = vmatprep.subr.mxu0 0.0
    %1872 = vmatpush1.msra.mxu0 0.0
    %1873 = vmatprep.subr.mxu0 0.0
    %1874 = vmatpush1.msra.mxu0 0.0
    %1875 = vmatprep.subr.mxu0 0.0
    %1876 = vmatpush1.msra.mxu0 0.0
    %1877 = vmatprep.subr.mxu0 0.0
    %1878 = vmatpush1.msra.mxu0 0.0
    %1879 = vmatprep.subr.mxu0 0.0
    %1880 = vmatpush1.msra.mxu0 0.0
    %1881 = vmatprep.subr.mxu0 0.0
    %1882 = vmatpush1.msra.mxu0 0.0
    %1883 = vmatprep.subr.mxu0 0.0
    %1884 = vmatpush1.msra.mxu0 0.0
    %1885 = vmatprep.subr.mxu0 0.0
    %1886 = vmatpush1.msra.mxu0 0.0
    %1887 = vmatprep.mubr.f32.mxu0 0.0
    %1888 = vmatmul.mubr.f32.gmra.mrb[0].mxu0 %v1818
    %v1889 = vpop.f32.mrb[0].mxu0
    %v1890 = vadd.f32 0.0, %v1889
    %v1891 = vpop.f32.mrb[0].mxu0
    %1892 = vdwg.mxu0
    %v1894 = vsel %vm65, %v1730, 0
    %v1897 = vsel %vm69, %v904, 0
    %1899 = vmatprep.subr.mxu0 0.0
    %1900 = vmatpush1.msra.mxu0 %v900
    %1901 = vmatprep.subr.mxu0 0.0
    %1902 = vmatpush1.msra.mxu0 %v901
    %1903 = vmatprep.subr.mxu0 0.0
    %1904 = vmatpush1.msra.mxu0 %v902
    %1905 = vmatprep.subr.mxu0 0.0
    %1906 = vmatpush1.msra.mxu0 %v903
    %1907 = vmatprep.subr.mxu0 0.0
    %1908 = vmatpush1.msra.mxu0 %v1897
    %1909 = vmatprep.subr.mxu0 0.0
    %1910 = vmatpush1.msra.mxu0 0.0
    %1911 = vmatprep.subr.mxu0 0.0
    %1912 = vmatpush1.msra.mxu0 0.0
    %1913 = vmatprep.subr.mxu0 0.0
    %1914 = vmatpush1.msra.mxu0 0.0
    %1915 = vmatprep.subr.mxu0 0.0
    %1916 = vmatpush1.msra.mxu0 0.0
    %1917 = vmatprep.subr.mxu0 0.0
    %1918 = vmatpush1.msra.mxu0 0.0
    %1919 = vmatprep.subr.mxu0 0.0
    %1920 = vmatpush1.msra.mxu0 0.0
    %1921 = vmatprep.subr.mxu0 0.0
    %1922 = vmatpush1.msra.mxu0 0.0
    %1923 = vmatprep.subr.mxu0 0.0
    %1924 = vmatpush1.msra.mxu0 0.0
    %1925 = vmatprep.subr.mxu0 0.0
    %1926 = vmatpush1.msra.mxu0 0.0
    %1927 = vmatprep.subr.mxu0 0.0
    %1928 = vmatpush1.msra.mxu0 0.0
    %1929 = vmatprep.subr.mxu0 0.0
    %1930 = vmatpush1.msra.mxu0 0.0
    %1931 = vmatprep.subr.mxu0 0.0
    %1932 = vmatpush1.msra.mxu0 0.0
    %1933 = vmatprep.subr.mxu0 0.0
    %1934 = vmatpush1.msra.mxu0 0.0
    %1935 = vmatprep.subr.mxu0 0.0
    %1936 = vmatpush1.msra.mxu0 0.0
    %1937 = vmatprep.subr.mxu0 0.0
    %1938 = vmatpush1.msra.mxu0 0.0
    %1939 = vmatprep.subr.mxu0 0.0
    %1940 = vmatpush1.msra.mxu0 0.0
    %1941 = vmatprep.subr.mxu0 0.0
    %1942 = vmatpush1.msra.mxu0 0.0
    %1943 = vmatprep.subr.mxu0 0.0
    %1944 = vmatpush1.msra.mxu0 0.0
    %1945 = vmatprep.subr.mxu0 0.0
    %1946 = vmatpush1.msra.mxu0 0.0
    %1947 = vmatprep.subr.mxu0 0.0
    %1948 = vmatpush1.msra.mxu0 0.0
    %1949 = vmatprep.subr.mxu0 0.0
    %1950 = vmatpush1.msra.mxu0 0.0
    %1951 = vmatprep.subr.mxu0 0.0
    %1952 = vmatpush1.msra.mxu0 0.0
    %1953 = vmatprep.subr.mxu0 0.0
    %1954 = vmatpush1.msra.mxu0 0.0
    %1955 = vmatprep.subr.mxu0 0.0
    %1956 = vmatpush1.msra.mxu0 0.0
    %1957 = vmatprep.subr.mxu0 0.0
    %1958 = vmatpush1.msra.mxu0 0.0
    %1959 = vmatprep.subr.mxu0 0.0
    %1960 = vmatpush1.msra.mxu0 0.0
    %1961 = vmatprep.subr.mxu0 0.0
    %1962 = vmatpush1.msra.mxu0 0.0
    %1963 = vmatprep.mubr.f32.mxu0 0.0
    %1964 = vmatmul.mubr.f32.gmra.mrb[0].mxu0 %v1894
    %v1965 = vpop.f32.mrb[0].mxu0
    %v1966 = vadd.f32 0.0, %v1965
    %v1967 = vpop.f32.mrb[0].mxu0
    %1968 = vdwg.mxu0
    %v1970 = vsel %vm65, %v1732, 0
    %v1973 = vsel %vm69, %v909, 0
    %1975 = vmatprep.subr.mxu0 0.0
    %1976 = vmatpush1.msra.mxu0 %v905
    %1977 = vmatprep.subr.mxu0 0.0
    %1978 = vmatpush1.msra.mxu0 %v906
    %1979 = vmatprep.subr.mxu0 0.0
    %1980 = vmatpush1.msra.mxu0 %v907
    %1981 = vmatprep.subr.mxu0 0.0
    %1982 = vmatpush1.msra.mxu0 %v908
    %1983 = vmatprep.subr.mxu0 0.0
    %1984 = vmatpush1.msra.mxu0 %v1973
    %1985 = vmatprep.subr.mxu0 0.0
    %1986 = vmatpush1.msra.mxu0 0.0
    %1987 = vmatprep.subr.mxu0 0.0
    %1988 = vmatpush1.msra.mxu0 0.0
    %1989 = vmatprep.subr.mxu0 0.0
    %1990 = vmatpush1.msra.mxu0 0.0
    %1991 = vmatprep.subr.mxu0 0.0
    %1992 = vmatpush1.msra.mxu0 0.0
    %1993 = vmatprep.subr.mxu0 0.0
    %1994 = vmatpush1.msra.mxu0 0.0
    %1995 = vmatprep.subr.mxu0 0.0
    %1996 = vmatpush1.msra.mxu0 0.0
    %1997 = vmatprep.subr.mxu0 0.0
    %1998 = vmatpush1.msra.mxu0 0.0
    %1999 = vmatprep.subr.mxu0 0.0
    %2000 = vmatpush1.msra.mxu0 0.0
    %2001 = vmatprep.subr.mxu0 0.0
    %2002 = vmatpush1.msra.mxu0 0.0
    %2003 = vmatprep.subr.mxu0 0.0
    %2004 = vmatpush1.msra.mxu0 0.0
    %2005 = vmatprep.subr.mxu0 0.0
    %2006 = vmatpush1.msra.mxu0 0.0
    %2007 = vmatprep.subr.mxu0 0.0
    %2008 = vmatpush1.msra.mxu0 0.0
    %2009 = vmatprep.subr.mxu0 0.0
    %2010 = vmatpush1.msra.mxu0 0.0
    %2011 = vmatprep.subr.mxu0 0.0
    %2012 = vmatpush1.msra.mxu0 0.0
    %2013 = vmatprep.subr.mxu0 0.0
    %2014 = vmatpush1.msra.mxu0 0.0
    %2015 = vmatprep.subr.mxu0 0.0
    %2016 = vmatpush1.msra.mxu0 0.0
    %2017 = vmatprep.subr.mxu0 0.0
    %2018 = vmatpush1.msra.mxu0 0.0
    %2019 = vmatprep.subr.mxu0 0.0
    %2020 = vmatpush1.msra.mxu0 0.0
    %2021 = vmatprep.subr.mxu0 0.0
    %2022 = vmatpush1.msra.mxu0 0.0
    %2023 = vmatprep.subr.mxu0 0.0
    %2024 = vmatpush1.msra.mxu0 0.0
    %2025 = vmatprep.subr.mxu0 0.0
    %2026 = vmatpush1.msra.mxu0 0.0
    %2027 = vmatprep.subr.mxu0 0.0
    %2028 = vmatpush1.msra.mxu0 0.0
    %2029 = vmatprep.subr.mxu0 0.0
    %2030 = vmatpush1.msra.mxu0 0.0
    %2031 = vmatprep.subr.mxu0 0.0
    %2032 = vmatpush1.msra.mxu0 0.0
    %2033 = vmatprep.subr.mxu0 0.0
    %2034 = vmatpush1.msra.mxu0 0.0
    %2035 = vmatprep.subr.mxu0 0.0
    %2036 = vmatpush1.msra.mxu0 0.0
    %2037 = vmatprep.subr.mxu0 0.0
    %2038 = vmatpush1.msra.mxu0 0.0
    %2039 = vmatprep.mubr.f32.mxu0 0.0
    %2040 = vmatmul.mubr.f32.gmra.mrb[0].mxu0 %v1970
    %v2041 = vpop.f32.mrb[0].mxu0
    %v2042 = vadd.f32 0.0, %v2041
    %v2043 = vpop.f32.mrb[0].mxu0
    %2044 = vdwg.mxu0
    %v2046 = vsel %vm65, %v1734, 0
    %v2049 = vsel %vm69, %v914, 0
    %2051 = vmatprep.subr.mxu0 0.0
    %2052 = vmatpush1.msra.mxu0 %v910
    %2053 = vmatprep.subr.mxu0 0.0
    %2054 = vmatpush1.msra.mxu0 %v911
    %2055 = vmatprep.subr.mxu0 0.0
    %2056 = vmatpush1.msra.mxu0 %v912
    %2057 = vmatprep.subr.mxu0 0.0
    %2058 = vmatpush1.msra.mxu0 %v913
    %2059 = vmatprep.subr.mxu0 0.0
    %2060 = vmatpush1.msra.mxu0 %v2049
    %2061 = vmatprep.subr.mxu0 0.0
    %2062 = vmatpush1.msra.mxu0 0.0
    %2063 = vmatprep.subr.mxu0 0.0
    %2064 = vmatpush1.msra.mxu0 0.0
    %2065 = vmatprep.subr.mxu0 0.0
    %2066 = vmatpush1.msra.mxu0 0.0
    %2067 = vmatprep.subr.mxu0 0.0
    %2068 = vmatpush1.msra.mxu0 0.0
    %2069 = vmatprep.subr.mxu0 0.0
    %2070 = vmatpush1.msra.mxu0 0.0
    %2071 = vmatprep.subr.mxu0 0.0
    %2072 = vmatpush1.msra.mxu0 0.0
    %2073 = vmatprep.subr.mxu0 0.0
    %2074 = vmatpush1.msra.mxu0 0.0
    %2075 = vmatprep.subr.mxu0 0.0
    %2076 = vmatpush1.msra.mxu0 0.0
    %2077 = vmatprep.subr.mxu0 0.0
    %2078 = vmatpush1.msra.mxu0 0.0
    %2079 = vmatprep.subr.mxu0 0.0
    %2080 = vmatpush1.msra.mxu0 0.0
    %2081 = vmatprep.subr.mxu0 0.0
    %2082 = vmatpush1.msra.mxu0 0.0
    %2083 = vmatprep.subr.mxu0 0.0
    %2084 = vmatpush1.msra.mxu0 0.0
    %2085 = vmatprep.subr.mxu0 0.0
    %2086 = vmatpush1.msra.mxu0 0.0
    %2087 = vmatprep.subr.mxu0 0.0
    %2088 = vmatpush1.msra.mxu0 0.0
    %2089 = vmatprep.subr.mxu0 0.0
    %2090 = vmatpush1.msra.mxu0 0.0
    %2091 = vmatprep.subr.mxu0 0.0
    %2092 = vmatpush1.msra.mxu0 0.0
    %2093 = vmatprep.subr.mxu0 0.0
    %2094 = vmatpush1.msra.mxu0 0.0
    %2095 = vmatprep.subr.mxu0 0.0
    %2096 = vmatpush1.msra.mxu0 0.0
    %2097 = vmatprep.subr.mxu0 0.0
    %2098 = vmatpush1.msra.mxu0 0.0
    %2099 = vmatprep.subr.mxu0 0.0
    %2100 = vmatpush1.msra.mxu0 0.0
    %2101 = vmatprep.subr.mxu0 0.0
    %2102 = vmatpush1.msra.mxu0 0.0
    %2103 = vmatprep.subr.mxu0 0.0
    %2104 = vmatpush1.msra.mxu0 0.0
    %2105 = vmatprep.subr.mxu0 0.0
    %2106 = vmatpush1.msra.mxu0 0.0
    %2107 = vmatprep.subr.mxu0 0.0
    %2108 = vmatpush1.msra.mxu0 0.0
    %2109 = vmatprep.subr.mxu0 0.0
    %2110 = vmatpush1.msra.mxu0 0.0
    %2111 = vmatprep.subr.mxu0 0.0
    %2112 = vmatpush1.msra.mxu0 0.0
    %2113 = vmatprep.subr.mxu0 0.0
    %2114 = vmatpush1.msra.mxu0 0.0
    %2115 = vmatprep.mubr.f32.mxu0 0.0
    %2116 = vmatmul.mubr.f32.gmra.mrb[0].mxu0 %v2046
    %v2117 = vpop.f32.mrb[0].mxu0
    %v2118 = vadd.f32 0.0, %v2117
    %v2119 = vpop.f32.mrb[0].mxu0
    %2120 = vdwg.mxu0
    %v2122 = vsel %vm65, %v1736, 0
    %v2125 = vsel %vm69, %v919, 0
    %2127 = vmatprep.subr.mxu0 0.0
    %2128 = vmatpush1.msra.mxu0 %v915
    %2129 = vmatprep.subr.mxu0 0.0
    %2130 = vmatpush1.msra.mxu0 %v916
    %2131 = vmatprep.subr.mxu0 0.0
    %2132 = vmatpush1.msra.mxu0 %v917
    %2133 = vmatprep.subr.mxu0 0.0
    %2134 = vmatpush1.msra.mxu0 %v918
    %2135 = vmatprep.subr.mxu0 0.0
    %2136 = vmatpush1.msra.mxu0 %v2125
    %2137 = vmatprep.subr.mxu0 0.0
    %2138 = vmatpush1.msra.mxu0 0.0
    %2139 = vmatprep.subr.mxu0 0.0
    %2140 = vmatpush1.msra.mxu0 0.0
    %2141 = vmatprep.subr.mxu0 0.0
    %2142 = vmatpush1.msra.mxu0 0.0
    %2143 = vmatprep.subr.mxu0 0.0
    %2144 = vmatpush1.msra.mxu0 0.0
    %2145 = vmatprep.subr.mxu0 0.0
    %2146 = vmatpush1.msra.mxu0 0.0
    %2147 = vmatprep.subr.mxu0 0.0
    %2148 = vmatpush1.msra.mxu0 0.0
    %2149 = vmatprep.subr.mxu0 0.0
    %2150 = vmatpush1.msra.mxu0 0.0
    %2151 = vmatprep.subr.mxu0 0.0
    %2152 = vmatpush1.msra.mxu0 0.0
    %2153 = vmatprep.subr.mxu0 0.0
    %2154 = vmatpush1.msra.mxu0 0.0
    %2155 = vmatprep.subr.mxu0 0.0
    %2156 = vmatpush1.msra.mxu0 0.0
    %2157 = vmatprep.subr.mxu0 0.0
    %2158 = vmatpush1.msra.mxu0 0.0
    %2159 = vmatprep.subr.mxu0 0.0
    %2160 = vmatpush1.msra.mxu0 0.0
    %2161 = vmatprep.subr.mxu0 0.0
    %2162 = vmatpush1.msra.mxu0 0.0
    %2163 = vmatprep.subr.mxu0 0.0
    %2164 = vmatpush1.msra.mxu0 0.0
    %2165 = vmatprep.subr.mxu0 0.0
    %2166 = vmatpush1.msra.mxu0 0.0
    %2167 = vmatprep.subr.mxu0 0.0
    %2168 = vmatpush1.msra.mxu0 0.0
    %2169 = vmatprep.subr.mxu0 0.0
    %2170 = vmatpush1.msra.mxu0 0.0
    %2171 = vmatprep.subr.mxu0 0.0
    %2172 = vmatpush1.msra.mxu0 0.0
    %2173 = vmatprep.subr.mxu0 0.0
    %2174 = vmatpush1.msra.mxu0 0.0
    %2175 = vmatprep.subr.mxu0 0.0
    %2176 = vmatpush1.msra.mxu0 0.0
    %2177 = vmatprep.subr.mxu0 0.0
    %2178 = vmatpush1.msra.mxu0 0.0
    %2179 = vmatprep.subr.mxu0 0.0
    %2180 = vmatpush1.msra.mxu0 0.0
    %2181 = vmatprep.subr.mxu0 0.0
    %2182 = vmatpush1.msra.mxu0 0.0
    %2183 = vmatprep.subr.mxu0 0.0
    %2184 = vmatpush1.msra.mxu0 0.0
    %2185 = vmatprep.subr.mxu0 0.0
    %2186 = vmatpush1.msra.mxu0 0.0
    %2187 = vmatprep.subr.mxu0 0.0
    %2188 = vmatpush1.msra.mxu0 0.0
    %2189 = vmatprep.subr.mxu0 0.0
    %2190 = vmatpush1.msra.mxu0 0.0
    %2191 = vmatprep.mubr.f32.mxu0 0.0
    %2192 = vmatmul.mubr.f32.gmra.mrb[0].mxu0 %v2122
    %v2193 = vpop.f32.mrb[0].mxu0
    %v2194 = vadd.f32 0.0, %v2193
    %v2195 = vpop.f32.mrb[0].mxu0
    %2196 = vdwg.mxu0
    %v2198 = vsel %vm65, %v1738, 0
    %v2201 = vsel %vm69, %v924, 0
    %2203 = vmatprep.subr.mxu0 0.0
    %2204 = vmatpush1.msra.mxu0 %v920
    %2205 = vmatprep.subr.mxu0 0.0
    %2206 = vmatpush1.msra.mxu0 %v921
    %2207 = vmatprep.subr.mxu0 0.0
    %2208 = vmatpush1.msra.mxu0 %v922
    %2209 = vmatprep.subr.mxu0 0.0
    %2210 = vmatpush1.msra.mxu0 %v923
    %2211 = vmatprep.subr.mxu0 0.0
    %2212 = vmatpush1.msra.mxu0 %v2201
    %2213 = vmatprep.subr.mxu0 0.0
    %2214 = vmatpush1.msra.mxu0 0.0
    %2215 = vmatprep.subr.mxu0 0.0
    %2216 = vmatpush1.msra.mxu0 0.0
    %2217 = vmatprep.subr.mxu0 0.0
    %2218 = vmatpush1.msra.mxu0 0.0
    %2219 = vmatprep.subr.mxu0 0.0
    %2220 = vmatpush1.msra.mxu0 0.0
    %2221 = vmatprep.subr.mxu0 0.0
    %2222 = vmatpush1.msra.mxu0 0.0
    %2223 = vmatprep.subr.mxu0 0.0
    %2224 = vmatpush1.msra.mxu0 0.0
    %2225 = vmatprep.subr.mxu0 0.0
    %2226 = vmatpush1.msra.mxu0 0.0
    %2227 = vmatprep.subr.mxu0 0.0
    %2228 = vmatpush1.msra.mxu0 0.0
    %2229 = vmatprep.subr.mxu0 0.0
    %2230 = vmatpush1.msra.mxu0 0.0
    %2231 = vmatprep.subr.mxu0 0.0
    %2232 = vmatpush1.msra.mxu0 0.0
    %2233 = vmatprep.subr.mxu0 0.0
    %2234 = vmatpush1.msra.mxu0 0.0
    %2235 = vmatprep.subr.mxu0 0.0
    %2236 = vmatpush1.msra.mxu0 0.0
    %2237 = vmatprep.subr.mxu0 0.0
    %2238 = vmatpush1.msra.mxu0 0.0
    %2239 = vmatprep.subr.mxu0 0.0
    %2240 = vmatpush1.msra.mxu0 0.0
    %2241 = vmatprep.subr.mxu0 0.0
    %2242 = vmatpush1.msra.mxu0 0.0
    %2243 = vmatprep.subr.mxu0 0.0
    %2244 = vmatpush1.msra.mxu0 0.0
    %2245 = vmatprep.subr.mxu0 0.0
    %2246 = vmatpush1.msra.mxu0 0.0
    %2247 = vmatprep.subr.mxu0 0.0
    %2248 = vmatpush1.msra.mxu0 0.0
    %2249 = vmatprep.subr.mxu0 0.0
    %2250 = vmatpush1.msra.mxu0 0.0
    %2251 = vmatprep.subr.mxu0 0.0
    %2252 = vmatpush1.msra.mxu0 0.0
    %2253 = vmatprep.subr.mxu0 0.0
    %2254 = vmatpush1.msra.mxu0 0.0
    %2255 = vmatprep.subr.mxu0 0.0
    %2256 = vmatpush1.msra.mxu0 0.0
    %2257 = vmatprep.subr.mxu0 0.0
    %2258 = vmatpush1.msra.mxu0 0.0
    %2259 = vmatprep.subr.mxu0 0.0
    %2260 = vmatpush1.msra.mxu0 0.0
    %2261 = vmatprep.subr.mxu0 0.0
    %2262 = vmatpush1.msra.mxu0 0.0
    %2263 = vmatprep.subr.mxu0 0.0
    %2264 = vmatpush1.msra.mxu0 0.0
    %2265 = vmatprep.subr.mxu0 0.0
    %2266 = vmatpush1.msra.mxu0 0.0
    %2267 = vmatprep.mubr.f32.mxu0 0.0
    %2268 = vmatmul.mubr.f32.gmra.mrb[0].mxu0 %v2198
    %v2269 = vpop.f32.mrb[0].mxu0
    %v2270 = vadd.f32 0.0, %v2269
    %v2271 = vpop.f32.mrb[0].mxu0
    %2272 = vdwg.mxu0
    %v2274 = vsel %vm65, %v1740, 0
    %v2277 = vsel %vm69, %v929, 0
    %2279 = vmatprep.subr.mxu0 0.0
    %2280 = vmatpush1.msra.mxu0 %v925
    %2281 = vmatprep.subr.mxu0 0.0
    %2282 = vmatpush1.msra.mxu0 %v926
    %2283 = vmatprep.subr.mxu0 0.0
    %2284 = vmatpush1.msra.mxu0 %v927
    %2285 = vmatprep.subr.mxu0 0.0
    %2286 = vmatpush1.msra.mxu0 %v928
    %2287 = vmatprep.subr.mxu0 0.0
    %2288 = vmatpush1.msra.mxu0 %v2277
    %2289 = vmatprep.subr.mxu0 0.0
    %2290 = vmatpush1.msra.mxu0 0.0
    %2291 = vmatprep.subr.mxu0 0.0
    %2292 = vmatpush1.msra.mxu0 0.0
    %2293 = vmatprep.subr.mxu0 0.0
    %2294 = vmatpush1.msra.mxu0 0.0
    %2295 = vmatprep.subr.mxu0 0.0
    %2296 = vmatpush1.msra.mxu0 0.0
    %2297 = vmatprep.subr.mxu0 0.0
    %2298 = vmatpush1.msra.mxu0 0.0
    %2299 = vmatprep.subr.mxu0 0.0
    %2300 = vmatpush1.msra.mxu0 0.0
    %2301 = vmatprep.subr.mxu0 0.0
    %2302 = vmatpush1.msra.mxu0 0.0
    %2303 = vmatprep.subr.mxu0 0.0
    %2304 = vmatpush1.msra.mxu0 0.0
    %2305 = vmatprep.subr.mxu0 0.0
    %2306 = vmatpush1.msra.mxu0 0.0
    %2307 = vmatprep.subr.mxu0 0.0
    %2308 = vmatpush1.msra.mxu0 0.0
    %2309 = vmatprep.subr.mxu0 0.0
    %2310 = vmatpush1.msra.mxu0 0.0
    %2311 = vmatprep.subr.mxu0 0.0
    %2312 = vmatpush1.msra.mxu0 0.0
    %2313 = vmatprep.subr.mxu0 0.0
    %2314 = vmatpush1.msra.mxu0 0.0
    %2315 = vmatprep.subr.mxu0 0.0
    %2316 = vmatpush1.msra.mxu0 0.0
    %2317 = vmatprep.subr.mxu0 0.0
    %2318 = vmatpush1.msra.mxu0 0.0
    %2319 = vmatprep.subr.mxu0 0.0
    %2320 = vmatpush1.msra.mxu0 0.0
    %2321 = vmatprep.subr.mxu0 0.0
    %2322 = vmatpush1.msra.mxu0 0.0
    %2323 = vmatprep.subr.mxu0 0.0
    %2324 = vmatpush1.msra.mxu0 0.0
    %2325 = vmatprep.subr.mxu0 0.0
    %2326 = vmatpush1.msra.mxu0 0.0
    %2327 = vmatprep.subr.mxu0 0.0
    %2328 = vmatpush1.msra.mxu0 0.0
    %2329 = vmatprep.subr.mxu0 0.0
    %2330 = vmatpush1.msra.mxu0 0.0
    %2331 = vmatprep.subr.mxu0 0.0
    %2332 = vmatpush1.msra.mxu0 0.0
    %2333 = vmatprep.subr.mxu0 0.0
    %2334 = vmatpush1.msra.mxu0 0.0
    %2335 = vmatprep.subr.mxu0 0.0
    %2336 = vmatpush1.msra.mxu0 0.0
    %2337 = vmatprep.subr.mxu0 0.0
    %2338 = vmatpush1.msra.mxu0 0.0
    %2339 = vmatprep.subr.mxu0 0.0
    %2340 = vmatpush1.msra.mxu0 0.0
    %2341 = vmatprep.subr.mxu0 0.0
    %2342 = vmatpush1.msra.mxu0 0.0
    %2343 = vmatprep.mubr.f32.mxu0 0.0
    %2344 = vmatmul.mubr.f32.gmra.mrb[0].mxu0 %v2274
    %v2345 = vpop.f32.mrb[0].mxu0
    %v2346 = vadd.f32 0.0, %v2345
    %v2347 = vpop.f32.mrb[0].mxu0
    %2348 = vdwg.mxu0
    %v2349 = vld [vmem:[%s10] sm:$0xff]
    %v2350 = vld [vmem:[%s10 + $0x8] sm:$0xff]
    %v2351 = vld [vmem:[%s10 + $0x10] sm:$0xff]
    %v2352 = vld [vmem:[%s10 + $0x18] sm:$0xff]
    %v2354 = vsel %vm932, %v1814, 0
    %2356 = vmatprep.subr.mxu0 0.0
    %2357 = vmatpush1.msra.mxu0 %v2349
    %2358 = vmatprep.subr.mxu0 0.0
    %2359 = vmatpush1.msra.mxu0 0.0
    %2360 = vmatprep.subr.mxu0 0.0
    %2361 = vmatpush1.msra.mxu0 0.0
    %2362 = vmatprep.subr.mxu0 0.0
    %2363 = vmatpush1.msra.mxu0 0.0
    %2364 = vmatprep.subr.mxu0 0.0
    %2365 = vmatpush1.msra.mxu0 0.0
    %2366 = vmatprep.subr.mxu0 0.0
    %2367 = vmatpush1.msra.mxu0 0.0
    %2368 = vmatprep.subr.mxu0 0.0
    %2369 = vmatpush1.msra.mxu0 0.0
    %2370 = vmatprep.subr.mxu0 0.0
    %2371 = vmatpush1.msra.mxu0 0.0
    %2372 = vmatprep.subr.mxu0 0.0
    %2373 = vmatpush1.msra.mxu0 0.0
    %2374 = vmatprep.subr.mxu0 0.0
    %2375 = vmatpush1.msra.mxu0 0.0
    %2376 = vmatprep.subr.mxu0 0.0
    %2377 = vmatpush1.msra.mxu0 0.0
    %2378 = vmatprep.subr.mxu0 0.0
    %2379 = vmatpush1.msra.mxu0 0.0
    %2380 = vmatprep.subr.mxu0 0.0
    %2381 = vmatpush1.msra.mxu0 0.0
    %2382 = vmatprep.subr.mxu0 0.0
    %2383 = vmatpush1.msra.mxu0 0.0
    %2384 = vmatprep.subr.mxu0 0.0
    %2385 = vmatpush1.msra.mxu0 0.0
    %2386 = vmatprep.subr.mxu0 0.0
    %2387 = vmatpush1.msra.mxu0 0.0
    %2388 = vmatprep.subr.mxu0 0.0
    %2389 = vmatpush1.msra.mxu0 0.0
    %2390 = vmatprep.subr.mxu0 0.0
    %2391 = vmatpush1.msra.mxu0 0.0
    %2392 = vmatprep.subr.mxu0 0.0
    %2393 = vmatpush1.msra.mxu0 0.0
    %2394 = vmatprep.subr.mxu0 0.0
    %2395 = vmatpush1.msra.mxu0 0.0
    %2396 = vmatprep.subr.mxu0 0.0
    %2397 = vmatpush1.msra.mxu0 0.0
    %2398 = vmatprep.subr.mxu0 0.0
    %2399 = vmatpush1.msra.mxu0 0.0
    %2400 = vmatprep.subr.mxu0 0.0
    %2401 = vmatpush1.msra.mxu0 0.0
    %2402 = vmatprep.subr.mxu0 0.0
    %2403 = vmatpush1.msra.mxu0 0.0
    %2404 = vmatprep.subr.mxu0 0.0
    %2405 = vmatpush1.msra.mxu0 0.0
    %2406 = vmatprep.subr.mxu0 0.0
    %2407 = vmatpush1.msra.mxu0 0.0
    %2408 = vmatprep.subr.mxu0 0.0
    %2409 = vmatpush1.msra.mxu0 0.0
    %2410 = vmatprep.subr.mxu0 0.0
    %2411 = vmatpush1.msra.mxu0 0.0
    %2412 = vmatprep.subr.mxu0 0.0
    %2413 = vmatpush1.msra.mxu0 0.0
    %2414 = vmatprep.subr.mxu0 0.0
    %2415 = vmatpush1.msra.mxu0 0.0
    %2416 = vmatprep.subr.mxu0 0.0
    %2417 = vmatpush1.msra.mxu0 0.0
    %2418 = vmatprep.subr.mxu0 0.0
    %2419 = vmatpush1.msra.mxu0 0.0
    %2420 = vmatprep.mubr.f32.mxu0 0.0
    %2421 = vmatmul.mubr.f32.gmra.mrb[0].mxu0 %v2354
    %v2422 = vpop.f32.mrb[0].mxu0
    %v2423 = vadd.f32 0.0, %v2422
    %v2424 = vpop.f32.mrb[0].mxu0
    %2425 = vdwg.mxu0
    %v2427 = vsel %vm932, %v1890, 0
    %2429 = vmatprep.subr.mxu0 0.0
    %2430 = vmatpush1.msra.mxu0 %v2349
    %2431 = vmatprep.subr.mxu0 0.0
    %2432 = vmatpush1.msra.mxu0 0.0
    %2433 = vmatprep.subr.mxu0 0.0
    %2434 = vmatpush1.msra.mxu0 0.0
    %2435 = vmatprep.subr.mxu0 0.0
    %2436 = vmatpush1.msra.mxu0 0.0
    %2437 = vmatprep.subr.mxu0 0.0
    %2438 = vmatpush1.msra.mxu0 0.0
    %2439 = vmatprep.subr.mxu0 0.0
    %2440 = vmatpush1.msra.mxu0 0.0
    %2441 = vmatprep.subr.mxu0 0.0
    %2442 = vmatpush1.msra.mxu0 0.0
    %2443 = vmatprep.subr.mxu0 0.0
    %2444 = vmatpush1.msra.mxu0 0.0
    %2445 = vmatprep.subr.mxu0 0.0
    %2446 = vmatpush1.msra.mxu0 0.0
    %2447 = vmatprep.subr.mxu0 0.0
    %2448 = vmatpush1.msra.mxu0 0.0
    %2449 = vmatprep.subr.mxu0 0.0
    %2450 = vmatpush1.msra.mxu0 0.0
    %2451 = vmatprep.subr.mxu0 0.0
    %2452 = vmatpush1.msra.mxu0 0.0
    %2453 = vmatprep.subr.mxu0 0.0
    %2454 = vmatpush1.msra.mxu0 0.0
    %2455 = vmatprep.subr.mxu0 0.0
    %2456 = vmatpush1.msra.mxu0 0.0
    %2457 = vmatprep.subr.mxu0 0.0
    %2458 = vmatpush1.msra.mxu0 0.0
    %2459 = vmatprep.subr.mxu0 0.0
    %2460 = vmatpush1.msra.mxu0 0.0
    %2461 = vmatprep.subr.mxu0 0.0
    %2462 = vmatpush1.msra.mxu0 0.0
    %2463 = vmatprep.subr.mxu0 0.0
    %2464 = vmatpush1.msra.mxu0 0.0
    %2465 = vmatprep.subr.mxu0 0.0
    %2466 = vmatpush1.msra.mxu0 0.0
    %2467 = vmatprep.subr.mxu0 0.0
    %2468 = vmatpush1.msra.mxu0 0.0
    %2469 = vmatprep.subr.mxu0 0.0
    %2470 = vmatpush1.msra.mxu0 0.0
    %2471 = vmatprep.subr.mxu0 0.0
    %2472 = vmatpush1.msra.mxu0 0.0
    %2473 = vmatprep.subr.mxu0 0.0
    %2474 = vmatpush1.msra.mxu0 0.0
    %2475 = vmatprep.subr.mxu0 0.0
    %2476 = vmatpush1.msra.mxu0 0.0
    %2477 = vmatprep.subr.mxu0 0.0
    %2478 = vmatpush1.msra.mxu0 0.0
    %2479 = vmatprep.subr.mxu0 0.0
    %2480 = vmatpush1.msra.mxu0 0.0
    %2481 = vmatprep.subr.mxu0 0.0
    %2482 = vmatpush1.msra.mxu0 0.0
    %2483 = vmatprep.subr.mxu0 0.0
    %2484 = vmatpush1.msra.mxu0 0.0
    %2485 = vmatprep.subr.mxu0 0.0
    %2486 = vmatpush1.msra.mxu0 0.0
    %2487 = vmatprep.subr.mxu0 0.0
    %2488 = vmatpush1.msra.mxu0 0.0
    %2489 = vmatprep.subr.mxu0 0.0
    %2490 = vmatpush1.msra.mxu0 0.0
    %2491 = vmatprep.subr.mxu0 0.0
    %2492 = vmatpush1.msra.mxu0 0.0
    %2493 = vmatprep.mubr.f32.mxu0 0.0
    %2494 = vmatmul.mubr.f32.gmra.mrb[0].mxu0 %v2427
    %v2495 = vpop.f32.mrb[0].mxu0
    %v2496 = vadd.f32 0.0, %v2495
    %v2497 = vpop.f32.mrb[0].mxu0
    %2498 = vdwg.mxu0
    %v2500 = vsel %vm932, %v1966, 0
    %2502 = vmatprep.subr.mxu0 0.0
    %2503 = vmatpush1.msra.mxu0 %v2350
    %2504 = vmatprep.subr.mxu0 0.0
    %2505 = vmatpush1.msra.mxu0 0.0
    %2506 = vmatprep.subr.mxu0 0.0
    %2507 = vmatpush1.msra.mxu0 0.0
    %2508 = vmatprep.subr.mxu0 0.0
    %2509 = vmatpush1.msra.mxu0 0.0
    %2510 = vmatprep.subr.mxu0 0.0
    %2511 = vmatpush1.msra.mxu0 0.0
    %2512 = vmatprep.subr.mxu0 0.0
    %2513 = vmatpush1.msra.mxu0 0.0
    %2514 = vmatprep.subr.mxu0 0.0
    %2515 = vmatpush1.msra.mxu0 0.0
    %2516 = vmatprep.subr.mxu0 0.0
    %2517 = vmatpush1.msra.mxu0 0.0
    %2518 = vmatprep.subr.mxu0 0.0
    %2519 = vmatpush1.msra.mxu0 0.0
    %2520 = vmatprep.subr.mxu0 0.0
    %2521 = vmatpush1.msra.mxu0 0.0
    %2522 = vmatprep.subr.mxu0 0.0
    %2523 = vmatpush1.msra.mxu0 0.0
    %2524 = vmatprep.subr.mxu0 0.0
    %2525 = vmatpush1.msra.mxu0 0.0
    %2526 = vmatprep.subr.mxu0 0.0
    %2527 = vmatpush1.msra.mxu0 0.0
    %2528 = vmatprep.subr.mxu0 0.0
    %2529 = vmatpush1.msra.mxu0 0.0
    %2530 = vmatprep.subr.mxu0 0.0
    %2531 = vmatpush1.msra.mxu0 0.0
    %2532 = vmatprep.subr.mxu0 0.0
    %2533 = vmatpush1.msra.mxu0 0.0
    %2534 = vmatprep.subr.mxu0 0.0
    %2535 = vmatpush1.msra.mxu0 0.0
    %2536 = vmatprep.subr.mxu0 0.0
    %2537 = vmatpush1.msra.mxu0 0.0
    %2538 = vmatprep.subr.mxu0 0.0
    %2539 = vmatpush1.msra.mxu0 0.0
    %2540 = vmatprep.subr.mxu0 0.0
    %2541 = vmatpush1.msra.mxu0 0.0
    %2542 = vmatprep.subr.mxu0 0.0
    %2543 = vmatpush1.msra.mxu0 0.0
    %2544 = vmatprep.subr.mxu0 0.0
    %2545 = vmatpush1.msra.mxu0 0.0
    %2546 = vmatprep.subr.mxu0 0.0
    %2547 = vmatpush1.msra.mxu0 0.0
    %2548 = vmatprep.subr.mxu0 0.0
    %2549 = vmatpush1.msra.mxu0 0.0
    %2550 = vmatprep.subr.mxu0 0.0
    %2551 = vmatpush1.msra.mxu0 0.0
    %2552 = vmatprep.subr.mxu0 0.0
    %2553 = vmatpush1.msra.mxu0 0.0
    %2554 = vmatprep.subr.mxu0 0.0
    %2555 = vmatpush1.msra.mxu0 0.0
    %2556 = vmatprep.subr.mxu0 0.0
    %2557 = vmatpush1.msra.mxu0 0.0
    %2558 = vmatprep.subr.mxu0 0.0
    %2559 = vmatpush1.msra.mxu0 0.0
    %2560 = vmatprep.subr.mxu0 0.0
    %2561 = vmatpush1.msra.mxu0 0.0
    %2562 = vmatprep.subr.mxu0 0.0
    %2563 = vmatpush1.msra.mxu0 0.0
    %2564 = vmatprep.subr.mxu0 0.0
    %2565 = vmatpush1.msra.mxu0 0.0
    %2566 = vmatprep.mubr.f32.mxu0 0.0
    %2567 = vmatmul.mubr.f32.gmra.mrb[0].mxu0 %v2500
    %v2568 = vpop.f32.mrb[0].mxu0
    %v2569 = vadd.f32 0.0, %v2568
    %v2570 = vpop.f32.mrb[0].mxu0
    %2571 = vdwg.mxu0
    %v2573 = vsel %vm932, %v2042, 0
    %2575 = vmatprep.subr.mxu0 0.0
    %2576 = vmatpush1.msra.mxu0 %v2350
    %2577 = vmatprep.subr.mxu0 0.0
    %2578 = vmatpush1.msra.mxu0 0.0
    %2579 = vmatprep.subr.mxu0 0.0
    %2580 = vmatpush1.msra.mxu0 0.0
    %2581 = vmatprep.subr.mxu0 0.0
    %2582 = vmatpush1.msra.mxu0 0.0
    %2583 = vmatprep.subr.mxu0 0.0
    %2584 = vmatpush1.msra.mxu0 0.0
    %2585 = vmatprep.subr.mxu0 0.0
    %2586 = vmatpush1.msra.mxu0 0.0
    %2587 = vmatprep.subr.mxu0 0.0
    %2588 = vmatpush1.msra.mxu0 0.0
    %2589 = vmatprep.subr.mxu0 0.0
    %2590 = vmatpush1.msra.mxu0 0.0
    %2591 = vmatprep.subr.mxu0 0.0
    %2592 = vmatpush1.msra.mxu0 0.0
    %2593 = vmatprep.subr.mxu0 0.0
    %2594 = vmatpush1.msra.mxu0 0.0
    %2595 = vmatprep.subr.mxu0 0.0
    %2596 = vmatpush1.msra.mxu0 0.0
    %2597 = vmatprep.subr.mxu0 0.0
    %2598 = vmatpush1.msra.mxu0 0.0
    %2599 = vmatprep.subr.mxu0 0.0
    %2600 = vmatpush1.msra.mxu0 0.0
    %2601 = vmatprep.subr.mxu0 0.0
    %2602 = vmatpush1.msra.mxu0 0.0
    %2603 = vmatprep.subr.mxu0 0.0
    %2604 = vmatpush1.msra.mxu0 0.0
    %2605 = vmatprep.subr.mxu0 0.0
    %2606 = vmatpush1.msra.mxu0 0.0
    %2607 = vmatprep.subr.mxu0 0.0
    %2608 = vmatpush1.msra.mxu0 0.0
    %2609 = vmatprep.subr.mxu0 0.0
    %2610 = vmatpush1.msra.mxu0 0.0
    %2611 = vmatprep.subr.mxu0 0.0
    %2612 = vmatpush1.msra.mxu0 0.0
    %2613 = vmatprep.subr.mxu0 0.0
    %2614 = vmatpush1.msra.mxu0 0.0
    %2615 = vmatprep.subr.mxu0 0.0
    %2616 = vmatpush1.msra.mxu0 0.0
    %2617 = vmatprep.subr.mxu0 0.0
    %2618 = vmatpush1.msra.mxu0 0.0
    %2619 = vmatprep.subr.mxu0 0.0
    %2620 = vmatpush1.msra.mxu0 0.0
    %2621 = vmatprep.subr.mxu0 0.0
    %2622 = vmatpush1.msra.mxu0 0.0
    %2623 = vmatprep.subr.mxu0 0.0
    %2624 = vmatpush1.msra.mxu0 0.0
    %2625 = vmatprep.subr.mxu0 0.0
    %2626 = vmatpush1.msra.mxu0 0.0
    %2627 = vmatprep.subr.mxu0 0.0
    %2628 = vmatpush1.msra.mxu0 0.0
    %2629 = vmatprep.subr.mxu0 0.0
    %2630 = vmatpush1.msra.mxu0 0.0
    %2631 = vmatprep.subr.mxu0 0.0
    %2632 = vmatpush1.msra.mxu0 0.0
    %2633 = vmatprep.subr.mxu0 0.0
    %2634 = vmatpush1.msra.mxu0 0.0
    %2635 = vmatprep.subr.mxu0 0.0
    %2636 = vmatpush1.msra.mxu0 0.0
    %2637 = vmatprep.subr.mxu0 0.0
    %2638 = vmatpush1.msra.mxu0 0.0
    %2639 = vmatprep.mubr.f32.mxu0 0.0
    %2640 = vmatmul.mubr.f32.gmra.mrb[0].mxu0 %v2573
    %v2641 = vpop.f32.mrb[0].mxu0
    %v2642 = vadd.f32 0.0, %v2641
    %v2643 = vpop.f32.mrb[0].mxu0
    %2644 = vdwg.mxu0
    %v2646 = vsel %vm932, %v2118, 0
    %2648 = vmatprep.subr.mxu0 0.0
    %2649 = vmatpush1.msra.mxu0 %v2351
    %2650 = vmatprep.subr.mxu0 0.0
    %2651 = vmatpush1.msra.mxu0 0.0
    %2652 = vmatprep.subr.mxu0 0.0
    %2653 = vmatpush1.msra.mxu0 0.0
    %2654 = vmatprep.subr.mxu0 0.0
    %2655 = vmatpush1.msra.mxu0 0.0
    %2656 = vmatprep.subr.mxu0 0.0
    %2657 = vmatpush1.msra.mxu0 0.0
    %2658 = vmatprep.subr.mxu0 0.0
    %2659 = vmatpush1.msra.mxu0 0.0
    %2660 = vmatprep.subr.mxu0 0.0
    %2661 = vmatpush1.msra.mxu0 0.0
    %2662 = vmatprep.subr.mxu0 0.0
    %2663 = vmatpush1.msra.mxu0 0.0
    %2664 = vmatprep.subr.mxu0 0.0
    %2665 = vmatpush1.msra.mxu0 0.0
    %2666 = vmatprep.subr.mxu0 0.0
    %2667 = vmatpush1.msra.mxu0 0.0
    %2668 = vmatprep.subr.mxu0 0.0
    %2669 = vmatpush1.msra.mxu0 0.0
    %2670 = vmatprep.subr.mxu0 0.0
    %2671 = vmatpush1.msra.mxu0 0.0
    %2672 = vmatprep.subr.mxu0 0.0
    %2673 = vmatpush1.msra.mxu0 0.0
    %2674 = vmatprep.subr.mxu0 0.0
    %2675 = vmatpush1.msra.mxu0 0.0
    %2676 = vmatprep.subr.mxu0 0.0
    %2677 = vmatpush1.msra.mxu0 0.0
    %2678 = vmatprep.subr.mxu0 0.0
    %2679 = vmatpush1.msra.mxu0 0.0
    %2680 = vmatprep.subr.mxu0 0.0
    %2681 = vmatpush1.msra.mxu0 0.0
    %2682 = vmatprep.subr.mxu0 0.0
    %2683 = vmatpush1.msra.mxu0 0.0
    %2684 = vmatprep.subr.mxu0 0.0
    %2685 = vmatpush1.msra.mxu0 0.0
    %2686 = vmatprep.subr.mxu0 0.0
    %2687 = vmatpush1.msra.mxu0 0.0
    %2688 = vmatprep.subr.mxu0 0.0
    %2689 = vmatpush1.msra.mxu0 0.0
    %2690 = vmatprep.subr.mxu0 0.0
    %2691 = vmatpush1.msra.mxu0 0.0
    %2692 = vmatprep.subr.mxu0 0.0
    %2693 = vmatpush1.msra.mxu0 0.0
    %2694 = vmatprep.subr.mxu0 0.0
    %2695 = vmatpush1.msra.mxu0 0.0
    %2696 = vmatprep.subr.mxu0 0.0
    %2697 = vmatpush1.msra.mxu0 0.0
    %2698 = vmatprep.subr.mxu0 0.0
    %2699 = vmatpush1.msra.mxu0 0.0
    %2700 = vmatprep.subr.mxu0 0.0
    %2701 = vmatpush1.msra.mxu0 0.0
    %2702 = vmatprep.subr.mxu0 0.0
    %2703 = vmatpush1.msra.mxu0 0.0
    %2704 = vmatprep.subr.mxu0 0.0
    %2705 = vmatpush1.msra.mxu0 0.0
    %2706 = vmatprep.subr.mxu0 0.0
    %2707 = vmatpush1.msra.mxu0 0.0
    %2708 = vmatprep.subr.mxu0 0.0
    %2709 = vmatpush1.msra.mxu0 0.0
    %2710 = vmatprep.subr.mxu0 0.0
    %2711 = vmatpush1.msra.mxu0 0.0
    %2712 = vmatprep.mubr.f32.mxu0 0.0
    %2713 = vmatmul.mubr.f32.gmra.mrb[0].mxu0 %v2646
    %v2714 = vpop.f32.mrb[0].mxu0
    %v2715 = vadd.f32 0.0, %v2714
    %v2716 = vpop.f32.mrb[0].mxu0
    %2717 = vdwg.mxu0
    %v2719 = vsel %vm932, %v2194, 0
    %2721 = vmatprep.subr.mxu0 0.0
    %2722 = vmatpush1.msra.mxu0 %v2351
    %2723 = vmatprep.subr.mxu0 0.0
    %2724 = vmatpush1.msra.mxu0 0.0
    %2725 = vmatprep.subr.mxu0 0.0
    %2726 = vmatpush1.msra.mxu0 0.0
    %2727 = vmatprep.subr.mxu0 0.0
    %2728 = vmatpush1.msra.mxu0 0.0
    %2729 = vmatprep.subr.mxu0 0.0
    %2730 = vmatpush1.msra.mxu0 0.0
    %2731 = vmatprep.subr.mxu0 0.0
    %2732 = vmatpush1.msra.mxu0 0.0
    %2733 = vmatprep.subr.mxu0 0.0
    %2734 = vmatpush1.msra.mxu0 0.0
    %2735 = vmatprep.subr.mxu0 0.0
    %2736 = vmatpush1.msra.mxu0 0.0
    %2737 = vmatprep.subr.mxu0 0.0
    %2738 = vmatpush1.msra.mxu0 0.0
    %2739 = vmatprep.subr.mxu0 0.0
    %2740 = vmatpush1.msra.mxu0 0.0
    %2741 = vmatprep.subr.mxu0 0.0
    %2742 = vmatpush1.msra.mxu0 0.0
    %2743 = vmatprep.subr.mxu0 0.0
    %2744 = vmatpush1.msra.mxu0 0.0
    %2745 = vmatprep.subr.mxu0 0.0
    %2746 = vmatpush1.msra.mxu0 0.0
    %2747 = vmatprep.subr.mxu0 0.0
    %2748 = vmatpush1.msra.mxu0 0.0
    %2749 = vmatprep.subr.mxu0 0.0
    %2750 = vmatpush1.msra.mxu0 0.0
    %2751 = vmatprep.subr.mxu0 0.0
    %2752 = vmatpush1.msra.mxu0 0.0
    %2753 = vmatprep.subr.mxu0 0.0
    %2754 = vmatpush1.msra.mxu0 0.0
    %2755 = vmatprep.subr.mxu0 0.0
    %2756 = vmatpush1.msra.mxu0 0.0
    %2757 = vmatprep.subr.mxu0 0.0
    %2758 = vmatpush1.msra.mxu0 0.0
    %2759 = vmatprep.subr.mxu0 0.0
    %2760 = vmatpush1.msra.mxu0 0.0
    %2761 = vmatprep.subr.mxu0 0.0
    %2762 = vmatpush1.msra.mxu0 0.0
    %2763 = vmatprep.subr.mxu0 0.0
    %2764 = vmatpush1.msra.mxu0 0.0
    %2765 = vmatprep.subr.mxu0 0.0
    %2766 = vmatpush1.msra.mxu0 0.0
    %2767 = vmatprep.subr.mxu0 0.0
    %2768 = vmatpush1.msra.mxu0 0.0
    %2769 = vmatprep.subr.mxu0 0.0
    %2770 = vmatpush1.msra.mxu0 0.0
    %2771 = vmatprep.subr.mxu0 0.0
    %2772 = vmatpush1.msra.mxu0 0.0
    %2773 = vmatprep.subr.mxu0 0.0
    %2774 = vmatpush1.msra.mxu0 0.0
    %2775 = vmatprep.subr.mxu0 0.0
    %2776 = vmatpush1.msra.mxu0 0.0
    %2777 = vmatprep.subr.mxu0 0.0
    %2778 = vmatpush1.msra.mxu0 0.0
    %2779 = vmatprep.subr.mxu0 0.0
    %2780 = vmatpush1.msra.mxu0 0.0
    %2781 = vmatprep.subr.mxu0 0.0
    %2782 = vmatpush1.msra.mxu0 0.0
    %2783 = vmatprep.subr.mxu0 0.0
    %2784 = vmatpush1.msra.mxu0 0.0
    %2785 = vmatprep.mubr.f32.mxu0 0.0
    %2786 = vmatmul.mubr.f32.gmra.mrb[0].mxu0 %v2719
    %v2787 = vpop.f32.mrb[0].mxu0
    %v2788 = vadd.f32 0.0, %v2787
    %v2789 = vpop.f32.mrb[0].mxu0
    %2790 = vdwg.mxu0
    %v2792 = vsel %vm932, %v2270, 0
    %2794 = vmatprep.subr.mxu0 0.0
    %2795 = vmatpush1.msra.mxu0 %v2352
    %2796 = vmatprep.subr.mxu0 0.0
    %2797 = vmatpush1.msra.mxu0 0.0
    %2798 = vmatprep.subr.mxu0 0.0
    %2799 = vmatpush1.msra.mxu0 0.0
    %2800 = vmatprep.subr.mxu0 0.0
    %2801 = vmatpush1.msra.mxu0 0.0
    %2802 = vmatprep.subr.mxu0 0.0
    %2803 = vmatpush1.msra.mxu0 0.0
    %2804 = vmatprep.subr.mxu0 0.0
    %2805 = vmatpush1.msra.mxu0 0.0
    %2806 = vmatprep.subr.mxu0 0.0
    %2807 = vmatpush1.msra.mxu0 0.0
    %2808 = vmatprep.subr.mxu0 0.0
    %2809 = vmatpush1.msra.mxu0 0.0
    %2810 = vmatprep.subr.mxu0 0.0
    %2811 = vmatpush1.msra.mxu0 0.0
    %2812 = vmatprep.subr.mxu0 0.0
    %2813 = vmatpush1.msra.mxu0 0.0
    %2814 = vmatprep.subr.mxu0 0.0
    %2815 = vmatpush1.msra.mxu0 0.0
    %2816 = vmatprep.subr.mxu0 0.0
    %2817 = vmatpush1.msra.mxu0 0.0
    %2818 = vmatprep.subr.mxu0 0.0
    %2819 = vmatpush1.msra.mxu0 0.0
    %2820 = vmatprep.subr.mxu0 0.0
    %2821 = vmatpush1.msra.mxu0 0.0
    %2822 = vmatprep.subr.mxu0 0.0
    %2823 = vmatpush1.msra.mxu0 0.0
    %2824 = vmatprep.subr.mxu0 0.0
    %2825 = vmatpush1.msra.mxu0 0.0
    %2826 = vmatprep.subr.mxu0 0.0
    %2827 = vmatpush1.msra.mxu0 0.0
    %2828 = vmatprep.subr.mxu0 0.0
    %2829 = vmatpush1.msra.mxu0 0.0
    %2830 = vmatprep.subr.mxu0 0.0
    %2831 = vmatpush1.msra.mxu0 0.0
    %2832 = vmatprep.subr.mxu0 0.0
    %2833 = vmatpush1.msra.mxu0 0.0
    %2834 = vmatprep.subr.mxu0 0.0
    %2835 = vmatpush1.msra.mxu0 0.0
    %2836 = vmatprep.subr.mxu0 0.0
    %2837 = vmatpush1.msra.mxu0 0.0
    %2838 = vmatprep.subr.mxu0 0.0
    %2839 = vmatpush1.msra.mxu0 0.0
    %2840 = vmatprep.subr.mxu0 0.0
    %2841 = vmatpush1.msra.mxu0 0.0
    %2842 = vmatprep.subr.mxu0 0.0
    %2843 = vmatpush1.msra.mxu0 0.0
    %2844 = vmatprep.subr.mxu0 0.0
    %2845 = vmatpush1.msra.mxu0 0.0
    %2846 = vmatprep.subr.mxu0 0.0
    %2847 = vmatpush1.msra.mxu0 0.0
    %2848 = vmatprep.subr.mxu0 0.0
    %2849 = vmatpush1.msra.mxu0 0.0
    %2850 = vmatprep.subr.mxu0 0.0
    %2851 = vmatpush1.msra.mxu0 0.0
    %2852 = vmatprep.subr.mxu0 0.0
    %2853 = vmatpush1.msra.mxu0 0.0
    %2854 = vmatprep.subr.mxu0 0.0
    %2855 = vmatpush1.msra.mxu0 0.0
    %2856 = vmatprep.subr.mxu0 0.0
    %2857 = vmatpush1.msra.mxu0 0.0
    %2858 = vmatprep.mubr.f32.mxu0 0.0
    %2859 = vmatmul.mubr.f32.gmra.mrb[0].mxu0 %v2792
    %v2860 = vpop.f32.mrb[0].mxu0
    %v2861 = vadd.f32 0.0, %v2860
    %v2862 = vpop.f32.mrb[0].mxu0
    %2863 = vdwg.mxu0
    %v2865 = vsel %vm932, %v2346, 0
    %2867 = vmatprep.subr.mxu0 0.0
    %2868 = vmatpush1.msra.mxu0 %v2352
    %2869 = vmatprep.subr.mxu0 0.0
    %2870 = vmatpush1.msra.mxu0 0.0
    %2871 = vmatprep.subr.mxu0 0.0
    %2872 = vmatpush1.msra.mxu0 0.0
    %2873 = vmatprep.subr.mxu0 0.0
    %2874 = vmatpush1.msra.mxu0 0.0
    %2875 = vmatprep.subr.mxu0 0.0
    %2876 = vmatpush1.msra.mxu0 0.0
    %2877 = vmatprep.subr.mxu0 0.0
    %2878 = vmatpush1.msra.mxu0 0.0
    %2879 = vmatprep.subr.mxu0 0.0
    %2880 = vmatpush1.msra.mxu0 0.0
    %2881 = vmatprep.subr.mxu0 0.0
    %2882 = vmatpush1.msra.mxu0 0.0
    %2883 = vmatprep.subr.mxu0 0.0
    %2884 = vmatpush1.msra.mxu0 0.0
    %2885 = vmatprep.subr.mxu0 0.0
    %2886 = vmatpush1.msra.mxu0 0.0
    %2887 = vmatprep.subr.mxu0 0.0
    %2888 = vmatpush1.msra.mxu0 0.0
    %2889 = vmatprep.subr.mxu0 0.0
    %2890 = vmatpush1.msra.mxu0 0.0
    %2891 = vmatprep.subr.mxu0 0.0
    %2892 = vmatpush1.msra.mxu0 0.0
    %2893 = vmatprep.subr.mxu0 0.0
    %2894 = vmatpush1.msra.mxu0 0.0
    %2895 = vmatprep.subr.mxu0 0.0
    %2896 = vmatpush1.msra.mxu0 0.0
    %2897 = vmatprep.subr.mxu0 0.0
    %2898 = vmatpush1.msra.mxu0 0.0
    %2899 = vmatprep.subr.mxu0 0.0
    %2900 = vmatpush1.msra.mxu0 0.0
    %2901 = vmatprep.subr.mxu0 0.0
    %2902 = vmatpush1.msra.mxu0 0.0
    %2903 = vmatprep.subr.mxu0 0.0
    %2904 = vmatpush1.msra.mxu0 0.0
    %2905 = vmatprep.subr.mxu0 0.0
    %2906 = vmatpush1.msra.mxu0 0.0
    %2907 = vmatprep.subr.mxu0 0.0
    %2908 = vmatpush1.msra.mxu0 0.0
    %2909 = vmatprep.subr.mxu0 0.0
    %2910 = vmatpush1.msra.mxu0 0.0
    %2911 = vmatprep.subr.mxu0 0.0
    %2912 = vmatpush1.msra.mxu0 0.0
    %2913 = vmatprep.subr.mxu0 0.0
    %2914 = vmatpush1.msra.mxu0 0.0
    %2915 = vmatprep.subr.mxu0 0.0
    %2916 = vmatpush1.msra.mxu0 0.0
    %2917 = vmatprep.subr.mxu0 0.0
    %2918 = vmatpush1.msra.mxu0 0.0
    %2919 = vmatprep.subr.mxu0 0.0
    %2920 = vmatpush1.msra.mxu0 0.0
    %2921 = vmatprep.subr.mxu0 0.0
    %2922 = vmatpush1.msra.mxu0 0.0
    %2923 = vmatprep.subr.mxu0 0.0
    %2924 = vmatpush1.msra.mxu0 0.0
    %2925 = vmatprep.subr.mxu0 0.0
    %2926 = vmatpush1.msra.mxu0 0.0
    %2927 = vmatprep.subr.mxu0 0.0
    %2928 = vmatpush1.msra.mxu0 0.0
    %2929 = vmatprep.subr.mxu0 0.0
    %2930 = vmatpush1.msra.mxu0 0.0
    %2931 = vmatprep.mubr.f32.mxu0 0.0
    %2932 = vmatmul.mubr.f32.gmra.mrb[0].mxu0 %v2865
    %v2933 = vpop.f32.mrb[0].mxu0
    %v2934 = vadd.f32 0.0, %v2933
    %v2935 = vpop.f32.mrb[0].mxu0
    %2936 = vdwg.mxu0
    %v2937 = vsel %vm283, %v2423, 0.0
    %v2938 = vsel %vm283, %v2569, 0.0
    %v2939 = vadd.f32 %v2937, %v2938
    %v2940 = vsel %vm283, %v2715, 0.0
    %v2941 = vadd.f32 %v2939, %v2940
    %v2942 = vsel %vm283, %v2861, 0.0
    %v2943 = vadd.f32 %v2941, %v2942
    %v2944 = vsel %vm283, %v2496, 0.0
    %v2945 = vsel %vm283, %v2642, 0.0
    %v2946 = vadd.f32 %v2944, %v2945
    %v2947 = vsel %vm283, %v2788, 0.0
    %v2948 = vadd.f32 %v2946, %v2947
    %v2949 = vsel %vm283, %v2934, 0.0
    %v2950 = vadd.f32 %v2948, %v2949
    %v2951 = vld [vmem:[%s3] sm:$0xff]
    %v2952 = vld [vmem:[%s3 + $0x8] sm:$0xff]
    %v2953 = vld [vmem:[%s3 + $0x10] sm:$0xff]
    %v2954 = vld [vmem:[%s3 + $0x18] sm:$0xff]
    %v2955 = vld [vmem:[%s3 + $0x20] sm:$0xff]
    %v2956 = vld [vmem:[%s3 + $0x28] sm:$0xff]
    %v2957 = vld [vmem:[%s3 + $0x30] sm:$0xff]
    %v2958 = vld [vmem:[%s3 + $0x38] sm:$0xff]
    %v2959 = vld [vmem:[%s3 + $0x40] sm:$0xff]
    %v2960 = vld [vmem:[%s3 + $0x48] sm:$0xff]
    %v2961 = vld [vmem:[%s3 + $0x50] sm:$0xff]
    %v2962 = vld [vmem:[%s3 + $0x58] sm:$0xff]
    %v2963 = vld [vmem:[%s3 + $0x60] sm:$0xff]
    %v2964 = vld [vmem:[%s3 + $0x68] sm:$0xff]
    %v2965 = vld [vmem:[%s3 + $0x70] sm:$0xff]
    %v2966 = vld [vmem:[%s3 + $0x78] sm:$0xff]
    %v2967 = vld [vmem:[%s3 + $0x80] sm:$0xff]
    %v2968 = vld [vmem:[%s3 + $0x88] sm:$0xff]
    %v2969 = vld [vmem:[%s3 + $0x90] sm:$0xff]
    %v2970 = vld [vmem:[%s3 + $0x98] sm:$0xff]
    %v2971 = vld [vmem:[%s3 + $0xa0] sm:$0xff]
    %v2972 = vld [vmem:[%s3 + $0xa8] sm:$0xff]
    %v2973 = vld [vmem:[%s3 + $0xb0] sm:$0xff]
    %v2974 = vld [vmem:[%s3 + $0xb8] sm:$0xff]
    %v2975 = vld [vmem:[%s3 + $0xc0] sm:$0xff]
    %v2976 = vld [vmem:[%s3 + $0xc8] sm:$0xff]
    %v2977 = vld [vmem:[%s3 + $0xd0] sm:$0xff]
    %v2978 = vld [vmem:[%s3 + $0xd8] sm:$0xff]
    %v2979 = vld [vmem:[%s3 + $0xe0] sm:$0xff]
    %v2980 = vld [vmem:[%s3 + $0xe8] sm:$0xff]
    %v2981 = vld [vmem:[%s3 + $0xf0] sm:$0xff]
    %v2982 = vld [vmem:[%s3 + $0xf8] sm:$0xff]
    %v2984 = vsel %vm283, %v2943, 0
    %v2987 = vsel %vm283, %v2951, 0
    %v2990 = vsel %vm283, %v2952, 0
    %v2993 = vsel %vm283, %v2953, 0
    %v2996 = vsel %vm283, %v2954, 0
    %v2999 = vsel %vm283, %v2955, 0
    %v3002 = vsel %vm283, %v2956, 0
    %v3005 = vsel %vm283, %v2957, 0
    %v3008 = vsel %vm283, %v2958, 0
    %v3011 = vsel %vm283, %v2959, 0
    %v3014 = vsel %vm283, %v2960, 0
    %v3017 = vsel %vm283, %v2961, 0
    %v3020 = vsel %vm283, %v2962, 0
    %v3023 = vsel %vm283, %v2963, 0
    %v3026 = vsel %vm283, %v2964, 0
    %v3029 = vsel %vm283, %v2965, 0
    %v3032 = vsel %vm283, %v2966, 0
    %3034 = vmatprep.subr.mxu0 0.0
    %3035 = vmatpush1.xpose.msra.mxu0 %v2987
    %3036 = vmatprep.subr.mxu0 0.0
    %3037 = vmatpush1.xpose.msra.mxu0 %v2990
    %3038 = vmatprep.subr.mxu0 0.0
    %3039 = vmatpush1.xpose.msra.mxu0 %v2993
    %3040 = vmatprep.subr.mxu0 0.0
    %3041 = vmatpush1.xpose.msra.mxu0 %v2996
    %3042 = vmatprep.subr.mxu0 0.0
    %3043 = vmatpush1.xpose.msra.mxu0 %v2999
    %3044 = vmatprep.subr.mxu0 0.0
    %3045 = vmatpush1.xpose.msra.mxu0 %v3002
    %3046 = vmatprep.subr.mxu0 0.0
    %3047 = vmatpush1.xpose.msra.mxu0 %v3005
    %3048 = vmatprep.subr.mxu0 0.0
    %3049 = vmatpush1.xpose.msra.mxu0 %v3008
    %3050 = vmatprep.subr.mxu0 0.0
    %3051 = vmatpush1.xpose.msra.mxu0 %v3011
    %3052 = vmatprep.subr.mxu0 0.0
    %3053 = vmatpush1.xpose.msra.mxu0 %v3014
    %3054 = vmatprep.subr.mxu0 0.0
    %3055 = vmatpush1.xpose.msra.mxu0 %v3017
    %3056 = vmatprep.subr.mxu0 0.0
    %3057 = vmatpush1.xpose.msra.mxu0 %v3020
    %3058 = vmatprep.subr.mxu0 0.0
    %3059 = vmatpush1.xpose.msra.mxu0 %v3023
    %3060 = vmatprep.subr.mxu0 0.0
    %3061 = vmatpush1.xpose.msra.mxu0 %v3026
    %3062 = vmatprep.subr.mxu0 0.0
    %3063 = vmatpush1.xpose.msra.mxu0 %v3029
    %3064 = vmatprep.subr.mxu0 0.0
    %3065 = vmatpush1.xpose.msra.mxu0 %v3032
    %3066 = vmatprep.subr.mxu0 0.0
    %3067 = vmatpush1.xpose.msra.mxu0 0.0
    %3068 = vmatprep.subr.mxu0 0.0
    %3069 = vmatpush1.xpose.msra.mxu0 0.0
    %3070 = vmatprep.subr.mxu0 0.0
    %3071 = vmatpush1.xpose.msra.mxu0 0.0
    %3072 = vmatprep.subr.mxu0 0.0
    %3073 = vmatpush1.xpose.msra.mxu0 0.0
    %3074 = vmatprep.subr.mxu0 0.0
    %3075 = vmatpush1.xpose.msra.mxu0 0.0
    %3076 = vmatprep.subr.mxu0 0.0
    %3077 = vmatpush1.xpose.msra.mxu0 0.0
    %3078 = vmatprep.subr.mxu0 0.0
    %3079 = vmatpush1.xpose.msra.mxu0 0.0
    %3080 = vmatprep.subr.mxu0 0.0
    %3081 = vmatpush1.xpose.msra.mxu0 0.0
    %3082 = vmatprep.subr.mxu0 0.0
    %3083 = vmatpush1.xpose.msra.mxu0 0.0
    %3084 = vmatprep.subr.mxu0 0.0
    %3085 = vmatpush1.xpose.msra.mxu0 0.0
    %3086 = vmatprep.subr.mxu0 0.0
    %3087 = vmatpush1.xpose.msra.mxu0 0.0
    %3088 = vmatprep.subr.mxu0 0.0
    %3089 = vmatpush1.xpose.msra.mxu0 0.0
    %3090 = vmatprep.subr.mxu0 0.0
    %3091 = vmatpush1.xpose.msra.mxu0 0.0
    %3092 = vmatprep.subr.mxu0 0.0
    %3093 = vmatpush1.xpose.msra.mxu0 0.0
    %3094 = vmatprep.subr.mxu0 0.0
    %3095 = vmatpush1.xpose.msra.mxu0 0.0
    %3096 = vmatprep.subr.mxu0 0.0
    %3097 = vmatpush1.xpose.msra.mxu0 0.0
    %3098 = vmatprep.mubr.f32.mxu0 0.0
    %3099 = vmatmul.mubr.f32.gmra.mrb[0].mxu0 %v2984
    %v3100 = vpop.f32.mrb[0].mxu0
    %v3101 = vadd.f32 0.0, %v3100
    %v3102 = vpop.f32.mrb[0].mxu0
    %3103 = vdwg.mxu0
    %v3105 = vsel %vm283, %v2950, 0
    %v3108 = vsel %vm283, %v2967, 0
    %v3111 = vsel %vm283, %v2968, 0
    %v3114 = vsel %vm283, %v2969, 0
    %v3117 = vsel %vm283, %v2970, 0
    %v3120 = vsel %vm283, %v2971, 0
    %v3123 = vsel %vm283, %v2972, 0
    %v3126 = vsel %vm283, %v2973, 0
    %v3129 = vsel %vm283, %v2974, 0
    %v3132 = vsel %vm283, %v2975, 0
    %v3135 = vsel %vm283, %v2976, 0
    %v3138 = vsel %vm283, %v2977, 0
    %v3141 = vsel %vm283, %v2978, 0
    %v3144 = vsel %vm283, %v2979, 0
    %v3147 = vsel %vm283, %v2980, 0
    %v3150 = vsel %vm283, %v2981, 0
    %v3153 = vsel %vm283, %v2982, 0
    %3155 = vmatprep.subr.mxu0 0.0
    %3156 = vmatpush1.xpose.msra.mxu0 %v3108
    %3157 = vmatprep.subr.mxu0 0.0
    %3158 = vmatpush1.xpose.msra.mxu0 %v3111
    %3159 = vmatprep.subr.mxu0 0.0
    %3160 = vmatpush1.xpose.msra.mxu0 %v3114
    %3161 = vmatprep.subr.mxu0 0.0
    %3162 = vmatpush1.xpose.msra.mxu0 %v3117
    %3163 = vmatprep.subr.mxu0 0.0
    %3164 = vmatpush1.xpose.msra.mxu0 %v3120
    %3165 = vmatprep.subr.mxu0 0.0
    %3166 = vmatpush1.xpose.msra.mxu0 %v3123
    %3167 = vmatprep.subr.mxu0 0.0
    %3168 = vmatpush1.xpose.msra.mxu0 %v3126
    %3169 = vmatprep.subr.mxu0 0.0
    %3170 = vmatpush1.xpose.msra.mxu0 %v3129
    %3171 = vmatprep.subr.mxu0 0.0
    %3172 = vmatpush1.xpose.msra.mxu0 %v3132
    %3173 = vmatprep.subr.mxu0 0.0
    %3174 = vmatpush1.xpose.msra.mxu0 %v3135
    %3175 = vmatprep.subr.mxu0 0.0
    %3176 = vmatpush1.xpose.msra.mxu0 %v3138
    %3177 = vmatprep.subr.mxu0 0.0
    %3178 = vmatpush1.xpose.msra.mxu0 %v3141
    %3179 = vmatprep.subr.mxu0 0.0
    %3180 = vmatpush1.xpose.msra.mxu0 %v3144
    %3181 = vmatprep.subr.mxu0 0.0
    %3182 = vmatpush1.xpose.msra.mxu0 %v3147
    %3183 = vmatprep.subr.mxu0 0.0
    %3184 = vmatpush1.xpose.msra.mxu0 %v3150
    %3185 = vmatprep.subr.mxu0 0.0
    %3186 = vmatpush1.xpose.msra.mxu0 %v3153
    %3187 = vmatprep.subr.mxu0 0.0
    %3188 = vmatpush1.xpose.msra.mxu0 0.0
    %3189 = vmatprep.subr.mxu0 0.0
    %3190 = vmatpush1.xpose.msra.mxu0 0.0
    %3191 = vmatprep.subr.mxu0 0.0
    %3192 = vmatpush1.xpose.msra.mxu0 0.0
    %3193 = vmatprep.subr.mxu0 0.0
    %3194 = vmatpush1.xpose.msra.mxu0 0.0
    %3195 = vmatprep.subr.mxu0 0.0
    %3196 = vmatpush1.xpose.msra.mxu0 0.0
    %3197 = vmatprep.subr.mxu0 0.0
    %3198 = vmatpush1.xpose.msra.mxu0 0.0
    %3199 = vmatprep.subr.mxu0 0.0
    %3200 = vmatpush1.xpose.msra.mxu0 0.0
    %3201 = vmatprep.subr.mxu0 0.0
    %3202 = vmatpush1.xpose.msra.mxu0 0.0
    %3203 = vmatprep.subr.mxu0 0.0
    %3204 = vmatpush1.xpose.msra.mxu0 0.0
    %3205 = vmatprep.subr.mxu0 0.0
    %3206 = vmatpush1.xpose.msra.mxu0 0.0
    %3207 = vmatprep.subr.mxu0 0.0
    %3208 = vmatpush1.xpose.msra.mxu0 0.0
    %3209 = vmatprep.subr.mxu0 0.0
    %3210 = vmatpush1.xpose.msra.mxu0 0.0
    %3211 = vmatprep.subr.mxu0 0.0
    %3212 = vmatpush1.xpose.msra.mxu0 0.0
    %3213 = vmatprep.subr.mxu0 0.0
    %3214 = vmatpush1.xpose.msra.mxu0 0.0
    %3215 = vmatprep.subr.mxu0 0.0
    %3216 = vmatpush1.xpose.msra.mxu0 0.0
    %3217 = vmatprep.subr.mxu0 0.0
    %3218 = vmatpush1.xpose.msra.mxu0 0.0
    %3219 = vmatprep.mubr.f32.mxu0 0.0
    %3220 = vmatmul.mubr.f32.gmra.mrb[0].mxu0 %v3105
    %v3221 = vpop.f32.mrb[0].mxu0
    %v3222 = vadd.f32 0.0, %v3221
    %v3223 = vpop.f32.mrb[0].mxu0
    %3224 = vdwg.mxu0
    %v3225 = vmul.f32 %v3101, 0.17677669
    %v3226 = vmul.f32 %v3222, 0.17677669
    %v3227 = vtanh.pop %v3225
    %v3228 = vtanh.pop %v3226
    %v3229 = vmul.f32 %v3227, 10.0
    %v3230 = vmul.f32 %v3228, 10.0
    %v3231 = vld [vmem:[%s7] sm:$0xff]
    %v3232 = vld [vmem:[%s7 + $0x8] sm:$0xff]
    %v3233 = vadd.f32 %v3229, %v3231
    %v3234 = vadd.f32 %v3230, %v3232
    %3235 = vmax.xlane.f32.xlu0 %v3233
    %v3236 = vpop.xlane.xlu0 %3235
    %3237 = vmax.xlane.f32.xlu0 %v3234
    %v3238 = vpop.xlane.xlu0 %3237
    %v3239 = vsub.f32 %v3233, %v3236
    %v3240 = vsub.f32 %v3234, %v3238
    %v3241 = vmul.f32 %v3239, 1.442695
    %v3242 = vpow.pop %v3241
    %v3243 = vmul.f32 %v3240, 1.442695
    %v3244 = vpow.pop %v3243
    %3245 = vadd.xlane.f32.xlu0 %v3242
    %v3246 = vpop.xlane.xlu0 %3245
    %3247 = vadd.xlane.f32.xlu0 %v3244
    %v3248 = vpop.xlane.xlu0 %3247
    %v3249 = vrcp.pop %v3246
    %v3250 = vmul.f32 %v3242, %v3249
    %v3251 = vrcp.pop %v3248
    %v3252 = vmul.f32 %v3244, %v3251
    %3253 = vst [vmem:[#allocation2] sm:$0xff] %v3250
    %3254 = vst [vmem:[#allocation2 + $0x8] sm:$0xff] %v3252
    // Predicated region
    $region46: #{tpu_custom_call.1} parent=1 // pred_check
      _
    $region47: #{tpu_custom_call.1} parent=1 // pred_check_branch
      %3256 = sbr.rel (0) target = $region49
    $region48: #{tpu_custom_call.1} parent=1 // pred_region
      %s3258 = ssub.s32 256, 256
      %3259 = vsyncadd [#allocation3], %s3258
      %s3260 = sshll.u32 [#allocation2], 4
      %s3261 = int_to_ptr.vmem [resolvable:$true] %s3260
      %3266 = dma.vmem_to_hbm [thread:$0]  %s3261, 256, %s11, [#allocation3], 128, 128, 8
    $region49: #{tpu_custom_call.1} parent=1 // pred_fallthru
      _
    // Predicated region
    $region50: #{tpu_custom_call.1} parent=1 // pred_check
      _
    $region51: #{tpu_custom_call.1} parent=1 // pred_check_branch
      %3268 = sbr.rel (0) target = $region53
    $region52: #{tpu_custom_call.1} parent=1 // pred_region
      %3269 = dma.done [#allocation3], 256
    $region53: #{tpu_custom_call.1} parent=1 // pred_fallthru
      _
    %3270 = vsyncpa [#allocation3], 1

</llo_original>
